<compile_context>
chip_gen: v7x
topology: tpu7x:2x2x1
jax: 0.10.0
libtpu: 0.0.40
codegen_flags: <defaults>
</compile_context>

<pallas_src>
import functools

import jax
import jax.numpy as jnp
from jax.experimental import pallas as pl
from jax.experimental.pallas import tpu as pltpu


# ----------------------------- Pallas kernel --------------------------------
def sarcasm_kernel(x_ref, wc_ref, bc_ref, wihf_ref, wihb_ref, bg_ref, whh_ref,
                   wattn_ref, battn_ref, vattn_ref, wfc_ref, bfc_ref,
                   wout_ref, bout_ref,
                   out_ref, hid_ref,
                   *, L, H, F, Bt):
    """x_ref: (Lp*Bt, E) time-major flattened padded embeddings for one batch tile."""
    P = L + 1          # conv output positions of the fused window (fs=4 has L+1 outputs)
    H2 = 2 * H
    H6 = 6 * H
    F3 = 3 * F
    E = x_ref.shape[1]

    xp = x_ref[...]                                   # (Lp*Bt, E) f32
    xp_bf = xp.astype(jnp.bfloat16)                   # MXU operands (f32 accumulation)

    # ------------- CNN branch: fused conv as 5 accumulated tap matmuls ------------
    conv = jnp.zeros((P * Bt, F3), jnp.float32)
    for k in range(5):
        conv = conv + jnp.dot(xp_bf[k * Bt:(k + P) * Bt, :],
                              wc_ref[k * E:(k + 1) * E, :],
                              preferred_element_type=jnp.float32)
    conv = jnp.maximum(conv + bc_ref[...], 0.0)       # (P*Bt, 3F), ReLU

    lane_f = jax.lax.broadcasted_iota(jnp.int32, (Bt, F3), 1)
    only_fs4 = (lane_f >= F) & (lane_f < 2 * F)       # position L valid only for fs=4
    cnn_feat = jnp.zeros((Bt, F3), jnp.float32)
    for p in range(P):
        row = conv[p * Bt:(p + 1) * Bt, :]
        if p == L:
            row = jnp.where(only_fs4, row, 0.0)       # exact: all values >= 0 post-ReLU
        cnn_feat = jnp.maximum(cnn_feat, row)         # (Bt, 3F) max-pool over time

    # ------------- fused bidirectional LSTM ---------------------------------------
    # pre-combined input-gate preactivations for both directions (one tensor)
    x_rev = jnp.concatenate(
        [xp[(2 + L - 1 - s) * Bt:(2 + L - s) * Bt, :] for s in range(L)], axis=0)
    gx = (jnp.dot(xp_bf[2 * Bt:(2 + L) * Bt, :], wihf_ref[...],
                  preferred_element_type=jnp.float32)
          + jnp.dot(x_rev.astype(jnp.bfloat16), wihb_ref[...],
                    preferred_element_type=jnp.float32)
          + bg_ref[...])                              # (L*Bt, 8H)
    whh = whh_ref[...]                                # (2H, 8H) block-diag, loop-invariant

    h = jnp.zeros((Bt, H2), jnp.float32)              # [h_fwd | h_bwd]
    c = jnp.zeros((Bt, H2), jnp.float32)
    for s in range(L):
        tb = L - 1 - s                                # backward-direction timestep
        g = gx[s * Bt:(s + 1) * Bt, :] + jnp.dot(h, whh, preferred_element_type=jnp.float32)
        sig = jax.nn.sigmoid(g[:, 0:H6])              # [i_f,i_b,f_f,f_b,o_f,o_b]
        g_g = jnp.tanh(g[:, H6:])                     # [g_f,g_b] (tanh gates are last 2H)
        i_g = sig[:, 0:H2]
        f_g = sig[:, H2:2 * H2]
        o_g = sig[:, 2 * H2:H6]
        c = f_g * c + i_g * g_g
        h = o_g * jnp.tanh(c)
        hid_ref[s * Bt:(s + 1) * Bt, 0:H] = h[:, 0:H]         # forward output @ time s
        hid_ref[tb * Bt:(tb + 1) * Bt, H:H2] = h[:, H:H2]     # backward output @ time tb

    lstm_out = hid_ref[...]                           # (L*Bt, 2H), already fused layout

    # ------------- attention (lane-dense softmax over time) -----------------------
    u = jnp.tanh(jnp.dot(lstm_out, wattn_ref[...], preferred_element_type=jnp.float32)
                 + battn_ref[...])                    # (L*Bt, 2H)
    scores = jnp.sum(u * vattn_ref[...], axis=1, keepdims=True)      # (L*Bt, 1)
    scores_bt = jnp.concatenate(
        [scores[t * Bt:(t + 1) * Bt, :] for t in range(L)], axis=1)  # (Bt, L)

    m = jnp.max(scores_bt, axis=1, keepdims=True)
    e = jnp.exp(scores_bt - m)
    total = jnp.sum(e, axis=1, keepdims=True)
    attn_mat = e * pl.reciprocal(total, approx=True)  # (Bt, L) softmax weights

    context = jnp.zeros((Bt, H2), jnp.float32)
    for t in range(L):
        context = context + attn_mat[:, t:t + 1] * lstm_out[t * Bt:(t + 1) * Bt, :]

    # ------------- FC head (dropout == identity at inference) ---------------------
    combined = jnp.concatenate([cnn_feat, context], axis=1)          # (Bt, 3F + 2H)
    hidden = jnp.maximum(
        jnp.dot(combined.astype(jnp.bfloat16), wfc_ref[...],
                preferred_element_type=jnp.float32) + bfc_ref[...], 0.0)
    logits = jnp.dot(hidden.astype(jnp.bfloat16), wout_ref[...],
                     preferred_element_type=jnp.float32) + bout_ref[...]

    # lane-dense output slab: logits in lanes [0:2], attention weights in [2:2+L]
    pad_w = out_ref.shape[1] - (2 + L)
    out_ref[...] = jnp.concatenate(
        [logits, attn_mat, jnp.zeros((Bt, pad_w), jnp.float32)], axis=1)


# ----------------------------- weight rearrangement ---------------------------
def _build_kernel_weights(params, *, E, H, F):
    """Pre-fuse conv weights, pre-interleave LSTM weights, cast MXU weights to bf16."""
    bf16 = jnp.bfloat16
    W3, W4, W5 = params['conv_w']                                # (fs, E, F) each
    zEF = jnp.zeros((E, F), jnp.float32)
    col3 = jnp.concatenate([zEF, W3[0], W3[1], W3[2], zEF], axis=0)           # (5E, F)
    col4 = jnp.concatenate([W4[0], W4[1], W4[2], W4[3], zEF], axis=0)
    col5 = jnp.concatenate([W5[0], W5[1], W5[2], W5[3], W5[4]], axis=0)
    w_conv = jnp.concatenate([col3, col4, col5], axis=1).astype(bf16)         # (5E, 3F)
    b_conv = jnp.concatenate(list(params['conv_b']), axis=1)                  # (1, 3F)

    def gate_blocks(w):                                          # (X, 4H) -> 4 x (X, H)
        return [w[:, g * H:(g + 1) * H] for g in range(4)]

    f_ih, b_ih = gate_blocks(params['w_ih_f']), gate_blocks(params['w_ih_b'])
    f_hh, b_hh = gate_blocks(params['w_hh_f']), gate_blocks(params['w_hh_b'])
    f_bs, b_bs = gate_blocks(params['b_f']), gate_blocks(params['b_b'])
    zEH = jnp.zeros((E, H), jnp.float32)
    zHH = jnp.zeros((H, H), jnp.float32)

    # gate-major interleaved lane order: [i_f,i_b,f_f,f_b,o_f,o_b,g_f,g_b]
    # (tanh "g" gates last so the recurrence is one sigmoid pass + one tanh pass)
    order = (0, 1, 3, 2)                      # params store gates as [i, f, g, o]
    w_ih_f_exp = jnp.concatenate(sum(([f_ih[g], zEH] for g in order), []), axis=1).astype(bf16)
    w_ih_b_exp = jnp.concatenate(sum(([zEH, b_ih[g]] for g in order), []), axis=1).astype(bf16)
    bias_gm = jnp.concatenate(sum(([f_bs[g], b_bs[g]] for g in order), []), axis=1)  # (1, 8H)
    whh_top = jnp.concatenate(sum(([f_hh[g], zHH] for g in order), []), axis=1)      # (H, 8H)
    whh_bot = jnp.concatenate(sum(([zHH, b_hh[g]] for g in order), []), axis=1)      # (H, 8H)
    w_hh_gm = jnp.concatenate([whh_top, whh_bot], axis=0)                            # (2H, 8H) f32

    v_row = params['v_attn'].T                                                       # (1, 2H)
    return [w_conv, b_conv, w_ih_f_exp, w_ih_b_exp, bias_gm, w_hh_gm,
            params['w_attn'], params['b_attn'], v_row,
            params['w_fc'].astype(bf16), params['b_fc'],
            params['w_out'].astype(bf16), params['b_out']]


# ----------------------------- wrapper ---------------------------------------
def sarcasm_forward(token_ids, params, *, L, E, H, F, filter_sizes, fc_hidden):
    assert tuple(filter_sizes) == (3, 4, 5), "fused conv weights assume filter sizes (3,4,5)"
    B = token_ids.shape[0]
    OUTW = 128
    assert 2 + L <= OUTW

    # batch tile: multiple of 8; >= 2 grid programs when B > 8 so both v7x TCs get work
    Bt = max(8, min(128, -(-B // 16) * 8))
    nb = -(-B // Bt)
    Bp = nb * Bt
    Lp = L + 5                              # pad 2 left + 3 right in time

    # glue: pad batch with <PAD>=0, embedding gather, time padding, tile-major flatten
    tok = jnp.zeros((Bp, L), token_ids.dtype).at[:B].set(token_ids)
    emb = params['embedding'][tok].astype(jnp.float32)          # (Bp, L, E)
    emb_pad = jnp.pad(emb, ((0, 0), (2, 3), (0, 0)))            # (Bp, Lp, E)
    x = emb_pad.reshape(nb, Bt, Lp, E).transpose(0, 2, 1, 3).reshape(nb * Lp * Bt, E)

    weights = _build_kernel_weights(params, E=E, H=H, F=F)

    def full_spec(a):
        nd = a.ndim
        return pl.BlockSpec(a.shape, lambda i, _n=nd: (0,) * _n)

    in_specs = [pl.BlockSpec((Lp * Bt, E), lambda i: (i, 0))] + [full_spec(w) for w in weights]
    out_specs = pl.BlockSpec((Bt, OUTW), lambda i: (i, 0))
    out_shape = jax.ShapeDtypeStruct((Bp, OUTW), jnp.float32)

    kernel = functools.partial(sarcasm_kernel, L=L, H=H, F=F, Bt=Bt)
    out = pl.pallas_call(
        kernel,
        grid=(nb,),
        in_specs=in_specs,
        out_specs=out_specs,
        out_shape=out_shape,
        scratch_shapes=[pltpu.VMEM((L * Bt, 2 * H), jnp.float32)],  # merged fwd|bwd hidden states
        compiler_params=pltpu.CompilerParams(
            dimension_semantics=("parallel",),
            vmem_limit_bytes=32 * 1024 * 1024),
    )(x, *weights)

    return out[:B, 0:2], out[:B, 2:2 + L]


# ----------------------------- pure-JAX reference ----------------------------
def reference_forward(token_ids, params, *, L, E, H, F, filter_sizes, fc_hidden):
    emb = params['embedding'][token_ids].astype(jnp.float32)    # (B, L, E)
    B = emb.shape[0]
    emb_pad = jnp.pad(emb, ((0, 0), (2, 2), (0, 0)))

    cnn_feats = []
    for idx, fs in enumerate(filter_sizes):
        pad = fs // 2
        L_out = L + 2 * pad - fs + 1
        off = 2 - pad
        w = params['conv_w'][idx]
        acc = jnp.zeros((B, L_out, F), jnp.float32)
        for k in range(fs):
            acc = acc + jnp.einsum('blc,cf->blf', emb_pad[:, off + k: off + k + L_out, :], w[k])
        acc = jax.nn.relu(acc + params['conv_b'][idx])
        cnn_feats.append(jnp.max(acc, axis=1))
    cnn_feat = jnp.concatenate(cnn_feats, axis=1)

    def lstm_dir(w_ih_t, w_hh_t, bias, reverse):
        gates_x = jnp.einsum('ble,eg->blg', emb, w_ih_t) + bias
        h = jnp.zeros((B, H)); c = jnp.zeros((B, H))
        outs = [None] * L
        order = range(L - 1, -1, -1) if reverse else range(L)
        for t in order:
            g = gates_x[:, t, :] + h @ w_hh_t
            i = jax.nn.sigmoid(g[:, :H]); f = jax.nn.sigmoid(g[:, H:2 * H])
            gg = jnp.tanh(g[:, 2 * H:3 * H]); o = jax.nn.sigmoid(g[:, 3 * H:])
            c = f * c + i * gg
            h = o * jnp.tanh(c)
            outs[t] = h
        return jnp.stack(outs, axis=1)

    hf = lstm_dir(params['w_ih_f'], params['w_hh_f'], params['b_f'][0], False)
    hb = lstm_dir(params['w_ih_b'], params['w_hh_b'], params['b_b'][0], True)
    lstm_out = jnp.concatenate([hf, hb], axis=-1)

    u = jnp.tanh(jnp.einsum('blh,hk->blk', lstm_out, params['w_attn']) + params['b_attn'][0])
    scores = jnp.einsum('blk,k->bl', u, params['v_attn'][:, 0])
    attn_w = jax.nn.softmax(scores, axis=1)
    context = jnp.einsum('bl,blh->bh', attn_w, lstm_out)

    combined = jnp.concatenate([cnn_feat, context], axis=1)
    hidden = jax.nn.relu(combined @ params['w_fc'] + params['b_fc'][0])
    logits = hidden @ params['w_out'] + params['b_out'][0]
    return logits, attn_w


# ----------------------------- params ----------------------------------------
def init_params(key, vocab_size, E, F, filter_sizes, H, fc_hidden):
    keys = iter(jax.random.split(key, 32))

    def rnd(shape, scale=0.1):
        return (scale * jax.random.normal(next(keys), shape)).astype(jnp.float32)

    emb_table = rnd((vocab_size, E), 1.0).at[0].set(0.0)   # row 0 = <PAD>
    conv_w = [rnd((fs, E, F)) for fs in filter_sizes]       # torch (F,E,fs) stored as (fs,E,F)
    conv_b = [rnd((1, F)) for _ in filter_sizes]
    return dict(
        embedding=emb_table,
        conv_w=conv_w, conv_b=conv_b,
        w_ih_f=rnd((E, 4 * H)), w_hh_f=rnd((H, 4 * H)), b_f=rnd((1, 4 * H)),
        w_ih_b=rnd((E, 4 * H)), w_hh_b=rnd((H, 4 * H)), b_b=rnd((1, 4 * H)),
        w_attn=rnd((2 * H, 2 * H)), b_attn=rnd((1, 2 * H)), v_attn=rnd((2 * H, 1), 1.0),
        w_fc=rnd((3 * F + 2 * H, fc_hidden)), b_fc=rnd((1, fc_hidden)),
        w_out=rnd((fc_hidden, 2)), b_out=rnd((1, 2)),
    )


# ----------------------------- main -------------------------------------------
if __name__ == "__main__":
    key = jax.random.PRNGKey(0)
    vocab_size = 50
    B, L, E = 2, 8, 32
    F = 16                       # num_filters
    filter_sizes = (3, 4, 5)
    H = 32                       # lstm_hidden  -> 2H = 64
    fc_hidden = 32

    k_tok, k_param = jax.random.split(key)
    params = init_params(k_param, vocab_size, E, F, filter_sizes, H, fc_hidden)
    token_ids = jax.random.randint(k_tok, (B, L), 0, vocab_size, dtype=jnp.int32)

    logits, attn = sarcasm_forward(token_ids, params, L=L, E=E, H=H, F=F,
                                   filter_sizes=filter_sizes, fc_hidden=fc_hidden)
    jax.block_until_ready((logits, attn))

    ref_logits, ref_attn = reference_forward(token_ids, params, L=L, E=E, H=H, F=F,
                                             filter_sizes=filter_sizes, fc_hidden=fc_hidden)
    assert logits.shape == (B, 2) and attn.shape == (B, L)
    # tolerance accounts for bf16 MXU operands (f32 accumulation) in the kernel
    assert jnp.allclose(logits, ref_logits, rtol=2e-2, atol=2e-2)
    assert jnp.allclose(attn, ref_attn, rtol=2e-2, atol=2e-2)
    print("KERNEL_OK")
</pallas_src>

<mosaic_0001>
module attributes {stable_mosaic.version = 11 : i64} {
  func.func @sarcasm_kernel(%arg0: i32, %arg1: memref<104x32xf32, #tpu.memory_space<vmem>>, %arg2: memref<160x48xbf16, #tpu.memory_space<vmem>>, %arg3: memref<1x48xf32, #tpu.memory_space<vmem>>, %arg4: memref<32x256xbf16, #tpu.memory_space<vmem>>, %arg5: memref<32x256xbf16, #tpu.memory_space<vmem>>, %arg6: memref<1x256xf32, #tpu.memory_space<vmem>>, %arg7: memref<64x256xf32, #tpu.memory_space<vmem>>, %arg8: memref<64x64xf32, #tpu.memory_space<vmem>>, %arg9: memref<1x64xf32, #tpu.memory_space<vmem>>, %arg10: memref<1x64xf32, #tpu.memory_space<vmem>>, %arg11: memref<112x32xbf16, #tpu.memory_space<vmem>>, %arg12: memref<1x32xf32, #tpu.memory_space<vmem>>, %arg13: memref<32x2xbf16, #tpu.memory_space<vmem>>, %arg14: memref<1x2xf32, #tpu.memory_space<vmem>>, %arg15: memref<8x128xf32, #tpu.memory_space<vmem>>, %arg16: memref<64x64xf32, #tpu.memory_space<vmem>>) attributes {dimension_semantics = [#tpu.dimension_semantics<parallel>], iteration_bounds = array<i64: 1>, scalar_prefetch = 0 : i64, scratch_operands = 1 : i64, tpu.core_type = #tpu.core_type<tc>, window_params = [{transform_indices = @transform_0, window_bounds = array<i64: 104, 32>}, {pipeline_mode = #tpu.pipeline_mode<synchronous>, transform_indices = @transform_1, window_bounds = array<i64: 160, 48>}, {pipeline_mode = #tpu.pipeline_mode<synchronous>, transform_indices = @transform_2, window_bounds = array<i64: 1, 48>}, {pipeline_mode = #tpu.pipeline_mode<synchronous>, transform_indices = @transform_3, window_bounds = array<i64: 32, 256>}, {pipeline_mode = #tpu.pipeline_mode<synchronous>, transform_indices = @transform_4, window_bounds = array<i64: 32, 256>}, {pipeline_mode = #tpu.pipeline_mode<synchronous>, transform_indices = @transform_5, window_bounds = array<i64: 1, 256>}, {pipeline_mode = #tpu.pipeline_mode<synchronous>, transform_indices = @transform_6, window_bounds = array<i64: 64, 256>}, {pipeline_mode = #tpu.pipeline_mode<synchronous>, transform_indices = @transform_7, window_bounds = array<i64: 64, 64>}, {pipeline_mode = #tpu.pipeline_mode<synchronous>, transform_indices = @transform_8, window_bounds = array<i64: 1, 64>}, {pipeline_mode = #tpu.pipeline_mode<synchronous>, transform_indices = @transform_9, window_bounds = array<i64: 1, 64>}, {pipeline_mode = #tpu.pipeline_mode<synchronous>, transform_indices = @transform_10, window_bounds = array<i64: 112, 32>}, {pipeline_mode = #tpu.pipeline_mode<synchronous>, transform_indices = @transform_11, window_bounds = array<i64: 1, 32>}, {pipeline_mode = #tpu.pipeline_mode<synchronous>, transform_indices = @transform_12, window_bounds = array<i64: 32, 2>}, {pipeline_mode = #tpu.pipeline_mode<synchronous>, transform_indices = @transform_13, window_bounds = array<i64: 1, 2>}, {transform_indices = @transform_14, window_bounds = array<i64: 8, 128>}]} {
    %c0 = arith.constant 0 : index
    %c0_0 = arith.constant 0 : index
    %0 = vector.load %arg1[%c0, %c0_0] : memref<104x32xf32, #tpu.memory_space<vmem>>, vector<104x32xf32>
    %1 = arith.truncf %0 : vector<104x32xf32> to vector<104x32xbf16>
    %cst = arith.constant 0.000000e+00 : f32
    %2 = vector.broadcast %cst : f32 to vector<72x48xf32>
    %3 = vector.extract_strided_slice %1 {offsets = [0, 0], sizes = [72, 32], strides = [1, 1]} : vector<104x32xbf16> to vector<72x32xbf16>
    %c0_1 = arith.constant 0 : index
    %c0_2 = arith.constant 0 : index
    %4 = vector.load %arg2[%c0_1, %c0_2] : memref<160x48xbf16, #tpu.memory_space<vmem>>, vector<32x48xbf16>
    %cst_3 = arith.constant dense<0.000000e+00> : vector<72x48xf32>
    %5 = tpu.matmul %3, %4, %cst_3 {dimension_numbers = #tpu.dot_dimension_numbers<[1], [0], [0], [1], [0, 0, 1, 1], [], []>} : vector<72x32xbf16>, vector<32x48xbf16>, vector<72x48xf32> -> vector<72x48xf32>
    %6 = arith.addf %2, %5 : vector<72x48xf32>
    %7 = vector.extract_strided_slice %1 {offsets = [8, 0], sizes = [72, 32], strides = [1, 1]} : vector<104x32xbf16> to vector<72x32xbf16>
    %c32 = arith.constant 32 : index
    %c0_4 = arith.constant 0 : index
    %8 = vector.load %arg2[%c32, %c0_4] : memref<160x48xbf16, #tpu.memory_space<vmem>>, vector<32x48xbf16>
    %cst_5 = arith.constant dense<0.000000e+00> : vector<72x48xf32>
    %9 = tpu.matmul %7, %8, %cst_5 {dimension_numbers = #tpu.dot_dimension_numbers<[1], [0], [0], [1], [0, 0, 1, 1], [], []>} : vector<72x32xbf16>, vector<32x48xbf16>, vector<72x48xf32> -> vector<72x48xf32>
    %10 = arith.addf %6, %9 : vector<72x48xf32>
    %11 = vector.extract_strided_slice %1 {offsets = [16, 0], sizes = [72, 32], strides = [1, 1]} : vector<104x32xbf16> to vector<72x32xbf16>
    %c64 = arith.constant 64 : index
    %c0_6 = arith.constant 0 : index
    %12 = vector.load %arg2[%c64, %c0_6] : memref<160x48xbf16, #tpu.memory_space<vmem>>, vector<32x48xbf16>
    %cst_7 = arith.constant dense<0.000000e+00> : vector<72x48xf32>
    %13 = tpu.matmul %11, %12, %cst_7 {dimension_numbers = #tpu.dot_dimension_numbers<[1], [0], [0], [1], [0, 0, 1, 1], [], []>} : vector<72x32xbf16>, vector<32x48xbf16>, vector<72x48xf32> -> vector<72x48xf32>
    %14 = arith.addf %10, %13 : vector<72x48xf32>
    %15 = vector.extract_strided_slice %1 {offsets = [24, 0], sizes = [72, 32], strides = [1, 1]} : vector<104x32xbf16> to vector<72x32xbf16>
    %c96 = arith.constant 96 : index
    %c0_8 = arith.constant 0 : index
    %16 = vector.load %arg2[%c96, %c0_8] : memref<160x48xbf16, #tpu.memory_space<vmem>>, vector<32x48xbf16>
    %cst_9 = arith.constant dense<0.000000e+00> : vector<72x48xf32>
    %17 = tpu.matmul %15, %16, %cst_9 {dimension_numbers = #tpu.dot_dimension_numbers<[1], [0], [0], [1], [0, 0, 1, 1], [], []>} : vector<72x32xbf16>, vector<32x48xbf16>, vector<72x48xf32> -> vector<72x48xf32>
    %18 = arith.addf %14, %17 : vector<72x48xf32>
    %19 = vector.extract_strided_slice %1 {offsets = [32, 0], sizes = [72, 32], strides = [1, 1]} : vector<104x32xbf16> to vector<72x32xbf16>
    %c128 = arith.constant 128 : index
    %c0_10 = arith.constant 0 : index
    %20 = vector.load %arg2[%c128, %c0_10] : memref<160x48xbf16, #tpu.memory_space<vmem>>, vector<32x48xbf16>
    %cst_11 = arith.constant dense<0.000000e+00> : vector<72x48xf32>
    %21 = tpu.matmul %19, %20, %cst_11 {dimension_numbers = #tpu.dot_dimension_numbers<[1], [0], [0], [1], [0, 0, 1, 1], [], []>} : vector<72x32xbf16>, vector<32x48xbf16>, vector<72x48xf32> -> vector<72x48xf32>
    %22 = arith.addf %18, %21 : vector<72x48xf32>
    %c0_12 = arith.constant 0 : index
    %c0_13 = arith.constant 0 : index
    %23 = vector.load %arg3[%c0_12, %c0_13] : memref<1x48xf32, #tpu.memory_space<vmem>>, vector<1x48xf32>
    %24 = vector.broadcast %23 : vector<1x48xf32> to vector<72x48xf32>
    %25 = arith.addf %22, %24 : vector<72x48xf32>
    %cst_14 = arith.constant 0.000000e+00 : f32
    %26 = vector.broadcast %cst_14 : f32 to vector<72x48xf32>
    %27 = arith.maximumf %25, %26 : vector<72x48xf32>
    %28 = tpu.iota {dimensions = array<i32: 1>} : vector<8x48xi32>
    %c16_i32 = arith.constant 16 : i32
    %29 = vector.broadcast %c16_i32 : i32 to vector<8x48xi32>
    %30 = arith.cmpi sge, %28, %29 : vector<8x48xi32>
    %c32_i32 = arith.constant 32 : i32
    %31 = vector.broadcast %c32_i32 : i32 to vector<8x48xi32>
    %32 = arith.cmpi slt, %28, %31 : vector<8x48xi32>
    %33 = arith.andi %30, %32 : vector<8x48xi1>
    %cst_15 = arith.constant 0.000000e+00 : f32
    %34 = vector.broadcast %cst_15 : f32 to vector<8x48xf32>
    %35 = vector.extract_strided_slice %27 {offsets = [0, 0], sizes = [8, 48], strides = [1, 1]} : vector<72x48xf32> to vector<8x48xf32>
    %36 = arith.maximumf %34, %35 : vector<8x48xf32>
    %37 = vector.extract_strided_slice %27 {offsets = [8, 0], sizes = [8, 48], strides = [1, 1]} : vector<72x48xf32> to vector<8x48xf32>
    %38 = arith.maximumf %36, %37 : vector<8x48xf32>
    %39 = vector.extract_strided_slice %27 {offsets = [16, 0], sizes = [8, 48], strides = [1, 1]} : vector<72x48xf32> to vector<8x48xf32>
    %40 = arith.maximumf %38, %39 : vector<8x48xf32>
    %41 = vector.extract_strided_slice %27 {offsets = [24, 0], sizes = [8, 48], strides = [1, 1]} : vector<72x48xf32> to vector<8x48xf32>
    %42 = arith.maximumf %40, %41 : vector<8x48xf32>
    %43 = vector.extract_strided_slice %27 {offsets = [32, 0], sizes = [8, 48], strides = [1, 1]} : vector<72x48xf32> to vector<8x48xf32>
    %44 = arith.maximumf %42, %43 : vector<8x48xf32>
    %45 = vector.extract_strided_slice %27 {offsets = [40, 0], sizes = [8, 48], strides = [1, 1]} : vector<72x48xf32> to vector<8x48xf32>
    %46 = arith.maximumf %44, %45 : vector<8x48xf32>
    %47 = vector.extract_strided_slice %27 {offsets = [48, 0], sizes = [8, 48], strides = [1, 1]} : vector<72x48xf32> to vector<8x48xf32>
    %48 = arith.maximumf %46, %47 : vector<8x48xf32>
    %49 = vector.extract_strided_slice %27 {offsets = [56, 0], sizes = [8, 48], strides = [1, 1]} : vector<72x48xf32> to vector<8x48xf32>
    %50 = arith.maximumf %48, %49 : vector<8x48xf32>
    %51 = vector.extract_strided_slice %27 {offsets = [64, 0], sizes = [8, 48], strides = [1, 1]} : vector<72x48xf32> to vector<8x48xf32>
    %cst_16 = arith.constant 0.000000e+00 : f32
    %52 = vector.broadcast %cst_16 : f32 to vector<8x48xf32>
    %53 = arith.select %33, %51, %52 : vector<8x48xi1>, vector<8x48xf32>
    %54 = arith.maximumf %50, %53 : vector<8x48xf32>
    %55 = vector.extract_strided_slice %0 {offsets = [72, 0], sizes = [8, 32], strides = [1, 1]} : vector<104x32xf32> to vector<8x32xf32>
    %56 = vector.extract_strided_slice %0 {offsets = [64, 0], sizes = [8, 32], strides = [1, 1]} : vector<104x32xf32> to vector<8x32xf32>
    %57 = vector.extract_strided_slice %0 {offsets = [56, 0], sizes = [8, 32], strides = [1, 1]} : vector<104x32xf32> to vector<8x32xf32>
    %58 = vector.extract_strided_slice %0 {offsets = [48, 0], sizes = [8, 32], strides = [1, 1]} : vector<104x32xf32> to vector<8x32xf32>
    %59 = vector.extract_strided_slice %0 {offsets = [40, 0], sizes = [8, 32], strides = [1, 1]} : vector<104x32xf32> to vector<8x32xf32>
    %60 = vector.extract_strided_slice %0 {offsets = [32, 0], sizes = [8, 32], strides = [1, 1]} : vector<104x32xf32> to vector<8x32xf32>
    %61 = vector.extract_strided_slice %0 {offsets = [24, 0], sizes = [8, 32], strides = [1, 1]} : vector<104x32xf32> to vector<8x32xf32>
    %62 = vector.extract_strided_slice %0 {offsets = [16, 0], sizes = [8, 32], strides = [1, 1]} : vector<104x32xf32> to vector<8x32xf32>
    %63 = tpu.concatenate %55, %56, %57, %58, %59, %60, %61, %62 in 0 : vector<8x32xf32>, vector<8x32xf32>, vector<8x32xf32>, vector<8x32xf32>, vector<8x32xf32>, vector<8x32xf32>, vector<8x32xf32>, vector<8x32xf32> -> vector<64x32xf32>
    %64 = vector.extract_strided_slice %1 {offsets = [16, 0], sizes = [64, 32], strides = [1, 1]} : vector<104x32xbf16> to vector<64x32xbf16>
    %c0_17 = arith.constant 0 : index
    %c0_18 = arith.constant 0 : index
    %65 = vector.load %arg4[%c0_17, %c0_18] : memref<32x256xbf16, #tpu.memory_space<vmem>>, vector<32x256xbf16>
    %cst_19 = arith.constant dense<0.000000e+00> : vector<64x256xf32>
    %66 = tpu.matmul %64, %65, %cst_19 {dimension_numbers = #tpu.dot_dimension_numbers<[1], [0], [0], [1], [0, 0, 1, 1], [], []>} : vector<64x32xbf16>, vector<32x256xbf16>, vector<64x256xf32> -> vector<64x256xf32>
    %67 = arith.truncf %63 : vector<64x32xf32> to vector<64x32xbf16>
    %c0_20 = arith.constant 0 : index
    %c0_21 = arith.constant 0 : index
    %68 = vector.load %arg5[%c0_20, %c0_21] : memref<32x256xbf16, #tpu.memory_space<vmem>>, vector<32x256xbf16>
    %cst_22 = arith.constant dense<0.000000e+00> : vector<64x256xf32>
    %69 = tpu.matmul %67, %68, %cst_22 {dimension_numbers = #tpu.dot_dimension_numbers<[1], [0], [0], [1], [0, 0, 1, 1], [], []>} : vector<64x32xbf16>, vector<32x256xbf16>, vector<64x256xf32> -> vector<64x256xf32>
    %70 = arith.addf %66, %69 : vector<64x256xf32>
    %c0_23 = arith.constant 0 : index
    %c0_24 = arith.constant 0 : index
    %71 = vector.load %arg6[%c0_23, %c0_24] : memref<1x256xf32, #tpu.memory_space<vmem>>, vector<1x256xf32>
    %72 = vector.broadcast %71 : vector<1x256xf32> to vector<64x256xf32>
    %73 = arith.addf %70, %72 : vector<64x256xf32>
    %c0_25 = arith.constant 0 : index
    %c0_26 = arith.constant 0 : index
    %74 = vector.load %arg7[%c0_25, %c0_26] : memref<64x256xf32, #tpu.memory_space<vmem>>, vector<64x256xf32>
    %cst_27 = arith.constant 0.000000e+00 : f32
    %75 = vector.broadcast %cst_27 : f32 to vector<8x64xf32>
    %cst_28 = arith.constant 0.000000e+00 : f32
    %76 = vector.broadcast %cst_28 : f32 to vector<8x64xf32>
    %77 = vector.extract_strided_slice %73 {offsets = [0, 0], sizes = [8, 256], strides = [1, 1]} : vector<64x256xf32> to vector<8x256xf32>
    %cst_29 = arith.constant dense<0.000000e+00> : vector<8x256xf32>
    %78 = tpu.matmul %75, %74, %cst_29 {dimension_numbers = #tpu.dot_dimension_numbers<[1], [0], [0], [1], [0, 0, 1, 1], [], []>} : vector<8x64xf32>, vector<64x256xf32>, vector<8x256xf32> -> vector<8x256xf32>
    %79 = arith.addf %77, %78 : vector<8x256xf32>
    %80 = vector.extract_strided_slice %79 {offsets = [0, 0], sizes = [8, 192], strides = [1, 1]} : vector<8x256xf32> to vector<8x192xf32>
    %81 = arith.negf %80 : vector<8x192xf32>
    %82 = math.exp %81 : vector<8x192xf32>
    %cst_30 = arith.constant 1.000000e+00 : f32
    %83 = vector.broadcast %cst_30 : f32 to vector<8x192xf32>
    %84 = arith.addf %83, %82 : vector<8x192xf32>
    %85 = arith.divf %83, %84 : vector<8x192xf32>
    %86 = vector.extract_strided_slice %79 {offsets = [0, 192], sizes = [8, 64], strides = [1, 1]} : vector<8x256xf32> to vector<8x64xf32>
    %87 = math.tanh %86 : vector<8x64xf32>
    %88 = vector.extract_strided_slice %85 {offsets = [0, 0], sizes = [8, 64], strides = [1, 1]} : vector<8x192xf32> to vector<8x64xf32>
    %89 = vector.extract_strided_slice %85 {offsets = [0, 64], sizes = [8, 64], strides = [1, 1]} : vector<8x192xf32> to vector<8x64xf32>
    %90 = vector.extract_strided_slice %85 {offsets = [0, 128], sizes = [8, 64], strides = [1, 1]} : vector<8x192xf32> to vector<8x64xf32>
    %91 = arith.mulf %89, %76 : vector<8x64xf32>
    %92 = arith.mulf %88, %87 : vector<8x64xf32>
    %93 = arith.addf %91, %92 : vector<8x64xf32>
    %94 = math.tanh %93 : vector<8x64xf32>
    %95 = arith.mulf %90, %94 : vector<8x64xf32>
    %96 = vector.extract_strided_slice %95 {offsets = [0, 0], sizes = [8, 32], strides = [1, 1]} : vector<8x64xf32> to vector<8x32xf32>
    %c0_31 = arith.constant 0 : index
    %c0_32 = arith.constant 0 : index
    %97 = vector.load %arg16[%c0_31, %c0_32] : memref<64x64xf32, #tpu.memory_space<vmem>>, vector<8x32xf32>
    tpu.vector_store %arg16[%c0_31, %c0_32], %96 {strides = array<i32>} : memref<64x64xf32, #tpu.memory_space<vmem>>, vector<8x32xf32>,
    %98 = vector.extract_strided_slice %95 {offsets = [0, 32], sizes = [8, 32], strides = [1, 1]} : vector<8x64xf32> to vector<8x32xf32>
    %c56 = arith.constant 56 : index
    %c32_33 = arith.constant 32 : index
    %99 = vector.load %arg16[%c56, %c32_33] : memref<64x64xf32, #tpu.memory_space<vmem>>, vector<8x32xf32>
    tpu.vector_store %arg16[%c56, %c32_33], %98 {strides = array<i32>} : memref<64x64xf32, #tpu.memory_space<vmem>>, vector<8x32xf32>,
    %100 = vector.extract_strided_slice %73 {offsets = [8, 0], sizes = [8, 256], strides = [1, 1]} : vector<64x256xf32> to vector<8x256xf32>
    %cst_34 = arith.constant dense<0.000000e+00> : vector<8x256xf32>
    %101 = tpu.matmul %95, %74, %cst_34 {dimension_numbers = #tpu.dot_dimension_numbers<[1], [0], [0], [1], [0, 0, 1, 1], [], []>} : vector<8x64xf32>, vector<64x256xf32>, vector<8x256xf32> -> vector<8x256xf32>
    %102 = arith.addf %100, %101 : vector<8x256xf32>
    %103 = vector.extract_strided_slice %102 {offsets = [0, 0], sizes = [8, 192], strides = [1, 1]} : vector<8x256xf32> to vector<8x192xf32>
    %104 = arith.negf %103 : vector<8x192xf32>
    %105 = math.exp %104 : vector<8x192xf32>
    %cst_35 = arith.constant 1.000000e+00 : f32
    %106 = vector.broadcast %cst_35 : f32 to vector<8x192xf32>
    %107 = arith.addf %106, %105 : vector<8x192xf32>
    %108 = arith.divf %106, %107 : vector<8x192xf32>
    %109 = vector.extract_strided_slice %102 {offsets = [0, 192], sizes = [8, 64], strides = [1, 1]} : vector<8x256xf32> to vector<8x64xf32>
    %110 = math.tanh %109 : vector<8x64xf32>
    %111 = vector.extract_strided_slice %108 {offsets = [0, 0], sizes = [8, 64], strides = [1, 1]} : vector<8x192xf32> to vector<8x64xf32>
    %112 = vector.extract_strided_slice %108 {offsets = [0, 64], sizes = [8, 64], strides = [1, 1]} : vector<8x192xf32> to vector<8x64xf32>
    %113 = vector.extract_strided_slice %108 {offsets = [0, 128], sizes = [8, 64], strides = [1, 1]} : vector<8x192xf32> to vector<8x64xf32>
    %114 = arith.mulf %112, %93 : vector<8x64xf32>
    %115 = arith.mulf %111, %110 : vector<8x64xf32>
    %116 = arith.addf %114, %115 : vector<8x64xf32>
    %117 = math.tanh %116 : vector<8x64xf32>
    %118 = arith.mulf %113, %117 : vector<8x64xf32>
    %119 = vector.extract_strided_slice %118 {offsets = [0, 0], sizes = [8, 32], strides = [1, 1]} : vector<8x64xf32> to vector<8x32xf32>
    %c8 = arith.constant 8 : index
    %c0_36 = arith.constant 0 : index
    %120 = vector.load %arg16[%c8, %c0_36] : memref<64x64xf32, #tpu.memory_space<vmem>>, vector<8x32xf32>
    tpu.vector_store %arg16[%c8, %c0_36], %119 {strides = array<i32>} : memref<64x64xf32, #tpu.memory_space<vmem>>, vector<8x32xf32>,
    %121 = vector.extract_strided_slice %118 {offsets = [0, 32], sizes = [8, 32], strides = [1, 1]} : vector<8x64xf32> to vector<8x32xf32>
    %c48 = arith.constant 48 : index
    %c32_37 = arith.constant 32 : index
    %122 = vector.load %arg16[%c48, %c32_37] : memref<64x64xf32, #tpu.memory_space<vmem>>, vector<8x32xf32>
    tpu.vector_store %arg16[%c48, %c32_37], %121 {strides = array<i32>} : memref<64x64xf32, #tpu.memory_space<vmem>>, vector<8x32xf32>,
    %123 = vector.extract_strided_slice %73 {offsets = [16, 0], sizes = [8, 256], strides = [1, 1]} : vector<64x256xf32> to vector<8x256xf32>
    %cst_38 = arith.constant dense<0.000000e+00> : vector<8x256xf32>
    %124 = tpu.matmul %118, %74, %cst_38 {dimension_numbers = #tpu.dot_dimension_numbers<[1], [0], [0], [1], [0, 0, 1, 1], [], []>} : vector<8x64xf32>, vector<64x256xf32>, vector<8x256xf32> -> vector<8x256xf32>
    %125 = arith.addf %123, %124 : vector<8x256xf32>
    %126 = vector.extract_strided_slice %125 {offsets = [0, 0], sizes = [8, 192], strides = [1, 1]} : vector<8x256xf32> to vector<8x192xf32>
    %127 = arith.negf %126 : vector<8x192xf32>
    %128 = math.exp %127 : vector<8x192xf32>
    %cst_39 = arith.constant 1.000000e+00 : f32
    %129 = vector.broadcast %cst_39 : f32 to vector<8x192xf32>
    %130 = arith.addf %129, %128 : vector<8x192xf32>
    %131 = arith.divf %129, %130 : vector<8x192xf32>
    %132 = vector.extract_strided_slice %125 {offsets = [0, 192], sizes = [8, 64], strides = [1, 1]} : vector<8x256xf32> to vector<8x64xf32>
    %133 = math.tanh %132 : vector<8x64xf32>
    %134 = vector.extract_strided_slice %131 {offsets = [0, 0], sizes = [8, 64], strides = [1, 1]} : vector<8x192xf32> to vector<8x64xf32>
    %135 = vector.extract_strided_slice %131 {offsets = [0, 64], sizes = [8, 64], strides = [1, 1]} : vector<8x192xf32> to vector<8x64xf32>
    %136 = vector.extract_strided_slice %131 {offsets = [0, 128], sizes = [8, 64], strides = [1, 1]} : vector<8x192xf32> to vector<8x64xf32>
    %137 = arith.mulf %135, %116 : vector<8x64xf32>
    %138 = arith.mulf %134, %133 : vector<8x64xf32>
    %139 = arith.addf %137, %138 : vector<8x64xf32>
    %140 = math.tanh %139 : vector<8x64xf32>
    %141 = arith.mulf %136, %140 : vector<8x64xf32>
    %142 = vector.extract_strided_slice %141 {offsets = [0, 0], sizes = [8, 32], strides = [1, 1]} : vector<8x64xf32> to vector<8x32xf32>
    %c16 = arith.constant 16 : index
    %c0_40 = arith.constant 0 : index
    %143 = vector.load %arg16[%c16, %c0_40] : memref<64x64xf32, #tpu.memory_space<vmem>>, vector<8x32xf32>
    tpu.vector_store %arg16[%c16, %c0_40], %142 {strides = array<i32>} : memref<64x64xf32, #tpu.memory_space<vmem>>, vector<8x32xf32>,
    %144 = vector.extract_strided_slice %141 {offsets = [0, 32], sizes = [8, 32], strides = [1, 1]} : vector<8x64xf32> to vector<8x32xf32>
    %c40 = arith.constant 40 : index
    %c32_41 = arith.constant 32 : index
    %145 = vector.load %arg16[%c40, %c32_41] : memref<64x64xf32, #tpu.memory_space<vmem>>, vector<8x32xf32>
    tpu.vector_store %arg16[%c40, %c32_41], %144 {strides = array<i32>} : memref<64x64xf32, #tpu.memory_space<vmem>>, vector<8x32xf32>,
    %146 = vector.extract_strided_slice %73 {offsets = [24, 0], sizes = [8, 256], strides = [1, 1]} : vector<64x256xf32> to vector<8x256xf32>
    %cst_42 = arith.constant dense<0.000000e+00> : vector<8x256xf32>
    %147 = tpu.matmul %141, %74, %cst_42 {dimension_numbers = #tpu.dot_dimension_numbers<[1], [0], [0], [1], [0, 0, 1, 1], [], []>} : vector<8x64xf32>, vector<64x256xf32>, vector<8x256xf32> -> vector<8x256xf32>
    %148 = arith.addf %146, %147 : vector<8x256xf32>
    %149 = vector.extract_strided_slice %148 {offsets = [0, 0], sizes = [8, 192], strides = [1, 1]} : vector<8x256xf32> to vector<8x192xf32>
    %150 = arith.negf %149 : vector<8x192xf32>
    %151 = math.exp %150 : vector<8x192xf32>
    %cst_43 = arith.constant 1.000000e+00 : f32
    %152 = vector.broadcast %cst_43 : f32 to vector<8x192xf32>
    %153 = arith.addf %152, %151 : vector<8x192xf32>
    %154 = arith.divf %152, %153 : vector<8x192xf32>
    %155 = vector.extract_strided_slice %148 {offsets = [0, 192], sizes = [8, 64], strides = [1, 1]} : vector<8x256xf32> to vector<8x64xf32>
    %156 = math.tanh %155 : vector<8x64xf32>
    %157 = vector.extract_strided_slice %154 {offsets = [0, 0], sizes = [8, 64], strides = [1, 1]} : vector<8x192xf32> to vector<8x64xf32>
    %158 = vector.extract_strided_slice %154 {offsets = [0, 64], sizes = [8, 64], strides = [1, 1]} : vector<8x192xf32> to vector<8x64xf32>
    %159 = vector.extract_strided_slice %154 {offsets = [0, 128], sizes = [8, 64], strides = [1, 1]} : vector<8x192xf32> to vector<8x64xf32>
    %160 = arith.mulf %158, %139 : vector<8x64xf32>
    %161 = arith.mulf %157, %156 : vector<8x64xf32>
    %162 = arith.addf %160, %161 : vector<8x64xf32>
    %163 = math.tanh %162 : vector<8x64xf32>
    %164 = arith.mulf %159, %163 : vector<8x64xf32>
    %165 = vector.extract_strided_slice %164 {offsets = [0, 0], sizes = [8, 32], strides = [1, 1]} : vector<8x64xf32> to vector<8x32xf32>
    %c24 = arith.constant 24 : index
    %c0_44 = arith.constant 0 : index
    %166 = vector.load %arg16[%c24, %c0_44] : memref<64x64xf32, #tpu.memory_space<vmem>>, vector<8x32xf32>
    tpu.vector_store %arg16[%c24, %c0_44], %165 {strides = array<i32>} : memref<64x64xf32, #tpu.memory_space<vmem>>, vector<8x32xf32>,
    %167 = vector.extract_strided_slice %164 {offsets = [0, 32], sizes = [8, 32], strides = [1, 1]} : vector<8x64xf32> to vector<8x32xf32>
    %c32_45 = arith.constant 32 : index
    %c32_46 = arith.constant 32 : index
    %168 = vector.load %arg16[%c32_45, %c32_46] : memref<64x64xf32, #tpu.memory_space<vmem>>, vector<8x32xf32>
    tpu.vector_store %arg16[%c32_45, %c32_46], %167 {strides = array<i32>} : memref<64x64xf32, #tpu.memory_space<vmem>>, vector<8x32xf32>,
    %169 = vector.extract_strided_slice %73 {offsets = [32, 0], sizes = [8, 256], strides = [1, 1]} : vector<64x256xf32> to vector<8x256xf32>
    %cst_47 = arith.constant dense<0.000000e+00> : vector<8x256xf32>
    %170 = tpu.matmul %164, %74, %cst_47 {dimension_numbers = #tpu.dot_dimension_numbers<[1], [0], [0], [1], [0, 0, 1, 1], [], []>} : vector<8x64xf32>, vector<64x256xf32>, vector<8x256xf32> -> vector<8x256xf32>
    %171 = arith.addf %169, %170 : vector<8x256xf32>
    %172 = vector.extract_strided_slice %171 {offsets = [0, 0], sizes = [8, 192], strides = [1, 1]} : vector<8x256xf32> to vector<8x192xf32>
    %173 = arith.negf %172 : vector<8x192xf32>
    %174 = math.exp %173 : vector<8x192xf32>
    %cst_48 = arith.constant 1.000000e+00 : f32
    %175 = vector.broadcast %cst_48 : f32 to vector<8x192xf32>
    %176 = arith.addf %175, %174 : vector<8x192xf32>
    %177 = arith.divf %175, %176 : vector<8x192xf32>
    %178 = vector.extract_strided_slice %171 {offsets = [0, 192], sizes = [8, 64], strides = [1, 1]} : vector<8x256xf32> to vector<8x64xf32>
    %179 = math.tanh %178 : vector<8x64xf32>
    %180 = vector.extract_strided_slice %177 {offsets = [0, 0], sizes = [8, 64], strides = [1, 1]} : vector<8x192xf32> to vector<8x64xf32>
    %181 = vector.extract_strided_slice %177 {offsets = [0, 64], sizes = [8, 64], strides = [1, 1]} : vector<8x192xf32> to vector<8x64xf32>
    %182 = vector.extract_strided_slice %177 {offsets = [0, 128], sizes = [8, 64], strides = [1, 1]} : vector<8x192xf32> to vector<8x64xf32>
    %183 = arith.mulf %181, %162 : vector<8x64xf32>
    %184 = arith.mulf %180, %179 : vector<8x64xf32>
    %185 = arith.addf %183, %184 : vector<8x64xf32>
    %186 = math.tanh %185 : vector<8x64xf32>
    %187 = arith.mulf %182, %186 : vector<8x64xf32>
    %188 = vector.extract_strided_slice %187 {offsets = [0, 0], sizes = [8, 32], strides = [1, 1]} : vector<8x64xf32> to vector<8x32xf32>
    %c32_49 = arith.constant 32 : index
    %c0_50 = arith.constant 0 : index
    %189 = vector.load %arg16[%c32_49, %c0_50] : memref<64x64xf32, #tpu.memory_space<vmem>>, vector<8x32xf32>
    tpu.vector_store %arg16[%c32_49, %c0_50], %188 {strides = array<i32>} : memref<64x64xf32, #tpu.memory_space<vmem>>, vector<8x32xf32>,
    %190 = vector.extract_strided_slice %187 {offsets = [0, 32], sizes = [8, 32], strides = [1, 1]} : vector<8x64xf32> to vector<8x32xf32>
    %c24_51 = arith.constant 24 : index
    %c32_52 = arith.constant 32 : index
    %191 = vector.load %arg16[%c24_51, %c32_52] : memref<64x64xf32, #tpu.memory_space<vmem>>, vector<8x32xf32>
    tpu.vector_store %arg16[%c24_51, %c32_52], %190 {strides = array<i32>} : memref<64x64xf32, #tpu.memory_space<vmem>>, vector<8x32xf32>,
    %192 = vector.extract_strided_slice %73 {offsets = [40, 0], sizes = [8, 256], strides = [1, 1]} : vector<64x256xf32> to vector<8x256xf32>
    %cst_53 = arith.constant dense<0.000000e+00> : vector<8x256xf32>
    %193 = tpu.matmul %187, %74, %cst_53 {dimension_numbers = #tpu.dot_dimension_numbers<[1], [0], [0], [1], [0, 0, 1, 1], [], []>} : vector<8x64xf32>, vector<64x256xf32>, vector<8x256xf32> -> vector<8x256xf32>
    %194 = arith.addf %192, %193 : vector<8x256xf32>
    %195 = vector.extract_strided_slice %194 {offsets = [0, 0], sizes = [8, 192], strides = [1, 1]} : vector<8x256xf32> to vector<8x192xf32>
    %196 = arith.negf %195 : vector<8x192xf32>
    %197 = math.exp %196 : vector<8x192xf32>
    %cst_54 = arith.constant 1.000000e+00 : f32
    %198 = vector.broadcast %cst_54 : f32 to vector<8x192xf32>
    %199 = arith.addf %198, %197 : vector<8x192xf32>
    %200 = arith.divf %198, %199 : vector<8x192xf32>
    %201 = vector.extract_strided_slice %194 {offsets = [0, 192], sizes = [8, 64], strides = [1, 1]} : vector<8x256xf32> to vector<8x64xf32>
    %202 = math.tanh %201 : vector<8x64xf32>
    %203 = vector.extract_strided_slice %200 {offsets = [0, 0], sizes = [8, 64], strides = [1, 1]} : vector<8x192xf32> to vector<8x64xf32>
    %204 = vector.extract_strided_slice %200 {offsets = [0, 64], sizes = [8, 64], strides = [1, 1]} : vector<8x192xf32> to vector<8x64xf32>
    %205 = vector.extract_strided_slice %200 {offsets = [0, 128], sizes = [8, 64], strides = [1, 1]} : vector<8x192xf32> to vector<8x64xf32>
    %206 = arith.mulf %204, %185 : vector<8x64xf32>
    %207 = arith.mulf %203, %202 : vector<8x64xf32>
    %208 = arith.addf %206, %207 : vector<8x64xf32>
    %209 = math.tanh %208 : vector<8x64xf32>
    %210 = arith.mulf %205, %209 : vector<8x64xf32>
    %211 = vector.extract_strided_slice %210 {offsets = [0, 0], sizes = [8, 32], strides = [1, 1]} : vector<8x64xf32> to vector<8x32xf32>
    %c40_55 = arith.constant 40 : index
    %c0_56 = arith.constant 0 : index
    %212 = vector.load %arg16[%c40_55, %c0_56] : memref<64x64xf32, #tpu.memory_space<vmem>>, vector<8x32xf32>
    tpu.vector_store %arg16[%c40_55, %c0_56], %211 {strides = array<i32>} : memref<64x64xf32, #tpu.memory_space<vmem>>, vector<8x32xf32>,
    %213 = vector.extract_strided_slice %210 {offsets = [0, 32], sizes = [8, 32], strides = [1, 1]} : vector<8x64xf32> to vector<8x32xf32>
    %c16_57 = arith.constant 16 : index
    %c32_58 = arith.constant 32 : index
    %214 = vector.load %arg16[%c16_57, %c32_58] : memref<64x64xf32, #tpu.memory_space<vmem>>, vector<8x32xf32>
    tpu.vector_store %arg16[%c16_57, %c32_58], %213 {strides = array<i32>} : memref<64x64xf32, #tpu.memory_space<vmem>>, vector<8x32xf32>,
    %215 = vector.extract_strided_slice %73 {offsets = [48, 0], sizes = [8, 256], strides = [1, 1]} : vector<64x256xf32> to vector<8x256xf32>
    %cst_59 = arith.constant dense<0.000000e+00> : vector<8x256xf32>
    %216 = tpu.matmul %210, %74, %cst_59 {dimension_numbers = #tpu.dot_dimension_numbers<[1], [0], [0], [1], [0, 0, 1, 1], [], []>} : vector<8x64xf32>, vector<64x256xf32>, vector<8x256xf32> -> vector<8x256xf32>
    %217 = arith.addf %215, %216 : vector<8x256xf32>
    %218 = vector.extract_strided_slice %217 {offsets = [0, 0], sizes = [8, 192], strides = [1, 1]} : vector<8x256xf32> to vector<8x192xf32>
    %219 = arith.negf %218 : vector<8x192xf32>
    %220 = math.exp %219 : vector<8x192xf32>
    %cst_60 = arith.constant 1.000000e+00 : f32
    %221 = vector.broadcast %cst_60 : f32 to vector<8x192xf32>
    %222 = arith.addf %221, %220 : vector<8x192xf32>
    %223 = arith.divf %221, %222 : vector<8x192xf32>
    %224 = vector.extract_strided_slice %217 {offsets = [0, 192], sizes = [8, 64], strides = [1, 1]} : vector<8x256xf32> to vector<8x64xf32>
    %225 = math.tanh %224 : vector<8x64xf32>
    %226 = vector.extract_strided_slice %223 {offsets = [0, 0], sizes = [8, 64], strides = [1, 1]} : vector<8x192xf32> to vector<8x64xf32>
    %227 = vector.extract_strided_slice %223 {offsets = [0, 64], sizes = [8, 64], strides = [1, 1]} : vector<8x192xf32> to vector<8x64xf32>
    %228 = vector.extract_strided_slice %223 {offsets = [0, 128], sizes = [8, 64], strides = [1, 1]} : vector<8x192xf32> to vector<8x64xf32>
    %229 = arith.mulf %227, %208 : vector<8x64xf32>
    %230 = arith.mulf %226, %225 : vector<8x64xf32>
    %231 = arith.addf %229, %230 : vector<8x64xf32>
    %232 = math.tanh %231 : vector<8x64xf32>
    %233 = arith.mulf %228, %232 : vector<8x64xf32>
    %234 = vector.extract_strided_slice %233 {offsets = [0, 0], sizes = [8, 32], strides = [1, 1]} : vector<8x64xf32> to vector<8x32xf32>
    %c48_61 = arith.constant 48 : index
    %c0_62 = arith.constant 0 : index
    %235 = vector.load %arg16[%c48_61, %c0_62] : memref<64x64xf32, #tpu.memory_space<vmem>>, vector<8x32xf32>
    tpu.vector_store %arg16[%c48_61, %c0_62], %234 {strides = array<i32>} : memref<64x64xf32, #tpu.memory_space<vmem>>, vector<8x32xf32>,
    %236 = vector.extract_strided_slice %233 {offsets = [0, 32], sizes = [8, 32], strides = [1, 1]} : vector<8x64xf32> to vector<8x32xf32>
    %c8_63 = arith.constant 8 : index
    %c32_64 = arith.constant 32 : index
    %237 = vector.load %arg16[%c8_63, %c32_64] : memref<64x64xf32, #tpu.memory_space<vmem>>, vector<8x32xf32>
    tpu.vector_store %arg16[%c8_63, %c32_64], %236 {strides = array<i32>} : memref<64x64xf32, #tpu.memory_space<vmem>>, vector<8x32xf32>,
    %238 = vector.extract_strided_slice %73 {offsets = [56, 0], sizes = [8, 256], strides = [1, 1]} : vector<64x256xf32> to vector<8x256xf32>
    %cst_65 = arith.constant dense<0.000000e+00> : vector<8x256xf32>
    %239 = tpu.matmul %233, %74, %cst_65 {dimension_numbers = #tpu.dot_dimension_numbers<[1], [0], [0], [1], [0, 0, 1, 1], [], []>} : vector<8x64xf32>, vector<64x256xf32>, vector<8x256xf32> -> vector<8x256xf32>
    %240 = arith.addf %238, %239 : vector<8x256xf32>
    %241 = vector.extract_strided_slice %240 {offsets = [0, 0], sizes = [8, 192], strides = [1, 1]} : vector<8x256xf32> to vector<8x192xf32>
    %242 = arith.negf %241 : vector<8x192xf32>
    %243 = math.exp %242 : vector<8x192xf32>
    %cst_66 = arith.constant 1.000000e+00 : f32
    %244 = vector.broadcast %cst_66 : f32 to vector<8x192xf32>
    %245 = arith.addf %244, %243 : vector<8x192xf32>
    %246 = arith.divf %244, %245 : vector<8x192xf32>
    %247 = vector.extract_strided_slice %240 {offsets = [0, 192], sizes = [8, 64], strides = [1, 1]} : vector<8x256xf32> to vector<8x64xf32>
    %248 = math.tanh %247 : vector<8x64xf32>
    %249 = vector.extract_strided_slice %246 {offsets = [0, 0], sizes = [8, 64], strides = [1, 1]} : vector<8x192xf32> to vector<8x64xf32>
    %250 = vector.extract_strided_slice %246 {offsets = [0, 64], sizes = [8, 64], strides = [1, 1]} : vector<8x192xf32> to vector<8x64xf32>
    %251 = vector.extract_strided_slice %246 {offsets = [0, 128], sizes = [8, 64], strides = [1, 1]} : vector<8x192xf32> to vector<8x64xf32>
    %252 = arith.mulf %250, %231 : vector<8x64xf32>
    %253 = arith.mulf %249, %248 : vector<8x64xf32>
    %254 = arith.addf %252, %253 : vector<8x64xf32>
    %255 = math.tanh %254 : vector<8x64xf32>
    %256 = arith.mulf %251, %255 : vector<8x64xf32>
    %257 = vector.extract_strided_slice %256 {offsets = [0, 0], sizes = [8, 32], strides = [1, 1]} : vector<8x64xf32> to vector<8x32xf32>
    %c56_67 = arith.constant 56 : index
    %c0_68 = arith.constant 0 : index
    %258 = vector.load %arg16[%c56_67, %c0_68] : memref<64x64xf32, #tpu.memory_space<vmem>>, vector<8x32xf32>
    tpu.vector_store %arg16[%c56_67, %c0_68], %257 {strides = array<i32>} : memref<64x64xf32, #tpu.memory_space<vmem>>, vector<8x32xf32>,
    %259 = vector.extract_strided_slice %256 {offsets = [0, 32], sizes = [8, 32], strides = [1, 1]} : vector<8x64xf32> to vector<8x32xf32>
    %c0_69 = arith.constant 0 : index
    %c32_70 = arith.constant 32 : index
    %260 = vector.load %arg16[%c0_69, %c32_70] : memref<64x64xf32, #tpu.memory_space<vmem>>, vector<8x32xf32>
    tpu.vector_store %arg16[%c0_69, %c32_70], %259 {strides = array<i32>} : memref<64x64xf32, #tpu.memory_space<vmem>>, vector<8x32xf32>,
    %c0_71 = arith.constant 0 : index
    %c0_72 = arith.constant 0 : index
    %261 = vector.load %arg16[%c0_71, %c0_72] : memref<64x64xf32, #tpu.memory_space<vmem>>, vector<64x64xf32>
    %c0_73 = arith.constant 0 : index
    %c0_74 = arith.constant 0 : index
    %262 = vector.load %arg8[%c0_73, %c0_74] : memref<64x64xf32, #tpu.memory_space<vmem>>, vector<64x64xf32>
    %cst_75 = arith.constant dense<0.000000e+00> : vector<64x64xf32>
    %263 = tpu.matmul %261, %262, %cst_75 {dimension_numbers = #tpu.dot_dimension_numbers<[1], [0], [0], [1], [0, 0, 1, 1], [], []>} : vector<64x64xf32>, vector<64x64xf32>, vector<64x64xf32> -> vector<64x64xf32>
    %c0_76 = arith.constant 0 : index
    %c0_77 = arith.constant 0 : index
    %264 = vector.load %arg9[%c0_76, %c0_77] : memref<1x64xf32, #tpu.memory_space<vmem>>, vector<1x64xf32>
    %265 = vector.broadcast %264 : vector<1x64xf32> to vector<64x64xf32>
    %266 = arith.addf %263, %265 : vector<64x64xf32>
    %267 = math.tanh %266 : vector<64x64xf32>
    %c0_78 = arith.constant 0 : index
    %c0_79 = arith.constant 0 : index
    %268 = vector.load %arg10[%c0_78, %c0_79] : memref<1x64xf32, #tpu.memory_space<vmem>>, vector<1x64xf32>
    %269 = vector.broadcast %268 : vector<1x64xf32> to vector<64x64xf32>
    %270 = arith.mulf %267, %269 : vector<64x64xf32>
    %cst_80 = arith.constant dense<0.000000e+00> : vector<64xf32>
    %271 = vector.multi_reduction <add>, %270, %cst_80 [1] : vector<64x64xf32> to vector<64xf32>
    %272 = vector.shape_cast %271 : vector<64xf32> to vector<64x1xf32>
    %273 = vector.extract_strided_slice %272 {offsets = [0, 0], sizes = [8, 1], strides = [1, 1]} : vector<64x1xf32> to vector<8x1xf32>
    %274 = vector.extract_strided_slice %272 {offsets = [8, 0], sizes = [8, 1], strides = [1, 1]} : vector<64x1xf32> to vector<8x1xf32>
    %275 = vector.extract_strided_slice %272 {offsets = [16, 0], sizes = [8, 1], strides = [1, 1]} : vector<64x1xf32> to vector<8x1xf32>
    %276 = vector.extract_strided_slice %272 {offsets = [24, 0], sizes = [8, 1], strides = [1, 1]} : vector<64x1xf32> to vector<8x1xf32>
    %277 = vector.extract_strided_slice %272 {offsets = [32, 0], sizes = [8, 1], strides = [1, 1]} : vector<64x1xf32> to vector<8x1xf32>
    %278 = vector.extract_strided_slice %272 {offsets = [40, 0], sizes = [8, 1], strides = [1, 1]} : vector<64x1xf32> to vector<8x1xf32>
    %279 = vector.extract_strided_slice %272 {offsets = [48, 0], sizes = [8, 1], strides = [1, 1]} : vector<64x1xf32> to vector<8x1xf32>
    %280 = vector.extract_strided_slice %272 {offsets = [56, 0], sizes = [8, 1], strides = [1, 1]} : vector<64x1xf32> to vector<8x1xf32>
    %281 = tpu.concatenate %273, %274, %275, %276, %277, %278, %279, %280 in 1 : vector<8x1xf32>, vector<8x1xf32>, vector<8x1xf32>, vector<8x1xf32>, vector<8x1xf32>, vector<8x1xf32>, vector<8x1xf32>, vector<8x1xf32> -> vector<8x8xf32>
    %cst_81 = arith.constant dense<0xFF800000> : vector<8xf32>
    %282 = vector.multi_reduction <maximumf>, %281, %cst_81 [1] : vector<8x8xf32> to vector<8xf32>
    %283 = vector.shape_cast %282 : vector<8xf32> to vector<8x1xf32>
    %284 = vector.broadcast %283 : vector<8x1xf32> to vector<8x8xf32>
    %285 = arith.subf %281, %284 : vector<8x8xf32>
    %286 = math.exp %285 : vector<8x8xf32>
    %cst_82 = arith.constant dense<0.000000e+00> : vector<8xf32>
    %287 = vector.multi_reduction <add>, %286, %cst_82 [1] : vector<8x8xf32> to vector<8xf32>
    %288 = vector.shape_cast %287 : vector<8xf32> to vector<8x1xf32>
    %289 = tpu.reciprocal %288 {approx = true} : vector<8x1xf32> -> vector<8x1xf32>
    %290 = vector.broadcast %289 : vector<8x1xf32> to vector<8x8xf32>
    %291 = arith.mulf %286, %290 : vector<8x8xf32>
    %cst_83 = arith.constant 0.000000e+00 : f32
    %292 = vector.broadcast %cst_83 : f32 to vector<8x64xf32>
    %293 = vector.extract_strided_slice %291 {offsets = [0, 0], sizes = [8, 1], strides = [1, 1]} : vector<8x8xf32> to vector<8x1xf32>
    %294 = vector.extract_strided_slice %261 {offsets = [0, 0], sizes = [8, 64], strides = [1, 1]} : vector<64x64xf32> to vector<8x64xf32>
    %295 = vector.broadcast %293 : vector<8x1xf32> to vector<8x64xf32>
    %296 = arith.mulf %295, %294 : vector<8x64xf32>
    %297 = arith.addf %292, %296 : vector<8x64xf32>
    %298 = vector.extract_strided_slice %291 {offsets = [0, 1], sizes = [8, 1], strides = [1, 1]} : vector<8x8xf32> to vector<8x1xf32>
    %299 = vector.extract_strided_slice %261 {offsets = [8, 0], sizes = [8, 64], strides = [1, 1]} : vector<64x64xf32> to vector<8x64xf32>
    %300 = vector.broadcast %298 : vector<8x1xf32> to vector<8x64xf32>
    %301 = arith.mulf %300, %299 : vector<8x64xf32>
    %302 = arith.addf %297, %301 : vector<8x64xf32>
    %303 = vector.extract_strided_slice %291 {offsets = [0, 2], sizes = [8, 1], strides = [1, 1]} : vector<8x8xf32> to vector<8x1xf32>
    %304 = vector.extract_strided_slice %261 {offsets = [16, 0], sizes = [8, 64], strides = [1, 1]} : vector<64x64xf32> to vector<8x64xf32>
    %305 = vector.broadcast %303 : vector<8x1xf32> to vector<8x64xf32>
    %306 = arith.mulf %305, %304 : vector<8x64xf32>
    %307 = arith.addf %302, %306 : vector<8x64xf32>
    %308 = vector.extract_strided_slice %291 {offsets = [0, 3], sizes = [8, 1], strides = [1, 1]} : vector<8x8xf32> to vector<8x1xf32>
    %309 = vector.extract_strided_slice %261 {offsets = [24, 0], sizes = [8, 64], strides = [1, 1]} : vector<64x64xf32> to vector<8x64xf32>
    %310 = vector.broadcast %308 : vector<8x1xf32> to vector<8x64xf32>
    %311 = arith.mulf %310, %309 : vector<8x64xf32>
    %312 = arith.addf %307, %311 : vector<8x64xf32>
    %313 = vector.extract_strided_slice %291 {offsets = [0, 4], sizes = [8, 1], strides = [1, 1]} : vector<8x8xf32> to vector<8x1xf32>
    %314 = vector.extract_strided_slice %261 {offsets = [32, 0], sizes = [8, 64], strides = [1, 1]} : vector<64x64xf32> to vector<8x64xf32>
    %315 = vector.broadcast %313 : vector<8x1xf32> to vector<8x64xf32>
    %316 = arith.mulf %315, %314 : vector<8x64xf32>
    %317 = arith.addf %312, %316 : vector<8x64xf32>
    %318 = vector.extract_strided_slice %291 {offsets = [0, 5], sizes = [8, 1], strides = [1, 1]} : vector<8x8xf32> to vector<8x1xf32>
    %319 = vector.extract_strided_slice %261 {offsets = [40, 0], sizes = [8, 64], strides = [1, 1]} : vector<64x64xf32> to vector<8x64xf32>
    %320 = vector.broadcast %318 : vector<8x1xf32> to vector<8x64xf32>
    %321 = arith.mulf %320, %319 : vector<8x64xf32>
    %322 = arith.addf %317, %321 : vector<8x64xf32>
    %323 = vector.extract_strided_slice %291 {offsets = [0, 6], sizes = [8, 1], strides = [1, 1]} : vector<8x8xf32> to vector<8x1xf32>
    %324 = vector.extract_strided_slice %261 {offsets = [48, 0], sizes = [8, 64], strides = [1, 1]} : vector<64x64xf32> to vector<8x64xf32>
    %325 = vector.broadcast %323 : vector<8x1xf32> to vector<8x64xf32>
    %326 = arith.mulf %325, %324 : vector<8x64xf32>
    %327 = arith.addf %322, %326 : vector<8x64xf32>
    %328 = vector.extract_strided_slice %291 {offsets = [0, 7], sizes = [8, 1], strides = [1, 1]} : vector<8x8xf32> to vector<8x1xf32>
    %329 = vector.extract_strided_slice %261 {offsets = [56, 0], sizes = [8, 64], strides = [1, 1]} : vector<64x64xf32> to vector<8x64xf32>
    %330 = vector.broadcast %328 : vector<8x1xf32> to vector<8x64xf32>
    %331 = arith.mulf %330, %329 : vector<8x64xf32>
    %332 = arith.addf %327, %331 : vector<8x64xf32>
    %333 = tpu.concatenate %54, %332 in 1 : vector<8x48xf32>, vector<8x64xf32> -> vector<8x112xf32>
    %334 = arith.truncf %333 : vector<8x112xf32> to vector<8x112xbf16>
    %c0_84 = arith.constant 0 : index
    %c0_85 = arith.constant 0 : index
    %335 = vector.load %arg11[%c0_84, %c0_85] : memref<112x32xbf16, #tpu.memory_space<vmem>>, vector<112x32xbf16>
    %cst_86 = arith.constant dense<0.000000e+00> : vector<8x32xf32>
    %336 = tpu.matmul %334, %335, %cst_86 {dimension_numbers = #tpu.dot_dimension_numbers<[1], [0], [0], [1], [0, 0, 1, 1], [], []>} : vector<8x112xbf16>, vector<112x32xbf16>, vector<8x32xf32> -> vector<8x32xf32>
    %c0_87 = arith.constant 0 : index
    %c0_88 = arith.constant 0 : index
    %337 = vector.load %arg12[%c0_87, %c0_88] : memref<1x32xf32, #tpu.memory_space<vmem>>, vector<1x32xf32>
    %338 = vector.broadcast %337 : vector<1x32xf32> to vector<8x32xf32>
    %339 = arith.addf %336, %338 : vector<8x32xf32>
    %cst_89 = arith.constant 0.000000e+00 : f32
    %340 = vector.broadcast %cst_89 : f32 to vector<8x32xf32>
    %341 = arith.maximumf %339, %340 : vector<8x32xf32>
    %342 = arith.truncf %341 : vector<8x32xf32> to vector<8x32xbf16>
    %c0_90 = arith.constant 0 : index
    %c0_91 = arith.constant 0 : index
    %343 = vector.load %arg13[%c0_90, %c0_91] : memref<32x2xbf16, #tpu.memory_space<vmem>>, vector<32x2xbf16>
    %cst_92 = arith.constant dense<0.000000e+00> : vector<8x2xf32>
    %344 = tpu.matmul %342, %343, %cst_92 {dimension_numbers = #tpu.dot_dimension_numbers<[1], [0], [0], [1], [0, 0, 1, 1], [], []>} : vector<8x32xbf16>, vector<32x2xbf16>, vector<8x2xf32> -> vector<8x2xf32>
    %c0_93 = arith.constant 0 : index
    %c0_94 = arith.constant 0 : index
    %345 = vector.load %arg14[%c0_93, %c0_94] : memref<1x2xf32, #tpu.memory_space<vmem>>, vector<1x2xf32>
    %346 = vector.broadcast %345 : vector<1x2xf32> to vector<8x2xf32>
    %347 = arith.addf %344, %346 : vector<8x2xf32>
    %cst_95 = arith.constant 0.000000e+00 : f32
    %348 = vector.broadcast %cst_95 : f32 to vector<8x118xf32>
    %349 = tpu.concatenate %347, %291, %348 in 1 : vector<8x2xf32>, vector<8x8xf32>, vector<8x118xf32> -> vector<8x128xf32>
    %c0_96 = arith.constant 0 : index
    %c0_97 = arith.constant 0 : index
    %350 = vector.load %arg15[%c0_96, %c0_97] : memref<8x128xf32, #tpu.memory_space<vmem>>, vector<8x128xf32>
    tpu.vector_store %arg15[%c0_96, %c0_97], %349 {strides = array<i32>} : memref<8x128xf32, #tpu.memory_space<vmem>>, vector<8x128xf32>,
    return
  }
  func.func @transform_0(%arg0: i32) -> (i32, i32) {
    %c0_i32 = arith.constant 0 : i32
    %c0_i32_0 = arith.constant 0 : i32
    return %arg0, %c0_i32 : i32, i32
  }
  func.func @transform_1(%arg0: i32) -> (i32, i32) {
    %c0_i32 = arith.constant 0 : i32
    %c0_i32_0 = arith.constant 0 : i32
    %c0_i32_1 = arith.constant 0 : i32
    return %c0_i32, %c0_i32_0 : i32, i32
  }
  func.func @transform_2(%arg0: i32) -> (i32, i32) {
    %c0_i32 = arith.constant 0 : i32
    %c0_i32_0 = arith.constant 0 : i32
    %c0_i32_1 = arith.constant 0 : i32
    return %c0_i32, %c0_i32_0 : i32, i32
  }
  func.func @transform_3(%arg0: i32) -> (i32, i32) {
    %c0_i32 = arith.constant 0 : i32
    %c0_i32_0 = arith.constant 0 : i32
    %c0_i32_1 = arith.constant 0 : i32
    return %c0_i32, %c0_i32_0 : i32, i32
  }
  func.func @transform_4(%arg0: i32) -> (i32, i32) {
    %c0_i32 = arith.constant 0 : i32
    %c0_i32_0 = arith.constant 0 : i32
    %c0_i32_1 = arith.constant 0 : i32
    return %c0_i32, %c0_i32_0 : i32, i32
  }
  func.func @transform_5(%arg0: i32) -> (i32, i32) {
    %c0_i32 = arith.constant 0 : i32
    %c0_i32_0 = arith.constant 0 : i32
    %c0_i32_1 = arith.constant 0 : i32
    return %c0_i32, %c0_i32_0 : i32, i32
  }
  func.func @transform_6(%arg0: i32) -> (i32, i32) {
    %c0_i32 = arith.constant 0 : i32
    %c0_i32_0 = arith.constant 0 : i32
    %c0_i32_1 = arith.constant 0 : i32
    return %c0_i32, %c0_i32_0 : i32, i32
  }
  func.func @transform_7(%arg0: i32) -> (i32, i32) {
    %c0_i32 = arith.constant 0 : i32
    %c0_i32_0 = arith.constant 0 : i32
    %c0_i32_1 = arith.constant 0 : i32
    return %c0_i32, %c0_i32_0 : i32, i32
  }
  func.func @transform_8(%arg0: i32) -> (i32, i32) {
    %c0_i32 = arith.constant 0 : i32
    %c0_i32_0 = arith.constant 0 : i32
    %c0_i32_1 = arith.constant 0 : i32
    return %c0_i32, %c0_i32_0 : i32, i32
  }
  func.func @transform_9(%arg0: i32) -> (i32, i32) {
    %c0_i32 = arith.constant 0 : i32
    %c0_i32_0 = arith.constant 0 : i32
    %c0_i32_1 = arith.constant 0 : i32
    return %c0_i32, %c0_i32_0 : i32, i32
  }
  func.func @transform_10(%arg0: i32) -> (i32, i32) {
    %c0_i32 = arith.constant 0 : i32
    %c0_i32_0 = arith.constant 0 : i32
    %c0_i32_1 = arith.constant 0 : i32
    return %c0_i32, %c0_i32_0 : i32, i32
  }
  func.func @transform_11(%arg0: i32) -> (i32, i32) {
    %c0_i32 = arith.constant 0 : i32
    %c0_i32_0 = arith.constant 0 : i32
    %c0_i32_1 = arith.constant 0 : i32
    return %c0_i32, %c0_i32_0 : i32, i32
  }
  func.func @transform_12(%arg0: i32) -> (i32, i32) {
    %c0_i32 = arith.constant 0 : i32
    %c0_i32_0 = arith.constant 0 : i32
    %c0_i32_1 = arith.constant 0 : i32
    return %c0_i32, %c0_i32_0 : i32, i32
  }
  func.func @transform_13(%arg0: i32) -> (i32, i32) {
    %c0_i32 = arith.constant 0 : i32
    %c0_i32_0 = arith.constant 0 : i32
    %c0_i32_1 = arith.constant 0 : i32
    return %c0_i32, %c0_i32_0 : i32, i32
  }
  func.func @transform_14(%arg0: i32) -> (i32, i32) {
    %c0_i32 = arith.constant 0 : i32
    %c0_i32_0 = arith.constant 0 : i32
    return %arg0, %c0_i32 : i32, i32
  }
}

</mosaic_0001>

<llo_original>
// kernel: tpu_custom_call.1
$region0: #{tpu_custom_call.1}
  #allocation0 [shape = 'u32[]', space=smem, size = 0x4, offset = 0x4, fixed_abs, tag = 'smem constant byte address 0x4 - core index']
  #allocation1 [shape = 'u32[144,128]{1,0:T(1,128)}', space=vmem, size = 0x12000, scoped, tag = 'internal scratch']
  #allocation2 [shape = 'f32[64,64]{1,0:T(8,128)}', space=vmem, size = 0x8000, scoped, tag = 'scratch operand']
  %s0 = inlined_call_operand.vmem [shape: f32[104,32], index: 0, kind: input, shape index: {}]
  %s1 = inlined_call_operand.vmem [shape: bf16[160,48], index: 1, kind: input, shape index: {}]
  %s2 = inlined_call_operand.vmem [shape: f32[1,48], index: 2, kind: input, shape index: {}]
  %s3 = inlined_call_operand.vmem [shape: bf16[32,256], index: 3, kind: input, shape index: {}]
  %s4 = inlined_call_operand.vmem [shape: bf16[32,256], index: 4, kind: input, shape index: {}]
  %s5 = inlined_call_operand.vmem [shape: f32[1,256], index: 5, kind: input, shape index: {}]
  %s6 = inlined_call_operand.vmem [shape: f32[64,256], index: 6, kind: input, shape index: {}]
  %s7 = inlined_call_operand.vmem [shape: f32[64,64], index: 7, kind: input, shape index: {}]
  %s8 = inlined_call_operand.vmem [shape: f32[1,64], index: 8, kind: input, shape index: {}]
  %s9 = inlined_call_operand.vmem [shape: f32[1,64], index: 9, kind: input, shape index: {}]
  %s10 = inlined_call_operand.vmem [shape: bf16[112,32], index: 10, kind: input, shape index: {}]
  %s11 = inlined_call_operand.vmem [shape: f32[1,32], index: 11, kind: input, shape index: {}]
  %s12 = inlined_call_operand.vmem [shape: bf16[32,2], index: 12, kind: input, shape index: {}]
  %s13 = inlined_call_operand.vmem [shape: f32[1,2], index: 13, kind: input, shape index: {}]
  %s14 = inlined_call_operand.hbm [shape: f32[8,128], index: 14, kind: output, shape index: {}]
  %s15 = sld [smem:[#allocation0]]
  $region66: #{tpu_custom_call.1} parent=0
    _
  %s17 = ssub.s32 1, %s15
  %s18 = scalar_select 0, %s17, %s15
  $region1: #{tpu_custom_call.1} parent=0
    #allocation3 [shape = 'u8[4096]{0}', space=vmem, size = 0x1000, scoped, tag = 'output window, operand 0, single buffered']
    #allocation4 [shape = 's32[1]{0}', space=sflag, size = 0x4, scoped, tag = 'scoped memory for tpu_custom_call.1']
    %19 = vsyncpa [#allocation4], 0
    // Predicated region
    $region2: #{tpu_custom_call.1} parent=1 // pred_check
      _
    $region3: #{tpu_custom_call.1} parent=1 // pred_check_branch
      %21 = sbr.rel (0) target = $region5
    $region4: #{tpu_custom_call.1} parent=1 // pred_region
      _
    $region5: #{tpu_custom_call.1} parent=1 // pred_fallthru
      _
    // Predicated region
    $region6: #{tpu_custom_call.1} parent=1 // pred_check
      _
    $region7: #{tpu_custom_call.1} parent=1 // pred_check_branch
      %23 = sbr.rel (0) target = $region9
    $region8: #{tpu_custom_call.1} parent=1 // pred_region
      _
    $region9: #{tpu_custom_call.1} parent=1 // pred_fallthru
      _
    // Predicated region
    $region10: #{tpu_custom_call.1} parent=1 // pred_check
      _
    $region11: #{tpu_custom_call.1} parent=1 // pred_check_branch
      %25 = sbr.rel (0) target = $region13
    $region12: #{tpu_custom_call.1} parent=1 // pred_region
      _
    $region13: #{tpu_custom_call.1} parent=1 // pred_fallthru
      _
    // Predicated region
    $region14: #{tpu_custom_call.1} parent=1 // pred_check
      _
    $region15: #{tpu_custom_call.1} parent=1 // pred_check_branch
      %27 = sbr.rel (0) target = $region17
    $region16: #{tpu_custom_call.1} parent=1 // pred_region
      _
    $region17: #{tpu_custom_call.1} parent=1 // pred_fallthru
      _
    // Predicated region
    $region18: #{tpu_custom_call.1} parent=1 // pred_check
      _
    $region19: #{tpu_custom_call.1} parent=1 // pred_check_branch
      %29 = sbr.rel (0) target = $region21
    $region20: #{tpu_custom_call.1} parent=1 // pred_region
      _
    $region21: #{tpu_custom_call.1} parent=1 // pred_fallthru
      _
    // Predicated region
    $region22: #{tpu_custom_call.1} parent=1 // pred_check
      _
    $region23: #{tpu_custom_call.1} parent=1 // pred_check_branch
      %31 = sbr.rel (0) target = $region25
    $region24: #{tpu_custom_call.1} parent=1 // pred_region
      _
    $region25: #{tpu_custom_call.1} parent=1 // pred_fallthru
      _
    // Predicated region
    $region26: #{tpu_custom_call.1} parent=1 // pred_check
      _
    $region27: #{tpu_custom_call.1} parent=1 // pred_check_branch
      %33 = sbr.rel (0) target = $region29
    $region28: #{tpu_custom_call.1} parent=1 // pred_region
      _
    $region29: #{tpu_custom_call.1} parent=1 // pred_fallthru
      _
    // Predicated region
    $region30: #{tpu_custom_call.1} parent=1 // pred_check
      _
    $region31: #{tpu_custom_call.1} parent=1 // pred_check_branch
      %35 = sbr.rel (0) target = $region33
    $region32: #{tpu_custom_call.1} parent=1 // pred_region
      _
    $region33: #{tpu_custom_call.1} parent=1 // pred_fallthru
      _
    // Predicated region
    $region34: #{tpu_custom_call.1} parent=1 // pred_check
      _
    $region35: #{tpu_custom_call.1} parent=1 // pred_check_branch
      %37 = sbr.rel (0) target = $region37
    $region36: #{tpu_custom_call.1} parent=1 // pred_region
      _
    $region37: #{tpu_custom_call.1} parent=1 // pred_fallthru
      _
    // Predicated region
    $region38: #{tpu_custom_call.1} parent=1 // pred_check
      _
    $region39: #{tpu_custom_call.1} parent=1 // pred_check_branch
      %39 = sbr.rel (0) target = $region41
    $region40: #{tpu_custom_call.1} parent=1 // pred_region
      _
    $region41: #{tpu_custom_call.1} parent=1 // pred_fallthru
      _
    // Predicated region
    $region42: #{tpu_custom_call.1} parent=1 // pred_check
      _
    $region43: #{tpu_custom_call.1} parent=1 // pred_check_branch
      %41 = sbr.rel (0) target = $region45
    $region44: #{tpu_custom_call.1} parent=1 // pred_region
      _
    $region45: #{tpu_custom_call.1} parent=1 // pred_fallthru
      _
    // Predicated region
    $region46: #{tpu_custom_call.1} parent=1 // pred_check
      _
    $region47: #{tpu_custom_call.1} parent=1 // pred_check_branch
      %43 = sbr.rel (0) target = $region49
    $region48: #{tpu_custom_call.1} parent=1 // pred_region
      _
    $region49: #{tpu_custom_call.1} parent=1 // pred_fallthru
      _
    // Predicated region
    $region50: #{tpu_custom_call.1} parent=1 // pred_check
      _
    $region51: #{tpu_custom_call.1} parent=1 // pred_check_branch
      %45 = sbr.rel (0) target = $region53
    $region52: #{tpu_custom_call.1} parent=1 // pred_region
      _
    $region53: #{tpu_custom_call.1} parent=1 // pred_fallthru
      _
    // Predicated region
    $region54: #{tpu_custom_call.1} parent=1 // pred_check
      _
    $region55: #{tpu_custom_call.1} parent=1 // pred_check_branch
      %47 = sbr.rel (0) target = $region57
    $region56: #{tpu_custom_call.1} parent=1 // pred_region
      _
    $region57: #{tpu_custom_call.1} parent=1 // pred_fallthru
      _
    %v49 = vld [vmem:[%s0] sm:$0xff]
    %v50 = vld [vmem:[%s0 + $0x8] sm:$0xff]
    %v51 = vld [vmem:[%s0 + $0x10] sm:$0xff]
    %v52 = vld [vmem:[%s0 + $0x18] sm:$0xff]
    %v53 = vld [vmem:[%s0 + $0x20] sm:$0xff]
    %v54 = vld [vmem:[%s0 + $0x28] sm:$0xff]
    %v55 = vld [vmem:[%s0 + $0x30] sm:$0xff]
    %v56 = vld [vmem:[%s0 + $0x38] sm:$0xff]
    %v57 = vld [vmem:[%s0 + $0x40] sm:$0xff]
    %v58 = vld [vmem:[%s0 + $0x48] sm:$0xff]
    %v59 = vld [vmem:[%s0 + $0x50] sm:$0xff]
    %v60 = vld [vmem:[%s0 + $0x58] sm:$0xff]
    %v61 = vld [vmem:[%s0 + $0x60] sm:$0xff]
    %v62 = vpack.c.bf16 %v50, %v49
    %v63 = vpack.c.bf16 %v52, %v51
    %v64 = vpack.c.bf16 %v54, %v53
    %v65 = vpack.c.bf16 %v56, %v55
    %v66 = vpack.c.bf16 %v58, %v57
    %v67 = vpack.c.bf16 %v60, %v59
    %v68 = vpack.c.bf16 %v61, %v61
    %v69 = vld [vmem:[%s1] sm:$0xf]
    %v70 = vld [vmem:[%s1 + $0x4] sm:$0xf]
    %v71 = vld [vmem:[%s1 + $0x8] sm:$0xf]
    %v72 = vld [vmem:[%s1 + $0xc] sm:$0xf]
    %v73 = vld [vmem:[%s1 + $0x10] sm:$0xf]
    %v74 = vld [vmem:[%s1 + $0x14] sm:$0xf]
    %v75 = vld [vmem:[%s1 + $0x18] sm:$0xf]
    %v76 = vld [vmem:[%s1 + $0x1c] sm:$0xf]
    %vm82 = vcmask 1043456
    %v83 = vrot.slane %v62, 4
    %v84 = vrot.slane %v63, 4
    %v85 = vsel %vm82, %v83, %v84
    %v86 = vrot.slane %v64, 4
    %v87 = vsel %vm82, %v84, %v86
    %v88 = vrot.slane %v65, 4
    %v89 = vsel %vm82, %v86, %v88
    %v90 = vrot.slane %v66, 4
    %v91 = vsel %vm82, %v88, %v90
    %v96 = vunpack.c.l.b16 %v73
    %v97 = vunpack.c.l.b16 %v74
    %v98 = vunpack.c.l.b16 %v75
    %v99 = vunpack.c.l.b16 %v76
    %v100 = vpack.c.b16 %v97, %v96
    %v101 = vpack.c.b16 %v99, %v98
    %vm104 = vcmask 261120
    %v106 = vsel %vm104, %v85, 0
    %v109 = vsel %vm104, %v87, 0
    %v112 = vsel %vm104, %v89, 0
    %v115 = vsel %vm104, %v91, 0
    %v118 = vsel %vm104, %v90, 0
    %120 = vmatprep.subr.bf16.mxu0 0
    %121 = vmatpush1.bf16.msra.mxu0 %v100
    %122 = vmatprep.subr.bf16.mxu0 0
    %123 = vmatpush1.bf16.msra.mxu0 %v101
    %124 = vmatprep.subr.bf16.mxu0 0
    %125 = vmatpush1.bf16.msra.mxu0 0
    %126 = vmatprep.subr.bf16.mxu0 0
    %127 = vmatpush1.bf16.msra.mxu0 0
    %128 = vmatprep.subr.bf16.mxu0 0
    %129 = vmatpush1.bf16.msra.mxu0 0
    %130 = vmatprep.subr.bf16.mxu0 0
    %131 = vmatpush1.bf16.msra.mxu0 0
    %132 = vmatprep.subr.bf16.mxu0 0
    %133 = vmatpush1.bf16.msra.mxu0 0
    %134 = vmatprep.subr.bf16.mxu0 0
    %135 = vmatpush1.bf16.msra.mxu0 0
    %136 = vmatprep.subr.bf16.mxu0 0
    %137 = vmatpush1.bf16.msra.mxu0 0
    %138 = vmatprep.subr.bf16.mxu0 0
    %139 = vmatpush1.bf16.msra.mxu0 0
    %140 = vmatprep.subr.bf16.mxu0 0
    %141 = vmatpush1.bf16.msra.mxu0 0
    %142 = vmatprep.subr.bf16.mxu0 0
    %143 = vmatpush1.bf16.msra.mxu0 0
    %144 = vmatprep.subr.bf16.mxu0 0
    %145 = vmatpush1.bf16.msra.mxu0 0
    %146 = vmatprep.subr.bf16.mxu0 0
    %147 = vmatpush1.bf16.msra.mxu0 0
    %148 = vmatprep.subr.bf16.mxu0 0
    %149 = vmatpush1.bf16.msra.mxu0 0
    %150 = vmatprep.subr.bf16.mxu0 0
    %151 = vmatpush1.bf16.msra.mxu0 0
    %152 = vmatprep.mubr.bf16.mxu0 0
    %153 = vmatmul.mubr.bf16.gmra.mrb[0].mxu0 %v106
    %v154 = vpop.f32.mrb[0].mxu0
    %v155 = vadd.f32 0.0, %v154
    %v156 = vpop.f32.mrb[0].mxu0
    %v157 = vpop.f32.mrb[0].mxu0
    %v158 = vadd.f32 0.0, %v157
    %v159 = vpop.f32.mrb[0].mxu0
    %160 = vmatprep.mubr.bf16.mxu0 0
    %161 = vmatmul.mubr.bf16.gmra.mrb[0].mxu0 %v109
    %v162 = vpop.f32.mrb[0].mxu0
    %v163 = vadd.f32 0.0, %v162
    %v164 = vpop.f32.mrb[0].mxu0
    %v165 = vpop.f32.mrb[0].mxu0
    %v166 = vadd.f32 0.0, %v165
    %v167 = vpop.f32.mrb[0].mxu0
    %168 = vmatprep.mubr.bf16.mxu0 0
    %169 = vmatmul.mubr.bf16.gmra.mrb[0].mxu0 %v112
    %v170 = vpop.f32.mrb[0].mxu0
    %v171 = vadd.f32 0.0, %v170
    %v172 = vpop.f32.mrb[0].mxu0
    %v173 = vpop.f32.mrb[0].mxu0
    %v174 = vadd.f32 0.0, %v173
    %v175 = vpop.f32.mrb[0].mxu0
    %176 = vmatprep.mubr.bf16.mxu0 0
    %177 = vmatmul.mubr.bf16.gmra.mrb[0].mxu0 %v115
    %v178 = vpop.f32.mrb[0].mxu0
    %v179 = vadd.f32 0.0, %v178
    %v180 = vpop.f32.mrb[0].mxu0
    %v181 = vpop.f32.mrb[0].mxu0
    %v182 = vadd.f32 0.0, %v181
    %v183 = vpop.f32.mrb[0].mxu0
    %184 = vmatprep.mubr.bf16.mxu0 0
    %185 = vmatmul.mubr.bf16.gmra.mrb[0].mxu0 %v118
    %v186 = vpop.f32.mrb[0].mxu0
    %v187 = vadd.f32 0.0, %v186
    %v188 = vpop.f32.mrb[0].mxu0
    %v189 = vpop.f32.mrb[0].mxu0
    %v190 = vpop.f32.mrb[0].mxu0
    %191 = vdwg.mxu0
    %v196 = vunpack.c.l.b16 %v69
    %v197 = vunpack.c.l.b16 %v70
    %v198 = vunpack.c.l.b16 %v71
    %v199 = vunpack.c.l.b16 %v72
    %v200 = vpack.c.b16 %v197, %v196
    %v201 = vpack.c.b16 %v199, %v198
    %v205 = vsel %vm104, %v62, 0
    %v208 = vsel %vm104, %v63, 0
    %v211 = vsel %vm104, %v64, 0
    %v214 = vsel %vm104, %v65, 0
    %v217 = vsel %vm104, %v66, 0
    %219 = vmatprep.subr.bf16.mxu0 0
    %220 = vmatpush1.bf16.msra.mxu0 %v200
    %221 = vmatprep.subr.bf16.mxu0 0
    %222 = vmatpush1.bf16.msra.mxu0 %v201
    %223 = vmatprep.subr.bf16.mxu0 0
    %224 = vmatpush1.bf16.msra.mxu0 0
    %225 = vmatprep.subr.bf16.mxu0 0
    %226 = vmatpush1.bf16.msra.mxu0 0
    %227 = vmatprep.subr.bf16.mxu0 0
    %228 = vmatpush1.bf16.msra.mxu0 0
    %229 = vmatprep.subr.bf16.mxu0 0
    %230 = vmatpush1.bf16.msra.mxu0 0
    %231 = vmatprep.subr.bf16.mxu0 0
    %232 = vmatpush1.bf16.msra.mxu0 0
    %233 = vmatprep.subr.bf16.mxu0 0
    %234 = vmatpush1.bf16.msra.mxu0 0
    %235 = vmatprep.subr.bf16.mxu0 0
    %236 = vmatpush1.bf16.msra.mxu0 0
    %237 = vmatprep.subr.bf16.mxu0 0
    %238 = vmatpush1.bf16.msra.mxu0 0
    %239 = vmatprep.subr.bf16.mxu0 0
    %240 = vmatpush1.bf16.msra.mxu0 0
    %241 = vmatprep.subr.bf16.mxu0 0
    %242 = vmatpush1.bf16.msra.mxu0 0
    %243 = vmatprep.subr.bf16.mxu0 0
    %244 = vmatpush1.bf16.msra.mxu0 0
    %245 = vmatprep.subr.bf16.mxu0 0
    %246 = vmatpush1.bf16.msra.mxu0 0
    %247 = vmatprep.subr.bf16.mxu0 0
    %248 = vmatpush1.bf16.msra.mxu0 0
    %249 = vmatprep.subr.bf16.mxu0 0
    %250 = vmatpush1.bf16.msra.mxu0 0
    %251 = vmatprep.mubr.bf16.mxu0 0
    %252 = vmatmul.mubr.bf16.gmra.mrb[0].mxu0 %v205
    %v253 = vpop.f32.mrb[0].mxu0
    %v254 = vadd.f32 %v155, %v253
    %v255 = vpop.f32.mrb[0].mxu0
    %v256 = vpop.f32.mrb[0].mxu0
    %v257 = vadd.f32 %v158, %v256
    %v258 = vpop.f32.mrb[0].mxu0
    %259 = vmatprep.mubr.bf16.mxu0 0
    %260 = vmatmul.mubr.bf16.gmra.mrb[0].mxu0 %v208
    %v261 = vpop.f32.mrb[0].mxu0
    %v262 = vadd.f32 %v163, %v261
    %v263 = vpop.f32.mrb[0].mxu0
    %v264 = vpop.f32.mrb[0].mxu0
    %v265 = vadd.f32 %v166, %v264
    %v266 = vpop.f32.mrb[0].mxu0
    %267 = vmatprep.mubr.bf16.mxu0 0
    %268 = vmatmul.mubr.bf16.gmra.mrb[0].mxu0 %v211
    %v269 = vpop.f32.mrb[0].mxu0
    %v270 = vadd.f32 %v171, %v269
    %v271 = vpop.f32.mrb[0].mxu0
    %v272 = vpop.f32.mrb[0].mxu0
    %v273 = vadd.f32 %v174, %v272
    %v274 = vpop.f32.mrb[0].mxu0
    %275 = vmatprep.mubr.bf16.mxu0 0
    %276 = vmatmul.mubr.bf16.gmra.mrb[0].mxu0 %v214
    %v277 = vpop.f32.mrb[0].mxu0
    %v278 = vadd.f32 %v179, %v277
    %v279 = vpop.f32.mrb[0].mxu0
    %v280 = vpop.f32.mrb[0].mxu0
    %v281 = vadd.f32 %v182, %v280
    %v282 = vpop.f32.mrb[0].mxu0
    %283 = vmatprep.mubr.bf16.mxu0 0
    %284 = vmatmul.mubr.bf16.gmra.mrb[0].mxu0 %v217
    %v285 = vpop.f32.mrb[0].mxu0
    %v286 = vadd.f32 %v187, %v285
    %v287 = vpop.f32.mrb[0].mxu0
    %v288 = vpop.f32.mrb[0].mxu0
    %v289 = vpop.f32.mrb[0].mxu0
    %290 = vdwg.mxu0
    %v291 = vld [vmem:[%s1 + $0x20] sm:$0xf]
    %v292 = vld [vmem:[%s1 + $0x24] sm:$0xf]
    %v293 = vld [vmem:[%s1 + $0x28] sm:$0xf]
    %v294 = vld [vmem:[%s1 + $0x2c] sm:$0xf]
    %v299 = vunpack.c.l.b16 %v291
    %v300 = vunpack.c.l.b16 %v292
    %v301 = vunpack.c.l.b16 %v293
    %v302 = vunpack.c.l.b16 %v294
    %v303 = vpack.c.b16 %v300, %v299
    %v304 = vpack.c.b16 %v302, %v301
    %v308 = vsel %vm104, %v67, 0
    %310 = vmatprep.subr.bf16.mxu0 0
    %311 = vmatpush1.bf16.msra.mxu0 %v303
    %312 = vmatprep.subr.bf16.mxu0 0
    %313 = vmatpush1.bf16.msra.mxu0 %v304
    %314 = vmatprep.subr.bf16.mxu0 0
    %315 = vmatpush1.bf16.msra.mxu0 0
    %316 = vmatprep.subr.bf16.mxu0 0
    %317 = vmatpush1.bf16.msra.mxu0 0
    %318 = vmatprep.subr.bf16.mxu0 0
    %319 = vmatpush1.bf16.msra.mxu0 0
    %320 = vmatprep.subr.bf16.mxu0 0
    %321 = vmatpush1.bf16.msra.mxu0 0
    %322 = vmatprep.subr.bf16.mxu0 0
    %323 = vmatpush1.bf16.msra.mxu0 0
    %324 = vmatprep.subr.bf16.mxu0 0
    %325 = vmatpush1.bf16.msra.mxu0 0
    %326 = vmatprep.subr.bf16.mxu0 0
    %327 = vmatpush1.bf16.msra.mxu0 0
    %328 = vmatprep.subr.bf16.mxu0 0
    %329 = vmatpush1.bf16.msra.mxu0 0
    %330 = vmatprep.subr.bf16.mxu0 0
    %331 = vmatpush1.bf16.msra.mxu0 0
    %332 = vmatprep.subr.bf16.mxu0 0
    %333 = vmatpush1.bf16.msra.mxu0 0
    %334 = vmatprep.subr.bf16.mxu0 0
    %335 = vmatpush1.bf16.msra.mxu0 0
    %336 = vmatprep.subr.bf16.mxu0 0
    %337 = vmatpush1.bf16.msra.mxu0 0
    %338 = vmatprep.subr.bf16.mxu0 0
    %339 = vmatpush1.bf16.msra.mxu0 0
    %340 = vmatprep.subr.bf16.mxu0 0
    %341 = vmatpush1.bf16.msra.mxu0 0
    %342 = vmatprep.mubr.bf16.mxu0 0
    %343 = vmatmul.mubr.bf16.gmra.mrb[0].mxu0 %v208
    %v344 = vpop.f32.mrb[0].mxu0
    %v345 = vadd.f32 0.0, %v344
    %v346 = vpop.f32.mrb[0].mxu0
    %v347 = vpop.f32.mrb[0].mxu0
    %v348 = vadd.f32 0.0, %v347
    %v349 = vpop.f32.mrb[0].mxu0
    %350 = vmatprep.mubr.bf16.mxu0 0
    %351 = vmatmul.mubr.bf16.gmra.mrb[0].mxu0 %v211
    %v352 = vpop.f32.mrb[0].mxu0
    %v353 = vadd.f32 0.0, %v352
    %v354 = vpop.f32.mrb[0].mxu0
    %v355 = vpop.f32.mrb[0].mxu0
    %v356 = vadd.f32 0.0, %v355
    %v357 = vpop.f32.mrb[0].mxu0
    %358 = vmatprep.mubr.bf16.mxu0 0
    %359 = vmatmul.mubr.bf16.gmra.mrb[0].mxu0 %v214
    %v360 = vpop.f32.mrb[0].mxu0
    %v361 = vadd.f32 0.0, %v360
    %v362 = vpop.f32.mrb[0].mxu0
    %v363 = vpop.f32.mrb[0].mxu0
    %v364 = vadd.f32 0.0, %v363
    %v365 = vpop.f32.mrb[0].mxu0
    %366 = vmatprep.mubr.bf16.mxu0 0
    %367 = vmatmul.mubr.bf16.gmra.mrb[0].mxu0 %v217
    %v368 = vpop.f32.mrb[0].mxu0
    %v369 = vadd.f32 0.0, %v368
    %v370 = vpop.f32.mrb[0].mxu0
    %v371 = vpop.f32.mrb[0].mxu0
    %v372 = vadd.f32 0.0, %v371
    %v373 = vpop.f32.mrb[0].mxu0
    %374 = vmatprep.mubr.bf16.mxu0 0
    %375 = vmatmul.mubr.bf16.gmra.mrb[0].mxu0 %v308
    %v376 = vpop.f32.mrb[0].mxu0
    %v377 = vadd.f32 0.0, %v376
    %v378 = vpop.f32.mrb[0].mxu0
    %v379 = vpop.f32.mrb[0].mxu0
    %v380 = vpop.f32.mrb[0].mxu0
    %381 = vdwg.mxu0
    %v382 = vadd.f32 %v254, %v345
    %v383 = vadd.f32 %v257, %v348
    %v384 = vadd.f32 %v262, %v353
    %v385 = vadd.f32 %v265, %v356
    %v386 = vadd.f32 %v270, %v361
    %v387 = vadd.f32 %v273, %v364
    %v388 = vadd.f32 %v278, %v369
    %v389 = vadd.f32 %v281, %v372
    %v390 = vadd.f32 %v286, %v377
    %v391 = vld [vmem:[%s1 + $0x30] sm:$0xf]
    %v392 = vld [vmem:[%s1 + $0x34] sm:$0xf]
    %v393 = vld [vmem:[%s1 + $0x38] sm:$0xf]
    %v394 = vld [vmem:[%s1 + $0x3c] sm:$0xf]
    %v396 = vrot.slane %v67, 4
    %v397 = vsel %vm82, %v90, %v396
    %v402 = vunpack.c.l.b16 %v391
    %v403 = vunpack.c.l.b16 %v392
    %v404 = vunpack.c.l.b16 %v393
    %v405 = vunpack.c.l.b16 %v394
    %v406 = vpack.c.b16 %v403, %v402
    %v407 = vpack.c.b16 %v405, %v404
    %v411 = vsel %vm104, %v397, 0
    %v414 = vsel %vm104, %v396, 0
    %416 = vmatprep.subr.bf16.mxu0 0
    %417 = vmatpush1.bf16.msra.mxu0 %v406
    %418 = vmatprep.subr.bf16.mxu0 0
    %419 = vmatpush1.bf16.msra.mxu0 %v407
    %420 = vmatprep.subr.bf16.mxu0 0
    %421 = vmatpush1.bf16.msra.mxu0 0
    %422 = vmatprep.subr.bf16.mxu0 0
    %423 = vmatpush1.bf16.msra.mxu0 0
    %424 = vmatprep.subr.bf16.mxu0 0
    %425 = vmatpush1.bf16.msra.mxu0 0
    %426 = vmatprep.subr.bf16.mxu0 0
    %427 = vmatpush1.bf16.msra.mxu0 0
    %428 = vmatprep.subr.bf16.mxu0 0
    %429 = vmatpush1.bf16.msra.mxu0 0
    %430 = vmatprep.subr.bf16.mxu0 0
    %431 = vmatpush1.bf16.msra.mxu0 0
    %432 = vmatprep.subr.bf16.mxu0 0
    %433 = vmatpush1.bf16.msra.mxu0 0
    %434 = vmatprep.subr.bf16.mxu0 0
    %435 = vmatpush1.bf16.msra.mxu0 0
    %436 = vmatprep.subr.bf16.mxu0 0
    %437 = vmatpush1.bf16.msra.mxu0 0
    %438 = vmatprep.subr.bf16.mxu0 0
    %439 = vmatpush1.bf16.msra.mxu0 0
    %440 = vmatprep.subr.bf16.mxu0 0
    %441 = vmatpush1.bf16.msra.mxu0 0
    %442 = vmatprep.subr.bf16.mxu0 0
    %443 = vmatpush1.bf16.msra.mxu0 0
    %444 = vmatprep.subr.bf16.mxu0 0
    %445 = vmatpush1.bf16.msra.mxu0 0
    %446 = vmatprep.subr.bf16.mxu0 0
    %447 = vmatpush1.bf16.msra.mxu0 0
    %448 = vmatprep.mubr.bf16.mxu0 0
    %449 = vmatmul.mubr.bf16.gmra.mrb[0].mxu0 %v109
    %v450 = vpop.f32.mrb[0].mxu0
    %v451 = vadd.f32 0.0, %v450
    %v452 = vpop.f32.mrb[0].mxu0
    %v453 = vpop.f32.mrb[0].mxu0
    %v454 = vadd.f32 0.0, %v453
    %v455 = vpop.f32.mrb[0].mxu0
    %456 = vmatprep.mubr.bf16.mxu0 0
    %457 = vmatmul.mubr.bf16.gmra.mrb[0].mxu0 %v112
    %v458 = vpop.f32.mrb[0].mxu0
    %v459 = vadd.f32 0.0, %v458
    %v460 = vpop.f32.mrb[0].mxu0
    %v461 = vpop.f32.mrb[0].mxu0
    %v462 = vadd.f32 0.0, %v461
    %v463 = vpop.f32.mrb[0].mxu0
    %464 = vmatprep.mubr.bf16.mxu0 0
    %465 = vmatmul.mubr.bf16.gmra.mrb[0].mxu0 %v115
    %v466 = vpop.f32.mrb[0].mxu0
    %v467 = vadd.f32 0.0, %v466
    %v468 = vpop.f32.mrb[0].mxu0
    %v469 = vpop.f32.mrb[0].mxu0
    %v470 = vadd.f32 0.0, %v469
    %v471 = vpop.f32.mrb[0].mxu0
    %472 = vmatprep.mubr.bf16.mxu0 0
    %473 = vmatmul.mubr.bf16.gmra.mrb[0].mxu0 %v411
    %v474 = vpop.f32.mrb[0].mxu0
    %v475 = vadd.f32 0.0, %v474
    %v476 = vpop.f32.mrb[0].mxu0
    %v477 = vpop.f32.mrb[0].mxu0
    %v478 = vadd.f32 0.0, %v477
    %v479 = vpop.f32.mrb[0].mxu0
    %480 = vmatprep.mubr.bf16.mxu0 0
    %481 = vmatmul.mubr.bf16.gmra.mrb[0].mxu0 %v414
    %v482 = vpop.f32.mrb[0].mxu0
    %v483 = vadd.f32 0.0, %v482
    %v484 = vpop.f32.mrb[0].mxu0
    %v485 = vpop.f32.mrb[0].mxu0
    %v486 = vpop.f32.mrb[0].mxu0
    %487 = vdwg.mxu0
    %v488 = vadd.f32 %v382, %v451
    %v489 = vadd.f32 %v383, %v454
    %v490 = vadd.f32 %v384, %v459
    %v491 = vadd.f32 %v385, %v462
    %v492 = vadd.f32 %v386, %v467
    %v493 = vadd.f32 %v387, %v470
    %v494 = vadd.f32 %v388, %v475
    %v495 = vadd.f32 %v389, %v478
    %v496 = vadd.f32 %v390, %v483
    %v497 = vld [vmem:[%s1 + $0x40] sm:$0xf]
    %v498 = vld [vmem:[%s1 + $0x44] sm:$0xf]
    %v499 = vld [vmem:[%s1 + $0x48] sm:$0xf]
    %v500 = vld [vmem:[%s1 + $0x4c] sm:$0xf]
    %v505 = vunpack.c.l.b16 %v497
    %v506 = vunpack.c.l.b16 %v498
    %v507 = vunpack.c.l.b16 %v499
    %v508 = vunpack.c.l.b16 %v500
    %v509 = vpack.c.b16 %v506, %v505
    %v510 = vpack.c.b16 %v508, %v507
    %v514 = vsel %vm104, %v68, 0
    %516 = vmatprep.subr.bf16.mxu0 0
    %517 = vmatpush1.bf16.msra.mxu0 %v509
    %518 = vmatprep.subr.bf16.mxu0 0
    %519 = vmatpush1.bf16.msra.mxu0 %v510
    %520 = vmatprep.subr.bf16.mxu0 0
    %521 = vmatpush1.bf16.msra.mxu0 0
    %522 = vmatprep.subr.bf16.mxu0 0
    %523 = vmatpush1.bf16.msra.mxu0 0
    %524 = vmatprep.subr.bf16.mxu0 0
    %525 = vmatpush1.bf16.msra.mxu0 0
    %526 = vmatprep.subr.bf16.mxu0 0
    %527 = vmatpush1.bf16.msra.mxu0 0
    %528 = vmatprep.subr.bf16.mxu0 0
    %529 = vmatpush1.bf16.msra.mxu0 0
    %530 = vmatprep.subr.bf16.mxu0 0
    %531 = vmatpush1.bf16.msra.mxu0 0
    %532 = vmatprep.subr.bf16.mxu0 0
    %533 = vmatpush1.bf16.msra.mxu0 0
    %534 = vmatprep.subr.bf16.mxu0 0
    %535 = vmatpush1.bf16.msra.mxu0 0
    %536 = vmatprep.subr.bf16.mxu0 0
    %537 = vmatpush1.bf16.msra.mxu0 0
    %538 = vmatprep.subr.bf16.mxu0 0
    %539 = vmatpush1.bf16.msra.mxu0 0
    %540 = vmatprep.subr.bf16.mxu0 0
    %541 = vmatpush1.bf16.msra.mxu0 0
    %542 = vmatprep.subr.bf16.mxu0 0
    %543 = vmatpush1.bf16.msra.mxu0 0
    %544 = vmatprep.subr.bf16.mxu0 0
    %545 = vmatpush1.bf16.msra.mxu0 0
    %546 = vmatprep.subr.bf16.mxu0 0
    %547 = vmatpush1.bf16.msra.mxu0 0
    %548 = vmatprep.mubr.bf16.mxu0 0
    %549 = vmatmul.mubr.bf16.gmra.mrb[0].mxu0 %v211
    %v550 = vpop.f32.mrb[0].mxu0
    %v551 = vadd.f32 0.0, %v550
    %v552 = vpop.f32.mrb[0].mxu0
    %v553 = vpop.f32.mrb[0].mxu0
    %v554 = vadd.f32 0.0, %v553
    %v555 = vpop.f32.mrb[0].mxu0
    %556 = vmatprep.mubr.bf16.mxu0 0
    %557 = vmatmul.mubr.bf16.gmra.mrb[0].mxu0 %v214
    %v558 = vpop.f32.mrb[0].mxu0
    %v559 = vadd.f32 0.0, %v558
    %v560 = vpop.f32.mrb[0].mxu0
    %v561 = vpop.f32.mrb[0].mxu0
    %v562 = vadd.f32 0.0, %v561
    %v563 = vpop.f32.mrb[0].mxu0
    %564 = vmatprep.mubr.bf16.mxu0 0
    %565 = vmatmul.mubr.bf16.gmra.mrb[0].mxu0 %v217
    %v566 = vpop.f32.mrb[0].mxu0
    %v567 = vadd.f32 0.0, %v566
    %v568 = vpop.f32.mrb[0].mxu0
    %v569 = vpop.f32.mrb[0].mxu0
    %v570 = vadd.f32 0.0, %v569
    %v571 = vpop.f32.mrb[0].mxu0
    %572 = vmatprep.mubr.bf16.mxu0 0
    %573 = vmatmul.mubr.bf16.gmra.mrb[0].mxu0 %v308
    %v574 = vpop.f32.mrb[0].mxu0
    %v575 = vadd.f32 0.0, %v574
    %v576 = vpop.f32.mrb[0].mxu0
    %v577 = vpop.f32.mrb[0].mxu0
    %v578 = vadd.f32 0.0, %v577
    %v579 = vpop.f32.mrb[0].mxu0
    %580 = vmatprep.mubr.bf16.mxu0 0
    %581 = vmatmul.mubr.bf16.gmra.mrb[0].mxu0 %v514
    %v582 = vpop.f32.mrb[0].mxu0
    %v583 = vadd.f32 0.0, %v582
    %v584 = vpop.f32.mrb[0].mxu0
    %v585 = vpop.f32.mrb[0].mxu0
    %v586 = vpop.f32.mrb[0].mxu0
    %587 = vdwg.mxu0
    %v588 = vadd.f32 %v488, %v551
    %v589 = vadd.f32 %v489, %v554
    %v590 = vadd.f32 %v490, %v559
    %v591 = vadd.f32 %v491, %v562
    %v592 = vadd.f32 %v492, %v567
    %v593 = vadd.f32 %v493, %v570
    %v594 = vadd.f32 %v494, %v575
    %v595 = vadd.f32 %v495, %v578
    %v596 = vadd.f32 %v496, %v583
    %v597 = vld [vmem:[%s2] sm:$0x1]
    %v599 = vlaneseq
    %v600 = vshrl.u32 %v599, 7
    %v601 = vsub.s32 0, %v600
    %v602 = vrot.slane %v597, %v601
    %v604 = vadd.f32 %v588, %v602
    %v605 = vadd.f32 %v589, %v602
    %v606 = vadd.f32 %v590, %v602
    %v607 = vadd.f32 %v591, %v602
    %v608 = vadd.f32 %v592, %v602
    %v609 = vadd.f32 %v593, %v602
    %v610 = vadd.f32 %v594, %v602
    %v611 = vadd.f32 %v595, %v602
    %v612 = vadd.f32 %v596, %v602
    %v613 = vmax.f32 %v604, 0.0
    %v614 = vmax.f32 %v605, 0.0
    %v615 = vmax.f32 %v606, 0.0
    %v616 = vmax.f32 %v607, 0.0
    %v617 = vmax.f32 %v608, 0.0
    %v618 = vmax.f32 %v609, 0.0
    %v619 = vmax.f32 %v610, 0.0
    %v620 = vmax.f32 %v611, 0.0
    %v621 = vmax.f32 %v612, 0.0
    %v622 = vlaneseq
    %v623 = vand.u32 %v622, 127
    %vm624 = vcmp.ge.s32.totalorder %v623, 16
    %vm625 = vcmp.lt.s32.totalorder %v623, 32
    %vm626 = vmand %vm624, %vm625
    %v627 = vmax.f32 %v613, 0.0
    %v628 = vmax.f32 %v627, %v614
    %v629 = vmax.f32 %v628, %v615
    %v630 = vmax.f32 %v629, %v616
    %v631 = vmax.f32 %v630, %v617
    %v632 = vmax.f32 %v631, %v618
    %v633 = vmax.f32 %v632, %v619
    %v634 = vmax.f32 %v633, %v620
    %v635 = vsel %vm626, %v621, 0.0
    %v636 = vmax.f32 %v634, %v635
    %v637 = vld [vmem:[%s3] sm:$0xff]
    %v638 = vld [vmem:[%s3 + $0x8] sm:$0xff]
    %v639 = vld [vmem:[%s3 + $0x10] sm:$0xff]
    %v640 = vld [vmem:[%s3 + $0x18] sm:$0xff]
    %v641 = vpack.c.bf16 %v57, %v58
    %v642 = vpack.c.bf16 %v55, %v56
    %v643 = vpack.c.bf16 %v53, %v54
    %v644 = vpack.c.bf16 %v51, %v52
    %v645 = vld [vmem:[%s4] sm:$0xff]
    %v646 = vld [vmem:[%s4 + $0x8] sm:$0xff]
    %v647 = vld [vmem:[%s4 + $0x10] sm:$0xff]
    %v648 = vld [vmem:[%s4 + $0x18] sm:$0xff]
    %v653 = vunpack.c.l.b16 %v645
    %v654 = vunpack.c.h.b16 %v645
    %v655 = vunpack.c.l.b16 %v646
    %v656 = vunpack.c.h.b16 %v646
    %v657 = vunpack.c.l.b16 %v647
    %v658 = vunpack.c.h.b16 %v647
    %v659 = vunpack.c.l.b16 %v648
    %v660 = vunpack.c.h.b16 %v648
    %v661 = vpack.c.b16 %v655, %v653
    %v662 = vpack.c.b16 %v656, %v654
    %v663 = vpack.c.b16 %v659, %v657
    %v664 = vpack.c.b16 %v660, %v658
    %v670 = vsel %vm104, %v641, 0
    %v673 = vsel %vm104, %v642, 0
    %v676 = vsel %vm104, %v643, 0
    %v679 = vsel %vm104, %v644, 0
    %681 = vmatprep.subr.bf16.mxu0 %v662
    %682 = vmatpush1.bf16.msra.mxu0 %v661
    %683 = vmatprep.subr.bf16.mxu0 %v664
    %684 = vmatpush1.bf16.msra.mxu0 %v663
    %685 = vmatprep.subr.bf16.mxu0 0
    %686 = vmatpush1.bf16.msra.mxu0 0
    %687 = vmatprep.subr.bf16.mxu0 0
    %688 = vmatpush1.bf16.msra.mxu0 0
    %689 = vmatprep.subr.bf16.mxu0 0
    %690 = vmatpush1.bf16.msra.mxu0 0
    %691 = vmatprep.subr.bf16.mxu0 0
    %692 = vmatpush1.bf16.msra.mxu0 0
    %693 = vmatprep.subr.bf16.mxu0 0
    %694 = vmatpush1.bf16.msra.mxu0 0
    %695 = vmatprep.subr.bf16.mxu0 0
    %696 = vmatpush1.bf16.msra.mxu0 0
    %697 = vmatprep.subr.bf16.mxu0 0
    %698 = vmatpush1.bf16.msra.mxu0 0
    %699 = vmatprep.subr.bf16.mxu0 0
    %700 = vmatpush1.bf16.msra.mxu0 0
    %701 = vmatprep.subr.bf16.mxu0 0
    %702 = vmatpush1.bf16.msra.mxu0 0
    %703 = vmatprep.subr.bf16.mxu0 0
    %704 = vmatpush1.bf16.msra.mxu0 0
    %705 = vmatprep.subr.bf16.mxu0 0
    %706 = vmatpush1.bf16.msra.mxu0 0
    %707 = vmatprep.subr.bf16.mxu0 0
    %708 = vmatpush1.bf16.msra.mxu0 0
    %709 = vmatprep.subr.bf16.mxu0 0
    %710 = vmatpush1.bf16.msra.mxu0 0
    %711 = vmatprep.subr.bf16.mxu0 0
    %712 = vmatpush1.bf16.msra.mxu0 0
    %713 = vmatprep.mubr.bf16.mxu0 0
    %714 = vmatmul.mubr.bf16.gmra.mrb[0].mxu0 %v670
    %v715 = vpop.f32.mrb[0].mxu0
    %v716 = vadd.f32 0.0, %v715
    %v717 = vpop.f32.mrb[0].mxu0
    %v718 = vadd.f32 0.0, %v717
    %v719 = vpop.f32.mrb[0].mxu0
    %v720 = vadd.f32 0.0, %v719
    %v721 = vpop.f32.mrb[0].mxu0
    %v722 = vadd.f32 0.0, %v721
    %723 = vmatprep.mubr.bf16.mxu0 0
    %724 = vmatmul.mubr.bf16.gmra.mrb[0].mxu0 %v673
    %v725 = vpop.f32.mrb[0].mxu0
    %v726 = vadd.f32 0.0, %v725
    %v727 = vpop.f32.mrb[0].mxu0
    %v728 = vadd.f32 0.0, %v727
    %v729 = vpop.f32.mrb[0].mxu0
    %v730 = vadd.f32 0.0, %v729
    %v731 = vpop.f32.mrb[0].mxu0
    %v732 = vadd.f32 0.0, %v731
    %733 = vmatprep.mubr.bf16.mxu0 0
    %734 = vmatmul.mubr.bf16.gmra.mrb[0].mxu0 %v676
    %v735 = vpop.f32.mrb[0].mxu0
    %v736 = vadd.f32 0.0, %v735
    %v737 = vpop.f32.mrb[0].mxu0
    %v738 = vadd.f32 0.0, %v737
    %v739 = vpop.f32.mrb[0].mxu0
    %v740 = vadd.f32 0.0, %v739
    %v741 = vpop.f32.mrb[0].mxu0
    %v742 = vadd.f32 0.0, %v741
    %743 = vmatprep.mubr.bf16.mxu0 0
    %744 = vmatmul.mubr.bf16.gmra.mrb[0].mxu0 %v679
    %v745 = vpop.f32.mrb[0].mxu0
    %v746 = vadd.f32 0.0, %v745
    %v747 = vpop.f32.mrb[0].mxu0
    %v748 = vadd.f32 0.0, %v747
    %v749 = vpop.f32.mrb[0].mxu0
    %v750 = vadd.f32 0.0, %v749
    %v751 = vpop.f32.mrb[0].mxu0
    %v752 = vadd.f32 0.0, %v751
    %753 = vdwg.mxu0
    %v758 = vunpack.c.l.b16 %v637
    %v759 = vunpack.c.h.b16 %v637
    %v760 = vunpack.c.l.b16 %v638
    %v761 = vunpack.c.h.b16 %v638
    %v762 = vunpack.c.l.b16 %v639
    %v763 = vunpack.c.h.b16 %v639
    %v764 = vunpack.c.l.b16 %v640
    %v765 = vunpack.c.h.b16 %v640
    %v766 = vpack.c.b16 %v760, %v758
    %v767 = vpack.c.b16 %v761, %v759
    %v768 = vpack.c.b16 %v764, %v762
    %v769 = vpack.c.b16 %v765, %v763
    %774 = vmatprep.subr.bf16.mxu0 %v767
    %775 = vmatpush1.bf16.msra.mxu0 %v766
    %776 = vmatprep.subr.bf16.mxu0 %v769
    %777 = vmatpush1.bf16.msra.mxu0 %v768
    %778 = vmatprep.subr.bf16.mxu0 0
    %779 = vmatpush1.bf16.msra.mxu0 0
    %780 = vmatprep.subr.bf16.mxu0 0
    %781 = vmatpush1.bf16.msra.mxu0 0
    %782 = vmatprep.subr.bf16.mxu0 0
    %783 = vmatpush1.bf16.msra.mxu0 0
    %784 = vmatprep.subr.bf16.mxu0 0
    %785 = vmatpush1.bf16.msra.mxu0 0
    %786 = vmatprep.subr.bf16.mxu0 0
    %787 = vmatpush1.bf16.msra.mxu0 0
    %788 = vmatprep.subr.bf16.mxu0 0
    %789 = vmatpush1.bf16.msra.mxu0 0
    %790 = vmatprep.subr.bf16.mxu0 0
    %791 = vmatpush1.bf16.msra.mxu0 0
    %792 = vmatprep.subr.bf16.mxu0 0
    %793 = vmatpush1.bf16.msra.mxu0 0
    %794 = vmatprep.subr.bf16.mxu0 0
    %795 = vmatpush1.bf16.msra.mxu0 0
    %796 = vmatprep.subr.bf16.mxu0 0
    %797 = vmatpush1.bf16.msra.mxu0 0
    %798 = vmatprep.subr.bf16.mxu0 0
    %799 = vmatpush1.bf16.msra.mxu0 0
    %800 = vmatprep.subr.bf16.mxu0 0
    %801 = vmatpush1.bf16.msra.mxu0 0
    %802 = vmatprep.subr.bf16.mxu0 0
    %803 = vmatpush1.bf16.msra.mxu0 0
    %804 = vmatprep.subr.bf16.mxu0 0
    %805 = vmatpush1.bf16.msra.mxu0 0
    %806 = vmatprep.mubr.bf16.mxu0 0
    %807 = vmatmul.mubr.bf16.gmra.mrb[0].mxu0 %v208
    %v808 = vpop.f32.mrb[0].mxu0
    %v809 = vadd.f32 %v716, %v808
    %v810 = vpop.f32.mrb[0].mxu0
    %v811 = vadd.f32 %v718, %v810
    %v812 = vpop.f32.mrb[0].mxu0
    %v813 = vadd.f32 %v720, %v812
    %v814 = vpop.f32.mrb[0].mxu0
    %v815 = vadd.f32 %v722, %v814
    %816 = vmatprep.mubr.bf16.mxu0 0
    %817 = vmatmul.mubr.bf16.gmra.mrb[0].mxu0 %v211
    %v818 = vpop.f32.mrb[0].mxu0
    %v819 = vadd.f32 %v726, %v818
    %v820 = vpop.f32.mrb[0].mxu0
    %v821 = vadd.f32 %v728, %v820
    %v822 = vpop.f32.mrb[0].mxu0
    %v823 = vadd.f32 %v730, %v822
    %v824 = vpop.f32.mrb[0].mxu0
    %v825 = vadd.f32 %v732, %v824
    %826 = vmatprep.mubr.bf16.mxu0 0
    %827 = vmatmul.mubr.bf16.gmra.mrb[0].mxu0 %v214
    %v828 = vpop.f32.mrb[0].mxu0
    %v829 = vadd.f32 %v736, %v828
    %v830 = vpop.f32.mrb[0].mxu0
    %v831 = vadd.f32 %v738, %v830
    %v832 = vpop.f32.mrb[0].mxu0
    %v833 = vadd.f32 %v740, %v832
    %v834 = vpop.f32.mrb[0].mxu0
    %v835 = vadd.f32 %v742, %v834
    %836 = vmatprep.mubr.bf16.mxu0 0
    %837 = vmatmul.mubr.bf16.gmra.mrb[0].mxu0 %v217
    %v838 = vpop.f32.mrb[0].mxu0
    %v839 = vadd.f32 %v746, %v838
    %v840 = vpop.f32.mrb[0].mxu0
    %v841 = vadd.f32 %v748, %v840
    %v842 = vpop.f32.mrb[0].mxu0
    %v843 = vadd.f32 %v750, %v842
    %v844 = vpop.f32.mrb[0].mxu0
    %v845 = vadd.f32 %v752, %v844
    %846 = vdwg.mxu0
    %v847 = vld [vmem:[%s5] sm:$0x3]
    %v849 = vlaneseq
    %v850 = vshrl.u32 %v849, 7
    %v851 = vsub.s32 0, %v850
    %v852 = vrot.slane %v847, %v851
    %v853 = vlaneseq
    %v854 = vshrl.u32 %v853, 7
    %v855 = vsub.s32 1, %v854
    %v856 = vrot.slane %v847, %v855
    %v859 = vadd.f32 %v809, %v852
    %v860 = vadd.f32 %v811, %v856
    %v861 = vadd.f32 %v813, %v852
    %v862 = vadd.f32 %v815, %v856
    %v863 = vadd.f32 %v819, %v852
    %v864 = vadd.f32 %v821, %v856
    %v865 = vadd.f32 %v823, %v852
    %v866 = vadd.f32 %v825, %v856
    %v867 = vadd.f32 %v829, %v852
    %v868 = vadd.f32 %v831, %v856
    %v869 = vadd.f32 %v833, %v852
    %v870 = vadd.f32 %v835, %v856
    %v871 = vadd.f32 %v839, %v852
    %v872 = vadd.f32 %v841, %v856
    %v873 = vadd.f32 %v843, %v852
    %v874 = vadd.f32 %v845, %v856
    %v875 = vld [vmem:[%s6] sm:$0xff]
    %v876 = vld [vmem:[%s6 + $0x8] sm:$0xff]
    %v877 = vld [vmem:[%s6 + $0x10] sm:$0xff]
    %v878 = vld [vmem:[%s6 + $0x18] sm:$0xff]
    %v879 = vld [vmem:[%s6 + $0x20] sm:$0xff]
    %v880 = vld [vmem:[%s6 + $0x28] sm:$0xff]
    %v881 = vld [vmem:[%s6 + $0x30] sm:$0xff]
    %v882 = vld [vmem:[%s6 + $0x38] sm:$0xff]
    %v883 = vld [vmem:[%s6 + $0x40] sm:$0xff]
    %v884 = vld [vmem:[%s6 + $0x48] sm:$0xff]
    %v885 = vld [vmem:[%s6 + $0x50] sm:$0xff]
    %v886 = vld [vmem:[%s6 + $0x58] sm:$0xff]
    %v887 = vld [vmem:[%s6 + $0x60] sm:$0xff]
    %v888 = vld [vmem:[%s6 + $0x68] sm:$0xff]
    %v889 = vld [vmem:[%s6 + $0x70] sm:$0xff]
    %v890 = vld [vmem:[%s6 + $0x78] sm:$0xff]
    %vm891 = vcmask 523264
    %v893 = vsel %vm891, 0.0, 0
    %895 = vmatprep.subr.mxu0 %v876
    %896 = vmatpush1.msra.mxu0 %v875
    %897 = vmatprep.subr.mxu0 %v878
    %898 = vmatpush1.msra.mxu0 %v877
    %899 = vmatprep.subr.mxu0 %v880
    %900 = vmatpush1.msra.mxu0 %v879
    %901 = vmatprep.subr.mxu0 %v882
    %902 = vmatpush1.msra.mxu0 %v881
    %903 = vmatprep.subr.mxu0 %v884
    %904 = vmatpush1.msra.mxu0 %v883
    %905 = vmatprep.subr.mxu0 %v886
    %906 = vmatpush1.msra.mxu0 %v885
    %907 = vmatprep.subr.mxu0 %v888
    %908 = vmatpush1.msra.mxu0 %v887
    %909 = vmatprep.subr.mxu0 %v890
    %910 = vmatpush1.msra.mxu0 %v889
    %911 = vmatprep.subr.mxu0 0.0
    %912 = vmatpush1.msra.mxu0 0.0
    %913 = vmatprep.subr.mxu0 0.0
    %914 = vmatpush1.msra.mxu0 0.0
    %915 = vmatprep.subr.mxu0 0.0
    %916 = vmatpush1.msra.mxu0 0.0
    %917 = vmatprep.subr.mxu0 0.0
    %918 = vmatpush1.msra.mxu0 0.0
    %919 = vmatprep.subr.mxu0 0.0
    %920 = vmatpush1.msra.mxu0 0.0
    %921 = vmatprep.subr.mxu0 0.0
    %922 = vmatpush1.msra.mxu0 0.0
    %923 = vmatprep.subr.mxu0 0.0
    %924 = vmatpush1.msra.mxu0 0.0
    %925 = vmatprep.subr.mxu0 0.0
    %926 = vmatpush1.msra.mxu0 0.0
    %927 = vmatprep.subr.mxu0 0.0
    %928 = vmatpush1.msra.mxu0 0.0
    %929 = vmatprep.subr.mxu0 0.0
    %930 = vmatpush1.msra.mxu0 0.0
    %931 = vmatprep.subr.mxu0 0.0
    %932 = vmatpush1.msra.mxu0 0.0
    %933 = vmatprep.subr.mxu0 0.0
    %934 = vmatpush1.msra.mxu0 0.0
    %935 = vmatprep.subr.mxu0 0.0
    %936 = vmatpush1.msra.mxu0 0.0
    %937 = vmatprep.subr.mxu0 0.0
    %938 = vmatpush1.msra.mxu0 0.0
    %939 = vmatprep.subr.mxu0 0.0
    %940 = vmatpush1.msra.mxu0 0.0
    %941 = vmatprep.subr.mxu0 0.0
    %942 = vmatpush1.msra.mxu0 0.0
    %943 = vmatprep.subr.mxu0 0.0
    %944 = vmatpush1.msra.mxu0 0.0
    %945 = vmatprep.subr.mxu0 0.0
    %946 = vmatpush1.msra.mxu0 0.0
    %947 = vmatprep.subr.mxu0 0.0
    %948 = vmatpush1.msra.mxu0 0.0
    %949 = vmatprep.subr.mxu0 0.0
    %950 = vmatpush1.msra.mxu0 0.0
    %951 = vmatprep.subr.mxu0 0.0
    %952 = vmatpush1.msra.mxu0 0.0
    %953 = vmatprep.subr.mxu0 0.0
    %954 = vmatpush1.msra.mxu0 0.0
    %955 = vmatprep.subr.mxu0 0.0
    %956 = vmatpush1.msra.mxu0 0.0
    %957 = vmatprep.subr.mxu0 0.0
    %958 = vmatpush1.msra.mxu0 0.0
    %959 = vmatprep.mubr.f32.mxu0 0.0
    %960 = vmatmul.mubr.f32.gmra.mrb[0].mxu0 %v893
    %v961 = vpop.f32.mrb[0].mxu0
    %v962 = vadd.f32 0.0, %v961
    %v963 = vpop.f32.mrb[0].mxu0
    %v964 = vadd.f32 0.0, %v963
    %965 = vdwg.mxu0
    %v966 = vadd.f32 %v859, %v962
    %v967 = vadd.f32 %v860, %v964
    %v968 = vxor.u32 %v966, 2147483648
    %v969 = vxor.u32 %v967, 2147483648
    %v970 = vmul.f32 %v968, 1.442695
    %v971 = vpow.pop %v970
    %v972 = vmul.f32 %v969, 1.442695
    %v973 = vpow.pop %v972
    %v974 = vadd.f32 %v971, 1.0
    %v975 = vadd.f32 %v973, 1.0
    %v976 = vrcp.pop %v974
    %v977 = vmul.f32 1.0, %v976
    %v978 = vrcp.pop %v975
    %v979 = vmul.f32 1.0, %v978
    %v980 = vtanh.pop %v967
    %v981 = vmul.f32 %v977, 0.0
    %983 = vrot.lane.b32.xlu0 %v980, 64
    %v984 = vpop.permute.xlu0 %983
    %v986 = vmul.f32 %v977, %v984
    %988 = vrot.lane.b32.xlu0 %v986, 64
    %v989 = vpop.permute.xlu0 %988
    %v991 = vadd.f32 %v981, %v989
    %v992 = vtanh.pop %v991
    %994 = vrot.lane.b32.xlu0 %v992, 64
    %v995 = vpop.permute.xlu0 %994
    %v997 = vmul.f32 %v979, %v995
    %998 = vst.msk [vmem:[#allocation2] sm:$0xff] %vm104, %v997
    %vm999 = vcmask 523520
    %1000 = vst.msk [vmem:[#allocation2 + $0x38] sm:$0xff] %vm999, %v997
    %v1002 = vsel %vm891, %v997, 0
    %1004 = vmatprep.subr.mxu0 %v876
    %1005 = vmatpush1.msra.mxu0 %v875
    %1006 = vmatprep.subr.mxu0 %v878
    %1007 = vmatpush1.msra.mxu0 %v877
    %1008 = vmatprep.subr.mxu0 %v880
    %1009 = vmatpush1.msra.mxu0 %v879
    %1010 = vmatprep.subr.mxu0 %v882
    %1011 = vmatpush1.msra.mxu0 %v881
    %1012 = vmatprep.subr.mxu0 %v884
    %1013 = vmatpush1.msra.mxu0 %v883
    %1014 = vmatprep.subr.mxu0 %v886
    %1015 = vmatpush1.msra.mxu0 %v885
    %1016 = vmatprep.subr.mxu0 %v888
    %1017 = vmatpush1.msra.mxu0 %v887
    %1018 = vmatprep.subr.mxu0 %v890
    %1019 = vmatpush1.msra.mxu0 %v889
    %1020 = vmatprep.subr.mxu0 0.0
    %1021 = vmatpush1.msra.mxu0 0.0
    %1022 = vmatprep.subr.mxu0 0.0
    %1023 = vmatpush1.msra.mxu0 0.0
    %1024 = vmatprep.subr.mxu0 0.0
    %1025 = vmatpush1.msra.mxu0 0.0
    %1026 = vmatprep.subr.mxu0 0.0
    %1027 = vmatpush1.msra.mxu0 0.0
    %1028 = vmatprep.subr.mxu0 0.0
    %1029 = vmatpush1.msra.mxu0 0.0
    %1030 = vmatprep.subr.mxu0 0.0
    %1031 = vmatpush1.msra.mxu0 0.0
    %1032 = vmatprep.subr.mxu0 0.0
    %1033 = vmatpush1.msra.mxu0 0.0
    %1034 = vmatprep.subr.mxu0 0.0
    %1035 = vmatpush1.msra.mxu0 0.0
    %1036 = vmatprep.subr.mxu0 0.0
    %1037 = vmatpush1.msra.mxu0 0.0
    %1038 = vmatprep.subr.mxu0 0.0
    %1039 = vmatpush1.msra.mxu0 0.0
    %1040 = vmatprep.subr.mxu0 0.0
    %1041 = vmatpush1.msra.mxu0 0.0
    %1042 = vmatprep.subr.mxu0 0.0
    %1043 = vmatpush1.msra.mxu0 0.0
    %1044 = vmatprep.subr.mxu0 0.0
    %1045 = vmatpush1.msra.mxu0 0.0
    %1046 = vmatprep.subr.mxu0 0.0
    %1047 = vmatpush1.msra.mxu0 0.0
    %1048 = vmatprep.subr.mxu0 0.0
    %1049 = vmatpush1.msra.mxu0 0.0
    %1050 = vmatprep.subr.mxu0 0.0
    %1051 = vmatpush1.msra.mxu0 0.0
    %1052 = vmatprep.subr.mxu0 0.0
    %1053 = vmatpush1.msra.mxu0 0.0
    %1054 = vmatprep.subr.mxu0 0.0
    %1055 = vmatpush1.msra.mxu0 0.0
    %1056 = vmatprep.subr.mxu0 0.0
    %1057 = vmatpush1.msra.mxu0 0.0
    %1058 = vmatprep.subr.mxu0 0.0
    %1059 = vmatpush1.msra.mxu0 0.0
    %1060 = vmatprep.subr.mxu0 0.0
    %1061 = vmatpush1.msra.mxu0 0.0
    %1062 = vmatprep.subr.mxu0 0.0
    %1063 = vmatpush1.msra.mxu0 0.0
    %1064 = vmatprep.subr.mxu0 0.0
    %1065 = vmatpush1.msra.mxu0 0.0
    %1066 = vmatprep.subr.mxu0 0.0
    %1067 = vmatpush1.msra.mxu0 0.0
    %1068 = vmatprep.mubr.f32.mxu0 0.0
    %1069 = vmatmul.mubr.f32.gmra.mrb[0].mxu0 %v1002
    %v1070 = vpop.f32.mrb[0].mxu0
    %v1071 = vadd.f32 0.0, %v1070
    %v1072 = vpop.f32.mrb[0].mxu0
    %v1073 = vadd.f32 0.0, %v1072
    %1074 = vdwg.mxu0
    %v1075 = vadd.f32 %v861, %v1071
    %v1076 = vadd.f32 %v862, %v1073
    %v1077 = vxor.u32 %v1075, 2147483648
    %v1078 = vxor.u32 %v1076, 2147483648
    %v1079 = vmul.f32 %v1077, 1.442695
    %v1080 = vpow.pop %v1079
    %v1081 = vmul.f32 %v1078, 1.442695
    %v1082 = vpow.pop %v1081
    %v1083 = vadd.f32 %v1080, 1.0
    %v1084 = vadd.f32 %v1082, 1.0
    %v1085 = vrcp.pop %v1083
    %v1086 = vmul.f32 1.0, %v1085
    %v1087 = vrcp.pop %v1084
    %v1088 = vmul.f32 1.0, %v1087
    %v1089 = vtanh.pop %v1076
    %v1090 = vmul.f32 %v1086, %v991
    %1092 = vrot.lane.b32.xlu0 %v1089, 64
    %v1093 = vpop.permute.xlu0 %1092
    %v1095 = vmul.f32 %v1086, %v1093
    %1097 = vrot.lane.b32.xlu0 %v1095, 64
    %v1098 = vpop.permute.xlu0 %1097
    %v1100 = vadd.f32 %v1090, %v1098
    %v1101 = vtanh.pop %v1100
    %1103 = vrot.lane.b32.xlu0 %v1101, 64
    %v1104 = vpop.permute.xlu0 %1103
    %v1106 = vmul.f32 %v1088, %v1104
    %1107 = vst.msk [vmem:[#allocation2 + $0x8] sm:$0xff] %vm104, %v1106
    %1108 = vst.msk [vmem:[#allocation2 + $0x30] sm:$0xff] %vm999, %v1106
    %v1110 = vsel %vm891, %v1106, 0
    %1112 = vmatprep.subr.mxu0 %v876
    %1113 = vmatpush1.msra.mxu0 %v875
    %1114 = vmatprep.subr.mxu0 %v878
    %1115 = vmatpush1.msra.mxu0 %v877
    %1116 = vmatprep.subr.mxu0 %v880
    %1117 = vmatpush1.msra.mxu0 %v879
    %1118 = vmatprep.subr.mxu0 %v882
    %1119 = vmatpush1.msra.mxu0 %v881
    %1120 = vmatprep.subr.mxu0 %v884
    %1121 = vmatpush1.msra.mxu0 %v883
    %1122 = vmatprep.subr.mxu0 %v886
    %1123 = vmatpush1.msra.mxu0 %v885
    %1124 = vmatprep.subr.mxu0 %v888
    %1125 = vmatpush1.msra.mxu0 %v887
    %1126 = vmatprep.subr.mxu0 %v890
    %1127 = vmatpush1.msra.mxu0 %v889
    %1128 = vmatprep.subr.mxu0 0.0
    %1129 = vmatpush1.msra.mxu0 0.0
    %1130 = vmatprep.subr.mxu0 0.0
    %1131 = vmatpush1.msra.mxu0 0.0
    %1132 = vmatprep.subr.mxu0 0.0
    %1133 = vmatpush1.msra.mxu0 0.0
    %1134 = vmatprep.subr.mxu0 0.0
    %1135 = vmatpush1.msra.mxu0 0.0
    %1136 = vmatprep.subr.mxu0 0.0
    %1137 = vmatpush1.msra.mxu0 0.0
    %1138 = vmatprep.subr.mxu0 0.0
    %1139 = vmatpush1.msra.mxu0 0.0
    %1140 = vmatprep.subr.mxu0 0.0
    %1141 = vmatpush1.msra.mxu0 0.0
    %1142 = vmatprep.subr.mxu0 0.0
    %1143 = vmatpush1.msra.mxu0 0.0
    %1144 = vmatprep.subr.mxu0 0.0
    %1145 = vmatpush1.msra.mxu0 0.0
    %1146 = vmatprep.subr.mxu0 0.0
    %1147 = vmatpush1.msra.mxu0 0.0
    %1148 = vmatprep.subr.mxu0 0.0
    %1149 = vmatpush1.msra.mxu0 0.0
    %1150 = vmatprep.subr.mxu0 0.0
    %1151 = vmatpush1.msra.mxu0 0.0
    %1152 = vmatprep.subr.mxu0 0.0
    %1153 = vmatpush1.msra.mxu0 0.0
    %1154 = vmatprep.subr.mxu0 0.0
    %1155 = vmatpush1.msra.mxu0 0.0
    %1156 = vmatprep.subr.mxu0 0.0
    %1157 = vmatpush1.msra.mxu0 0.0
    %1158 = vmatprep.subr.mxu0 0.0
    %1159 = vmatpush1.msra.mxu0 0.0
    %1160 = vmatprep.subr.mxu0 0.0
    %1161 = vmatpush1.msra.mxu0 0.0
    %1162 = vmatprep.subr.mxu0 0.0
    %1163 = vmatpush1.msra.mxu0 0.0
    %1164 = vmatprep.subr.mxu0 0.0
    %1165 = vmatpush1.msra.mxu0 0.0
    %1166 = vmatprep.subr.mxu0 0.0
    %1167 = vmatpush1.msra.mxu0 0.0
    %1168 = vmatprep.subr.mxu0 0.0
    %1169 = vmatpush1.msra.mxu0 0.0
    %1170 = vmatprep.subr.mxu0 0.0
    %1171 = vmatpush1.msra.mxu0 0.0
    %1172 = vmatprep.subr.mxu0 0.0
    %1173 = vmatpush1.msra.mxu0 0.0
    %1174 = vmatprep.subr.mxu0 0.0
    %1175 = vmatpush1.msra.mxu0 0.0
    %1176 = vmatprep.mubr.f32.mxu0 0.0
    %1177 = vmatmul.mubr.f32.gmra.mrb[0].mxu0 %v1110
    %v1178 = vpop.f32.mrb[0].mxu0
    %v1179 = vadd.f32 0.0, %v1178
    %v1180 = vpop.f32.mrb[0].mxu0
    %v1181 = vadd.f32 0.0, %v1180
    %1182 = vdwg.mxu0
    %v1183 = vadd.f32 %v863, %v1179
    %v1184 = vadd.f32 %v864, %v1181
    %v1185 = vxor.u32 %v1183, 2147483648
    %v1186 = vxor.u32 %v1184, 2147483648
    %v1187 = vmul.f32 %v1185, 1.442695
    %v1188 = vpow.pop %v1187
    %v1189 = vmul.f32 %v1186, 1.442695
    %v1190 = vpow.pop %v1189
    %v1191 = vadd.f32 %v1188, 1.0
    %v1192 = vadd.f32 %v1190, 1.0
    %v1193 = vrcp.pop %v1191
    %v1194 = vmul.f32 1.0, %v1193
    %v1195 = vrcp.pop %v1192
    %v1196 = vmul.f32 1.0, %v1195
    %v1197 = vtanh.pop %v1184
    %v1198 = vmul.f32 %v1194, %v1100
    %1200 = vrot.lane.b32.xlu0 %v1197, 64
    %v1201 = vpop.permute.xlu0 %1200
    %v1203 = vmul.f32 %v1194, %v1201
    %1205 = vrot.lane.b32.xlu0 %v1203, 64
    %v1206 = vpop.permute.xlu0 %1205
    %v1208 = vadd.f32 %v1198, %v1206
    %v1209 = vtanh.pop %v1208
    %1211 = vrot.lane.b32.xlu0 %v1209, 64
    %v1212 = vpop.permute.xlu0 %1211
    %v1214 = vmul.f32 %v1196, %v1212
    %1215 = vst.msk [vmem:[#allocation2 + $0x10] sm:$0xff] %vm104, %v1214
    %1216 = vst.msk [vmem:[#allocation2 + $0x28] sm:$0xff] %vm999, %v1214
    %v1218 = vsel %vm891, %v1214, 0
    %1220 = vmatprep.subr.mxu0 %v876
    %1221 = vmatpush1.msra.mxu0 %v875
    %1222 = vmatprep.subr.mxu0 %v878
    %1223 = vmatpush1.msra.mxu0 %v877
    %1224 = vmatprep.subr.mxu0 %v880
    %1225 = vmatpush1.msra.mxu0 %v879
    %1226 = vmatprep.subr.mxu0 %v882
    %1227 = vmatpush1.msra.mxu0 %v881
    %1228 = vmatprep.subr.mxu0 %v884
    %1229 = vmatpush1.msra.mxu0 %v883
    %1230 = vmatprep.subr.mxu0 %v886
    %1231 = vmatpush1.msra.mxu0 %v885
    %1232 = vmatprep.subr.mxu0 %v888
    %1233 = vmatpush1.msra.mxu0 %v887
    %1234 = vmatprep.subr.mxu0 %v890
    %1235 = vmatpush1.msra.mxu0 %v889
    %1236 = vmatprep.subr.mxu0 0.0
    %1237 = vmatpush1.msra.mxu0 0.0
    %1238 = vmatprep.subr.mxu0 0.0
    %1239 = vmatpush1.msra.mxu0 0.0
    %1240 = vmatprep.subr.mxu0 0.0
    %1241 = vmatpush1.msra.mxu0 0.0
    %1242 = vmatprep.subr.mxu0 0.0
    %1243 = vmatpush1.msra.mxu0 0.0
    %1244 = vmatprep.subr.mxu0 0.0
    %1245 = vmatpush1.msra.mxu0 0.0
    %1246 = vmatprep.subr.mxu0 0.0
    %1247 = vmatpush1.msra.mxu0 0.0
    %1248 = vmatprep.subr.mxu0 0.0
    %1249 = vmatpush1.msra.mxu0 0.0
    %1250 = vmatprep.subr.mxu0 0.0
    %1251 = vmatpush1.msra.mxu0 0.0
    %1252 = vmatprep.subr.mxu0 0.0
    %1253 = vmatpush1.msra.mxu0 0.0
    %1254 = vmatprep.subr.mxu0 0.0
    %1255 = vmatpush1.msra.mxu0 0.0
    %1256 = vmatprep.subr.mxu0 0.0
    %1257 = vmatpush1.msra.mxu0 0.0
    %1258 = vmatprep.subr.mxu0 0.0
    %1259 = vmatpush1.msra.mxu0 0.0
    %1260 = vmatprep.subr.mxu0 0.0
    %1261 = vmatpush1.msra.mxu0 0.0
    %1262 = vmatprep.subr.mxu0 0.0
    %1263 = vmatpush1.msra.mxu0 0.0
    %1264 = vmatprep.subr.mxu0 0.0
    %1265 = vmatpush1.msra.mxu0 0.0
    %1266 = vmatprep.subr.mxu0 0.0
    %1267 = vmatpush1.msra.mxu0 0.0
    %1268 = vmatprep.subr.mxu0 0.0
    %1269 = vmatpush1.msra.mxu0 0.0
    %1270 = vmatprep.subr.mxu0 0.0
    %1271 = vmatpush1.msra.mxu0 0.0
    %1272 = vmatprep.subr.mxu0 0.0
    %1273 = vmatpush1.msra.mxu0 0.0
    %1274 = vmatprep.subr.mxu0 0.0
    %1275 = vmatpush1.msra.mxu0 0.0
    %1276 = vmatprep.subr.mxu0 0.0
    %1277 = vmatpush1.msra.mxu0 0.0
    %1278 = vmatprep.subr.mxu0 0.0
    %1279 = vmatpush1.msra.mxu0 0.0
    %1280 = vmatprep.subr.mxu0 0.0
    %1281 = vmatpush1.msra.mxu0 0.0
    %1282 = vmatprep.subr.mxu0 0.0
    %1283 = vmatpush1.msra.mxu0 0.0
    %1284 = vmatprep.mubr.f32.mxu0 0.0
    %1285 = vmatmul.mubr.f32.gmra.mrb[0].mxu0 %v1218
    %v1286 = vpop.f32.mrb[0].mxu0
    %v1287 = vadd.f32 0.0, %v1286
    %v1288 = vpop.f32.mrb[0].mxu0
    %v1289 = vadd.f32 0.0, %v1288
    %1290 = vdwg.mxu0
    %v1291 = vadd.f32 %v865, %v1287
    %v1292 = vadd.f32 %v866, %v1289
    %v1293 = vxor.u32 %v1291, 2147483648
    %v1294 = vxor.u32 %v1292, 2147483648
    %v1295 = vmul.f32 %v1293, 1.442695
    %v1296 = vpow.pop %v1295
    %v1297 = vmul.f32 %v1294, 1.442695
    %v1298 = vpow.pop %v1297
    %v1299 = vadd.f32 %v1296, 1.0
    %v1300 = vadd.f32 %v1298, 1.0
    %v1301 = vrcp.pop %v1299
    %v1302 = vmul.f32 1.0, %v1301
    %v1303 = vrcp.pop %v1300
    %v1304 = vmul.f32 1.0, %v1303
    %v1305 = vtanh.pop %v1292
    %v1306 = vmul.f32 %v1302, %v1208
    %1308 = vrot.lane.b32.xlu0 %v1305, 64
    %v1309 = vpop.permute.xlu0 %1308
    %v1311 = vmul.f32 %v1302, %v1309
    %1313 = vrot.lane.b32.xlu0 %v1311, 64
    %v1314 = vpop.permute.xlu0 %1313
    %v1316 = vadd.f32 %v1306, %v1314
    %v1317 = vtanh.pop %v1316
    %1319 = vrot.lane.b32.xlu0 %v1317, 64
    %v1320 = vpop.permute.xlu0 %1319
    %v1322 = vmul.f32 %v1304, %v1320
    %1323 = vst.msk [vmem:[#allocation2 + $0x18] sm:$0xff] %vm104, %v1322
    %1324 = vst.msk [vmem:[#allocation2 + $0x20] sm:$0xff] %vm999, %v1322
    %v1326 = vsel %vm891, %v1322, 0
    %1328 = vmatprep.subr.mxu0 %v876
    %1329 = vmatpush1.msra.mxu0 %v875
    %1330 = vmatprep.subr.mxu0 %v878
    %1331 = vmatpush1.msra.mxu0 %v877
    %1332 = vmatprep.subr.mxu0 %v880
    %1333 = vmatpush1.msra.mxu0 %v879
    %1334 = vmatprep.subr.mxu0 %v882
    %1335 = vmatpush1.msra.mxu0 %v881
    %1336 = vmatprep.subr.mxu0 %v884
    %1337 = vmatpush1.msra.mxu0 %v883
    %1338 = vmatprep.subr.mxu0 %v886
    %1339 = vmatpush1.msra.mxu0 %v885
    %1340 = vmatprep.subr.mxu0 %v888
    %1341 = vmatpush1.msra.mxu0 %v887
    %1342 = vmatprep.subr.mxu0 %v890
    %1343 = vmatpush1.msra.mxu0 %v889
    %1344 = vmatprep.subr.mxu0 0.0
    %1345 = vmatpush1.msra.mxu0 0.0
    %1346 = vmatprep.subr.mxu0 0.0
    %1347 = vmatpush1.msra.mxu0 0.0
    %1348 = vmatprep.subr.mxu0 0.0
    %1349 = vmatpush1.msra.mxu0 0.0
    %1350 = vmatprep.subr.mxu0 0.0
    %1351 = vmatpush1.msra.mxu0 0.0
    %1352 = vmatprep.subr.mxu0 0.0
    %1353 = vmatpush1.msra.mxu0 0.0
    %1354 = vmatprep.subr.mxu0 0.0
    %1355 = vmatpush1.msra.mxu0 0.0
    %1356 = vmatprep.subr.mxu0 0.0
    %1357 = vmatpush1.msra.mxu0 0.0
    %1358 = vmatprep.subr.mxu0 0.0
    %1359 = vmatpush1.msra.mxu0 0.0
    %1360 = vmatprep.subr.mxu0 0.0
    %1361 = vmatpush1.msra.mxu0 0.0
    %1362 = vmatprep.subr.mxu0 0.0
    %1363 = vmatpush1.msra.mxu0 0.0
    %1364 = vmatprep.subr.mxu0 0.0
    %1365 = vmatpush1.msra.mxu0 0.0
    %1366 = vmatprep.subr.mxu0 0.0
    %1367 = vmatpush1.msra.mxu0 0.0
    %1368 = vmatprep.subr.mxu0 0.0
    %1369 = vmatpush1.msra.mxu0 0.0
    %1370 = vmatprep.subr.mxu0 0.0
    %1371 = vmatpush1.msra.mxu0 0.0
    %1372 = vmatprep.subr.mxu0 0.0
    %1373 = vmatpush1.msra.mxu0 0.0
    %1374 = vmatprep.subr.mxu0 0.0
    %1375 = vmatpush1.msra.mxu0 0.0
    %1376 = vmatprep.subr.mxu0 0.0
    %1377 = vmatpush1.msra.mxu0 0.0
    %1378 = vmatprep.subr.mxu0 0.0
    %1379 = vmatpush1.msra.mxu0 0.0
    %1380 = vmatprep.subr.mxu0 0.0
    %1381 = vmatpush1.msra.mxu0 0.0
    %1382 = vmatprep.subr.mxu0 0.0
    %1383 = vmatpush1.msra.mxu0 0.0
    %1384 = vmatprep.subr.mxu0 0.0
    %1385 = vmatpush1.msra.mxu0 0.0
    %1386 = vmatprep.subr.mxu0 0.0
    %1387 = vmatpush1.msra.mxu0 0.0
    %1388 = vmatprep.subr.mxu0 0.0
    %1389 = vmatpush1.msra.mxu0 0.0
    %1390 = vmatprep.subr.mxu0 0.0
    %1391 = vmatpush1.msra.mxu0 0.0
    %1392 = vmatprep.mubr.f32.mxu0 0.0
    %1393 = vmatmul.mubr.f32.gmra.mrb[0].mxu0 %v1326
    %v1394 = vpop.f32.mrb[0].mxu0
    %v1395 = vadd.f32 0.0, %v1394
    %v1396 = vpop.f32.mrb[0].mxu0
    %v1397 = vadd.f32 0.0, %v1396
    %1398 = vdwg.mxu0
    %v1399 = vadd.f32 %v867, %v1395
    %v1400 = vadd.f32 %v868, %v1397
    %v1401 = vxor.u32 %v1399, 2147483648
    %v1402 = vxor.u32 %v1400, 2147483648
    %v1403 = vmul.f32 %v1401, 1.442695
    %v1404 = vpow.pop %v1403
    %v1405 = vmul.f32 %v1402, 1.442695
    %v1406 = vpow.pop %v1405
    %v1407 = vadd.f32 %v1404, 1.0
    %v1408 = vadd.f32 %v1406, 1.0
    %v1409 = vrcp.pop %v1407
    %v1410 = vmul.f32 1.0, %v1409
    %v1411 = vrcp.pop %v1408
    %v1412 = vmul.f32 1.0, %v1411
    %v1413 = vtanh.pop %v1400
    %v1414 = vmul.f32 %v1410, %v1316
    %1416 = vrot.lane.b32.xlu0 %v1413, 64
    %v1417 = vpop.permute.xlu0 %1416
    %v1419 = vmul.f32 %v1410, %v1417
    %1421 = vrot.lane.b32.xlu0 %v1419, 64
    %v1422 = vpop.permute.xlu0 %1421
    %v1424 = vadd.f32 %v1414, %v1422
    %v1425 = vtanh.pop %v1424
    %1427 = vrot.lane.b32.xlu0 %v1425, 64
    %v1428 = vpop.permute.xlu0 %1427
    %v1430 = vmul.f32 %v1412, %v1428
    %1431 = vst.msk [vmem:[#allocation2 + $0x20] sm:$0xff] %vm104, %v1430
    %1432 = vst.msk [vmem:[#allocation2 + $0x18] sm:$0xff] %vm999, %v1430
    %v1434 = vsel %vm891, %v1430, 0
    %1436 = vmatprep.subr.mxu0 %v876
    %1437 = vmatpush1.msra.mxu0 %v875
    %1438 = vmatprep.subr.mxu0 %v878
    %1439 = vmatpush1.msra.mxu0 %v877
    %1440 = vmatprep.subr.mxu0 %v880
    %1441 = vmatpush1.msra.mxu0 %v879
    %1442 = vmatprep.subr.mxu0 %v882
    %1443 = vmatpush1.msra.mxu0 %v881
    %1444 = vmatprep.subr.mxu0 %v884
    %1445 = vmatpush1.msra.mxu0 %v883
    %1446 = vmatprep.subr.mxu0 %v886
    %1447 = vmatpush1.msra.mxu0 %v885
    %1448 = vmatprep.subr.mxu0 %v888
    %1449 = vmatpush1.msra.mxu0 %v887
    %1450 = vmatprep.subr.mxu0 %v890
    %1451 = vmatpush1.msra.mxu0 %v889
    %1452 = vmatprep.subr.mxu0 0.0
    %1453 = vmatpush1.msra.mxu0 0.0
    %1454 = vmatprep.subr.mxu0 0.0
    %1455 = vmatpush1.msra.mxu0 0.0
    %1456 = vmatprep.subr.mxu0 0.0
    %1457 = vmatpush1.msra.mxu0 0.0
    %1458 = vmatprep.subr.mxu0 0.0
    %1459 = vmatpush1.msra.mxu0 0.0
    %1460 = vmatprep.subr.mxu0 0.0
    %1461 = vmatpush1.msra.mxu0 0.0
    %1462 = vmatprep.subr.mxu0 0.0
    %1463 = vmatpush1.msra.mxu0 0.0
    %1464 = vmatprep.subr.mxu0 0.0
    %1465 = vmatpush1.msra.mxu0 0.0
    %1466 = vmatprep.subr.mxu0 0.0
    %1467 = vmatpush1.msra.mxu0 0.0
    %1468 = vmatprep.subr.mxu0 0.0
    %1469 = vmatpush1.msra.mxu0 0.0
    %1470 = vmatprep.subr.mxu0 0.0
    %1471 = vmatpush1.msra.mxu0 0.0
    %1472 = vmatprep.subr.mxu0 0.0
    %1473 = vmatpush1.msra.mxu0 0.0
    %1474 = vmatprep.subr.mxu0 0.0
    %1475 = vmatpush1.msra.mxu0 0.0
    %1476 = vmatprep.subr.mxu0 0.0
    %1477 = vmatpush1.msra.mxu0 0.0
    %1478 = vmatprep.subr.mxu0 0.0
    %1479 = vmatpush1.msra.mxu0 0.0
    %1480 = vmatprep.subr.mxu0 0.0
    %1481 = vmatpush1.msra.mxu0 0.0
    %1482 = vmatprep.subr.mxu0 0.0
    %1483 = vmatpush1.msra.mxu0 0.0
    %1484 = vmatprep.subr.mxu0 0.0
    %1485 = vmatpush1.msra.mxu0 0.0
    %1486 = vmatprep.subr.mxu0 0.0
    %1487 = vmatpush1.msra.mxu0 0.0
    %1488 = vmatprep.subr.mxu0 0.0
    %1489 = vmatpush1.msra.mxu0 0.0
    %1490 = vmatprep.subr.mxu0 0.0
    %1491 = vmatpush1.msra.mxu0 0.0
    %1492 = vmatprep.subr.mxu0 0.0
    %1493 = vmatpush1.msra.mxu0 0.0
    %1494 = vmatprep.subr.mxu0 0.0
    %1495 = vmatpush1.msra.mxu0 0.0
    %1496 = vmatprep.subr.mxu0 0.0
    %1497 = vmatpush1.msra.mxu0 0.0
    %1498 = vmatprep.subr.mxu0 0.0
    %1499 = vmatpush1.msra.mxu0 0.0
    %1500 = vmatprep.mubr.f32.mxu0 0.0
    %1501 = vmatmul.mubr.f32.gmra.mrb[0].mxu0 %v1434
    %v1502 = vpop.f32.mrb[0].mxu0
    %v1503 = vadd.f32 0.0, %v1502
    %v1504 = vpop.f32.mrb[0].mxu0
    %v1505 = vadd.f32 0.0, %v1504
    %1506 = vdwg.mxu0
    %v1507 = vadd.f32 %v869, %v1503
    %v1508 = vadd.f32 %v870, %v1505
    %v1509 = vxor.u32 %v1507, 2147483648
    %v1510 = vxor.u32 %v1508, 2147483648
    %v1511 = vmul.f32 %v1509, 1.442695
    %v1512 = vpow.pop %v1511
    %v1513 = vmul.f32 %v1510, 1.442695
    %v1514 = vpow.pop %v1513
    %v1515 = vadd.f32 %v1512, 1.0
    %v1516 = vadd.f32 %v1514, 1.0
    %v1517 = vrcp.pop %v1515
    %v1518 = vmul.f32 1.0, %v1517
    %v1519 = vrcp.pop %v1516
    %v1520 = vmul.f32 1.0, %v1519
    %v1521 = vtanh.pop %v1508
    %v1522 = vmul.f32 %v1518, %v1424
    %1524 = vrot.lane.b32.xlu0 %v1521, 64
    %v1525 = vpop.permute.xlu0 %1524
    %v1527 = vmul.f32 %v1518, %v1525
    %1529 = vrot.lane.b32.xlu0 %v1527, 64
    %v1530 = vpop.permute.xlu0 %1529
    %v1532 = vadd.f32 %v1522, %v1530
    %v1533 = vtanh.pop %v1532
    %1535 = vrot.lane.b32.xlu0 %v1533, 64
    %v1536 = vpop.permute.xlu0 %1535
    %v1538 = vmul.f32 %v1520, %v1536
    %1539 = vst.msk [vmem:[#allocation2 + $0x28] sm:$0xff] %vm104, %v1538
    %1540 = vst.msk [vmem:[#allocation2 + $0x10] sm:$0xff] %vm999, %v1538
    %v1542 = vsel %vm891, %v1538, 0
    %1544 = vmatprep.subr.mxu0 %v876
    %1545 = vmatpush1.msra.mxu0 %v875
    %1546 = vmatprep.subr.mxu0 %v878
    %1547 = vmatpush1.msra.mxu0 %v877
    %1548 = vmatprep.subr.mxu0 %v880
    %1549 = vmatpush1.msra.mxu0 %v879
    %1550 = vmatprep.subr.mxu0 %v882
    %1551 = vmatpush1.msra.mxu0 %v881
    %1552 = vmatprep.subr.mxu0 %v884
    %1553 = vmatpush1.msra.mxu0 %v883
    %1554 = vmatprep.subr.mxu0 %v886
    %1555 = vmatpush1.msra.mxu0 %v885
    %1556 = vmatprep.subr.mxu0 %v888
    %1557 = vmatpush1.msra.mxu0 %v887
    %1558 = vmatprep.subr.mxu0 %v890
    %1559 = vmatpush1.msra.mxu0 %v889
    %1560 = vmatprep.subr.mxu0 0.0
    %1561 = vmatpush1.msra.mxu0 0.0
    %1562 = vmatprep.subr.mxu0 0.0
    %1563 = vmatpush1.msra.mxu0 0.0
    %1564 = vmatprep.subr.mxu0 0.0
    %1565 = vmatpush1.msra.mxu0 0.0
    %1566 = vmatprep.subr.mxu0 0.0
    %1567 = vmatpush1.msra.mxu0 0.0
    %1568 = vmatprep.subr.mxu0 0.0
    %1569 = vmatpush1.msra.mxu0 0.0
    %1570 = vmatprep.subr.mxu0 0.0
    %1571 = vmatpush1.msra.mxu0 0.0
    %1572 = vmatprep.subr.mxu0 0.0
    %1573 = vmatpush1.msra.mxu0 0.0
    %1574 = vmatprep.subr.mxu0 0.0
    %1575 = vmatpush1.msra.mxu0 0.0
    %1576 = vmatprep.subr.mxu0 0.0
    %1577 = vmatpush1.msra.mxu0 0.0
    %1578 = vmatprep.subr.mxu0 0.0
    %1579 = vmatpush1.msra.mxu0 0.0
    %1580 = vmatprep.subr.mxu0 0.0
    %1581 = vmatpush1.msra.mxu0 0.0
    %1582 = vmatprep.subr.mxu0 0.0
    %1583 = vmatpush1.msra.mxu0 0.0
    %1584 = vmatprep.subr.mxu0 0.0
    %1585 = vmatpush1.msra.mxu0 0.0
    %1586 = vmatprep.subr.mxu0 0.0
    %1587 = vmatpush1.msra.mxu0 0.0
    %1588 = vmatprep.subr.mxu0 0.0
    %1589 = vmatpush1.msra.mxu0 0.0
    %1590 = vmatprep.subr.mxu0 0.0
    %1591 = vmatpush1.msra.mxu0 0.0
    %1592 = vmatprep.subr.mxu0 0.0
    %1593 = vmatpush1.msra.mxu0 0.0
    %1594 = vmatprep.subr.mxu0 0.0
    %1595 = vmatpush1.msra.mxu0 0.0
    %1596 = vmatprep.subr.mxu0 0.0
    %1597 = vmatpush1.msra.mxu0 0.0
    %1598 = vmatprep.subr.mxu0 0.0
    %1599 = vmatpush1.msra.mxu0 0.0
    %1600 = vmatprep.subr.mxu0 0.0
    %1601 = vmatpush1.msra.mxu0 0.0
    %1602 = vmatprep.subr.mxu0 0.0
    %1603 = vmatpush1.msra.mxu0 0.0
    %1604 = vmatprep.subr.mxu0 0.0
    %1605 = vmatpush1.msra.mxu0 0.0
    %1606 = vmatprep.subr.mxu0 0.0
    %1607 = vmatpush1.msra.mxu0 0.0
    %1608 = vmatprep.mubr.f32.mxu0 0.0
    %1609 = vmatmul.mubr.f32.gmra.mrb[0].mxu0 %v1542
    %v1610 = vpop.f32.mrb[0].mxu0
    %v1611 = vadd.f32 0.0, %v1610
    %v1612 = vpop.f32.mrb[0].mxu0
    %v1613 = vadd.f32 0.0, %v1612
    %1614 = vdwg.mxu0
    %v1615 = vadd.f32 %v871, %v1611
    %v1616 = vadd.f32 %v872, %v1613
    %v1617 = vxor.u32 %v1615, 2147483648
    %v1618 = vxor.u32 %v1616, 2147483648
    %v1619 = vmul.f32 %v1617, 1.442695
    %v1620 = vpow.pop %v1619
    %v1621 = vmul.f32 %v1618, 1.442695
    %v1622 = vpow.pop %v1621
    %v1623 = vadd.f32 %v1620, 1.0
    %v1624 = vadd.f32 %v1622, 1.0
    %v1625 = vrcp.pop %v1623
    %v1626 = vmul.f32 1.0, %v1625
    %v1627 = vrcp.pop %v1624
    %v1628 = vmul.f32 1.0, %v1627
    %v1629 = vtanh.pop %v1616
    %v1630 = vmul.f32 %v1626, %v1532
    %1632 = vrot.lane.b32.xlu0 %v1629, 64
    %v1633 = vpop.permute.xlu0 %1632
    %v1635 = vmul.f32 %v1626, %v1633
    %1637 = vrot.lane.b32.xlu0 %v1635, 64
    %v1638 = vpop.permute.xlu0 %1637
    %v1640 = vadd.f32 %v1630, %v1638
    %v1641 = vtanh.pop %v1640
    %1643 = vrot.lane.b32.xlu0 %v1641, 64
    %v1644 = vpop.permute.xlu0 %1643
    %v1646 = vmul.f32 %v1628, %v1644
    %1647 = vst.msk [vmem:[#allocation2 + $0x30] sm:$0xff] %vm104, %v1646
    %1648 = vst.msk [vmem:[#allocation2 + $0x8] sm:$0xff] %vm999, %v1646
    %v1650 = vsel %vm891, %v1646, 0
    %1652 = vmatprep.subr.mxu0 %v876
    %1653 = vmatpush1.msra.mxu0 %v875
    %1654 = vmatprep.subr.mxu0 %v878
    %1655 = vmatpush1.msra.mxu0 %v877
    %1656 = vmatprep.subr.mxu0 %v880
    %1657 = vmatpush1.msra.mxu0 %v879
    %1658 = vmatprep.subr.mxu0 %v882
    %1659 = vmatpush1.msra.mxu0 %v881
    %1660 = vmatprep.subr.mxu0 %v884
    %1661 = vmatpush1.msra.mxu0 %v883
    %1662 = vmatprep.subr.mxu0 %v886
    %1663 = vmatpush1.msra.mxu0 %v885
    %1664 = vmatprep.subr.mxu0 %v888
    %1665 = vmatpush1.msra.mxu0 %v887
    %1666 = vmatprep.subr.mxu0 %v890
    %1667 = vmatpush1.msra.mxu0 %v889
    %1668 = vmatprep.subr.mxu0 0.0
    %1669 = vmatpush1.msra.mxu0 0.0
    %1670 = vmatprep.subr.mxu0 0.0
    %1671 = vmatpush1.msra.mxu0 0.0
    %1672 = vmatprep.subr.mxu0 0.0
    %1673 = vmatpush1.msra.mxu0 0.0
    %1674 = vmatprep.subr.mxu0 0.0
    %1675 = vmatpush1.msra.mxu0 0.0
    %1676 = vmatprep.subr.mxu0 0.0
    %1677 = vmatpush1.msra.mxu0 0.0
    %1678 = vmatprep.subr.mxu0 0.0
    %1679 = vmatpush1.msra.mxu0 0.0
    %1680 = vmatprep.subr.mxu0 0.0
    %1681 = vmatpush1.msra.mxu0 0.0
    %1682 = vmatprep.subr.mxu0 0.0
    %1683 = vmatpush1.msra.mxu0 0.0
    %1684 = vmatprep.subr.mxu0 0.0
    %1685 = vmatpush1.msra.mxu0 0.0
    %1686 = vmatprep.subr.mxu0 0.0
    %1687 = vmatpush1.msra.mxu0 0.0
    %1688 = vmatprep.subr.mxu0 0.0
    %1689 = vmatpush1.msra.mxu0 0.0
    %1690 = vmatprep.subr.mxu0 0.0
    %1691 = vmatpush1.msra.mxu0 0.0
    %1692 = vmatprep.subr.mxu0 0.0
    %1693 = vmatpush1.msra.mxu0 0.0
    %1694 = vmatprep.subr.mxu0 0.0
    %1695 = vmatpush1.msra.mxu0 0.0
    %1696 = vmatprep.subr.mxu0 0.0
    %1697 = vmatpush1.msra.mxu0 0.0
    %1698 = vmatprep.subr.mxu0 0.0
    %1699 = vmatpush1.msra.mxu0 0.0
    %1700 = vmatprep.subr.mxu0 0.0
    %1701 = vmatpush1.msra.mxu0 0.0
    %1702 = vmatprep.subr.mxu0 0.0
    %1703 = vmatpush1.msra.mxu0 0.0
    %1704 = vmatprep.subr.mxu0 0.0
    %1705 = vmatpush1.msra.mxu0 0.0
    %1706 = vmatprep.subr.mxu0 0.0
    %1707 = vmatpush1.msra.mxu0 0.0
    %1708 = vmatprep.subr.mxu0 0.0
    %1709 = vmatpush1.msra.mxu0 0.0
    %1710 = vmatprep.subr.mxu0 0.0
    %1711 = vmatpush1.msra.mxu0 0.0
    %1712 = vmatprep.subr.mxu0 0.0
    %1713 = vmatpush1.msra.mxu0 0.0
    %1714 = vmatprep.subr.mxu0 0.0
    %1715 = vmatpush1.msra.mxu0 0.0
    %1716 = vmatprep.mubr.f32.mxu0 0.0
    %1717 = vmatmul.mubr.f32.gmra.mrb[0].mxu0 %v1650
    %v1718 = vpop.f32.mrb[0].mxu0
    %v1719 = vadd.f32 0.0, %v1718
    %v1720 = vpop.f32.mrb[0].mxu0
    %v1721 = vadd.f32 0.0, %v1720
    %1722 = vdwg.mxu0
    %v1723 = vadd.f32 %v873, %v1719
    %v1724 = vadd.f32 %v874, %v1721
    %v1725 = vxor.u32 %v1723, 2147483648
    %v1726 = vxor.u32 %v1724, 2147483648
    %v1727 = vmul.f32 %v1725, 1.442695
    %v1728 = vpow.pop %v1727
    %v1729 = vmul.f32 %v1726, 1.442695
    %v1730 = vpow.pop %v1729
    %v1731 = vadd.f32 %v1728, 1.0
    %v1732 = vadd.f32 %v1730, 1.0
    %v1733 = vrcp.pop %v1731
    %v1734 = vmul.f32 1.0, %v1733
    %v1735 = vrcp.pop %v1732
    %v1736 = vmul.f32 1.0, %v1735
    %v1737 = vtanh.pop %v1724
    %v1738 = vmul.f32 %v1734, %v1640
    %1740 = vrot.lane.b32.xlu0 %v1737, 64
    %v1741 = vpop.permute.xlu0 %1740
    %v1743 = vmul.f32 %v1734, %v1741
    %1745 = vrot.lane.b32.xlu0 %v1743, 64
    %v1746 = vpop.permute.xlu0 %1745
    %v1748 = vadd.f32 %v1738, %v1746
    %v1749 = vtanh.pop %v1748
    %1751 = vrot.lane.b32.xlu0 %v1749, 64
    %v1752 = vpop.permute.xlu0 %1751
    %v1754 = vmul.f32 %v1736, %v1752
    %1755 = vst.msk [vmem:[#allocation2 + $0x38] sm:$0xff] %vm104, %v1754
    %1756 = vst.msk [vmem:[#allocation2] sm:$0xff] %vm999, %v1754
    %v1757 = vld [vmem:[#allocation2] sm:$0xff]
    %v1758 = vld [vmem:[#allocation2 + $0x8] sm:$0xff]
    %v1759 = vld [vmem:[#allocation2 + $0x10] sm:$0xff]
    %v1760 = vld [vmem:[#allocation2 + $0x18] sm:$0xff]
    %v1761 = vld [vmem:[#allocation2 + $0x20] sm:$0xff]
    %v1762 = vld [vmem:[#allocation2 + $0x28] sm:$0xff]
    %v1763 = vld [vmem:[#allocation2 + $0x30] sm:$0xff]
    %v1764 = vld [vmem:[#allocation2 + $0x38] sm:$0xff]
    %v1765 = vld [vmem:[%s7] sm:$0xff]
    %v1766 = vld [vmem:[%s7 + $0x8] sm:$0xff]
    %v1767 = vld [vmem:[%s7 + $0x10] sm:$0xff]
    %v1768 = vld [vmem:[%s7 + $0x18] sm:$0xff]
    %v1769 = vld [vmem:[%s7 + $0x20] sm:$0xff]
    %v1770 = vld [vmem:[%s7 + $0x28] sm:$0xff]
    %v1771 = vld [vmem:[%s7 + $0x30] sm:$0xff]
    %v1772 = vld [vmem:[%s7 + $0x38] sm:$0xff]
    %v1773 = vld [vmem:[%s8] sm:$0x1]
    %v1775 = vlaneseq
    %v1776 = vshrl.u32 %v1775, 7
    %v1777 = vsub.s32 0, %v1776
    %v1778 = vrot.slane %v1773, %v1777
    %v1781 = vsel %vm891, %v1757, 0
    %v1784 = vsel %vm891, %v1758, 0
    %v1787 = vsel %vm891, %v1759, 0
    %v1790 = vsel %vm891, %v1760, 0
    %v1793 = vsel %vm891, %v1761, 0
    %v1796 = vsel %vm891, %v1762, 0
    %v1799 = vsel %vm891, %v1763, 0
    %v1802 = vsel %vm891, %v1764, 0
    %1804 = vmatprep.subr.mxu0 0.0
    %1805 = vmatpush1.msra.mxu0 %v1765
    %1806 = vmatprep.subr.mxu0 0.0
    %1807 = vmatpush1.msra.mxu0 %v1766
    %1808 = vmatprep.subr.mxu0 0.0
    %1809 = vmatpush1.msra.mxu0 %v1767
    %1810 = vmatprep.subr.mxu0 0.0
    %1811 = vmatpush1.msra.mxu0 %v1768
    %1812 = vmatprep.subr.mxu0 0.0
    %1813 = vmatpush1.msra.mxu0 %v1769
    %1814 = vmatprep.subr.mxu0 0.0
    %1815 = vmatpush1.msra.mxu0 %v1770
    %1816 = vmatprep.subr.mxu0 0.0
    %1817 = vmatpush1.msra.mxu0 %v1771
    %1818 = vmatprep.subr.mxu0 0.0
    %1819 = vmatpush1.msra.mxu0 %v1772
    %1820 = vmatprep.subr.mxu0 0.0
    %1821 = vmatpush1.msra.mxu0 0.0
    %1822 = vmatprep.subr.mxu0 0.0
    %1823 = vmatpush1.msra.mxu0 0.0
    %1824 = vmatprep.subr.mxu0 0.0
    %1825 = vmatpush1.msra.mxu0 0.0
    %1826 = vmatprep.subr.mxu0 0.0
    %1827 = vmatpush1.msra.mxu0 0.0
    %1828 = vmatprep.subr.mxu0 0.0
    %1829 = vmatpush1.msra.mxu0 0.0
    %1830 = vmatprep.subr.mxu0 0.0
    %1831 = vmatpush1.msra.mxu0 0.0
    %1832 = vmatprep.subr.mxu0 0.0
    %1833 = vmatpush1.msra.mxu0 0.0
    %1834 = vmatprep.subr.mxu0 0.0
    %1835 = vmatpush1.msra.mxu0 0.0
    %1836 = vmatprep.subr.mxu0 0.0
    %1837 = vmatpush1.msra.mxu0 0.0
    %1838 = vmatprep.subr.mxu0 0.0
    %1839 = vmatpush1.msra.mxu0 0.0
    %1840 = vmatprep.subr.mxu0 0.0
    %1841 = vmatpush1.msra.mxu0 0.0
    %1842 = vmatprep.subr.mxu0 0.0
    %1843 = vmatpush1.msra.mxu0 0.0
    %1844 = vmatprep.subr.mxu0 0.0
    %1845 = vmatpush1.msra.mxu0 0.0
    %1846 = vmatprep.subr.mxu0 0.0
    %1847 = vmatpush1.msra.mxu0 0.0
    %1848 = vmatprep.subr.mxu0 0.0
    %1849 = vmatpush1.msra.mxu0 0.0
    %1850 = vmatprep.subr.mxu0 0.0
    %1851 = vmatpush1.msra.mxu0 0.0
    %1852 = vmatprep.subr.mxu0 0.0
    %1853 = vmatpush1.msra.mxu0 0.0
    %1854 = vmatprep.subr.mxu0 0.0
    %1855 = vmatpush1.msra.mxu0 0.0
    %1856 = vmatprep.subr.mxu0 0.0
    %1857 = vmatpush1.msra.mxu0 0.0
    %1858 = vmatprep.subr.mxu0 0.0
    %1859 = vmatpush1.msra.mxu0 0.0
    %1860 = vmatprep.subr.mxu0 0.0
    %1861 = vmatpush1.msra.mxu0 0.0
    %1862 = vmatprep.subr.mxu0 0.0
    %1863 = vmatpush1.msra.mxu0 0.0
    %1864 = vmatprep.subr.mxu0 0.0
    %1865 = vmatpush1.msra.mxu0 0.0
    %1866 = vmatprep.subr.mxu0 0.0
    %1867 = vmatpush1.msra.mxu0 0.0
    %1868 = vmatprep.mubr.f32.mxu0 0.0
    %1869 = vmatmul.mubr.f32.gmra.mrb[0].mxu0 %v1781
    %v1870 = vpop.f32.mrb[0].mxu0
    %v1871 = vadd.f32 %v1778, %v1870
    %v1872 = vpop.f32.mrb[0].mxu0
    %1873 = vmatprep.mubr.f32.mxu0 0.0
    %1874 = vmatmul.mubr.f32.gmra.mrb[0].mxu0 %v1784
    %v1875 = vpop.f32.mrb[0].mxu0
    %v1876 = vadd.f32 %v1778, %v1875
    %v1877 = vpop.f32.mrb[0].mxu0
    %1878 = vmatprep.mubr.f32.mxu0 0.0
    %1879 = vmatmul.mubr.f32.gmra.mrb[0].mxu0 %v1787
    %v1880 = vpop.f32.mrb[0].mxu0
    %v1881 = vadd.f32 %v1778, %v1880
    %v1882 = vpop.f32.mrb[0].mxu0
    %1883 = vmatprep.mubr.f32.mxu0 0.0
    %1884 = vmatmul.mubr.f32.gmra.mrb[0].mxu0 %v1790
    %v1885 = vpop.f32.mrb[0].mxu0
    %v1886 = vadd.f32 %v1778, %v1885
    %v1887 = vpop.f32.mrb[0].mxu0
    %1888 = vmatprep.mubr.f32.mxu0 0.0
    %1889 = vmatmul.mubr.f32.gmra.mrb[0].mxu0 %v1793
    %v1890 = vpop.f32.mrb[0].mxu0
    %v1891 = vadd.f32 %v1778, %v1890
    %v1892 = vpop.f32.mrb[0].mxu0
    %1893 = vmatprep.mubr.f32.mxu0 0.0
    %1894 = vmatmul.mubr.f32.gmra.mrb[0].mxu0 %v1796
    %v1895 = vpop.f32.mrb[0].mxu0
    %v1896 = vadd.f32 %v1778, %v1895
    %v1897 = vpop.f32.mrb[0].mxu0
    %1898 = vmatprep.mubr.f32.mxu0 0.0
    %1899 = vmatmul.mubr.f32.gmra.mrb[0].mxu0 %v1799
    %v1900 = vpop.f32.mrb[0].mxu0
    %v1901 = vadd.f32 %v1778, %v1900
    %v1902 = vpop.f32.mrb[0].mxu0
    %1903 = vmatprep.mubr.f32.mxu0 0.0
    %1904 = vmatmul.mubr.f32.gmra.mrb[0].mxu0 %v1802
    %v1905 = vpop.f32.mrb[0].mxu0
    %v1906 = vadd.f32 %v1778, %v1905
    %v1907 = vpop.f32.mrb[0].mxu0
    %1908 = vdwg.mxu0
    %v1909 = vtanh.pop %v1871
    %v1910 = vtanh.pop %v1876
    %v1911 = vtanh.pop %v1881
    %v1912 = vtanh.pop %v1886
    %v1913 = vtanh.pop %v1891
    %v1914 = vtanh.pop %v1896
    %v1915 = vtanh.pop %v1901
    %v1916 = vtanh.pop %v1906
    %v1917 = vld [vmem:[%s9] sm:$0x1]
    %v1919 = vlaneseq
    %v1920 = vshrl.u32 %v1919, 7
    %v1921 = vsub.s32 0, %v1920
    %v1922 = vrot.slane %v1917, %v1921
    %v1924 = vmul.f32 %v1909, %v1922
    %v1925 = vmul.f32 %v1910, %v1922
    %v1926 = vmul.f32 %v1911, %v1922
    %v1927 = vmul.f32 %v1912, %v1922
    %v1928 = vmul.f32 %v1913, %v1922
    %v1929 = vmul.f32 %v1914, %v1922
    %v1930 = vmul.f32 %v1915, %v1922
    %v1931 = vmul.f32 %v1916, %v1922
    %v1932 = vsel %vm891, %v1924, 0.0
    %1933 = vadd.xlane.f32.xlu0 %v1932
    %v1934 = vpop.xlane.xlu0 %1933
    %v1935 = vsel %vm891, %v1925, 0.0
    %1936 = vadd.xlane.f32.xlu0 %v1935
    %v1937 = vpop.xlane.xlu0 %1936
    %v1938 = vsel %vm891, %v1926, 0.0
    %1939 = vadd.xlane.f32.xlu0 %v1938
    %v1940 = vpop.xlane.xlu0 %1939
    %v1941 = vsel %vm891, %v1927, 0.0
    %1942 = vadd.xlane.f32.xlu0 %v1941
    %v1943 = vpop.xlane.xlu0 %1942
    %v1944 = vsel %vm891, %v1928, 0.0
    %1945 = vadd.xlane.f32.xlu0 %v1944
    %v1946 = vpop.xlane.xlu0 %1945
    %v1947 = vsel %vm891, %v1929, 0.0
    %1948 = vadd.xlane.f32.xlu0 %v1947
    %v1949 = vpop.xlane.xlu0 %1948
    %v1950 = vsel %vm891, %v1930, 0.0
    %1951 = vadd.xlane.f32.xlu0 %v1950
    %v1952 = vpop.xlane.xlu0 %1951
    %v1953 = vsel %vm891, %v1931, 0.0
    %1954 = vadd.xlane.f32.xlu0 %v1953
    %v1955 = vpop.xlane.xlu0 %1954
    %vm1956 = vcmask 7168
    %v1957 = vsel %vm1956, %v1934, %v1937
    %vm1958 = vcmask 15360
    %v1959 = vsel %vm1958, %v1957, %v1940
    %vm1960 = vcmask 23552
    %v1961 = vsel %vm1960, %v1959, %v1943
    %vm1962 = vcmask 31744
    %v1963 = vsel %vm1962, %v1961, %v1946
    %vm1964 = vcmask 39936
    %v1965 = vsel %vm1964, %v1963, %v1949
    %vm1966 = vcmask 48128
    %v1967 = vsel %vm1966, %v1965, %v1952
    %vm1968 = vcmask 56320
    %v1969 = vsel %vm1968, %v1967, %v1955
    %vm1970 = vcmask 64512
    %v1971 = vsel %vm1970, %v1969, -inf
    %1972 = vmax.xlane.f32.xlu0 %v1971
    %v1973 = vpop.xlane.xlu0 %1972
    %v1974 = vsub.f32 %v1969, %v1973
    %v1975 = vmul.f32 %v1974, 1.442695
    %v1976 = vpow.pop %v1975
    %v1977 = vsel %vm1970, %v1976, 0.0
    %1978 = vadd.xlane.f32.xlu0 %v1977
    %v1979 = vpop.xlane.xlu0 %1978
    %v1980 = vrcp.pop %v1979
    %v1981 = vmul.f32 %v1976, %v1980
    %1983 = vset.pattern.permute.xlu0 0
    %1984 = vperm.xlu0 %1983, %v1981
    %v1985 = vpop.permute.xlu0 %1984
    %v1987 = vmul.f32 %v1985, %v1757
    %v1988 = vadd.f32 %v1987, 0.0
    %1989 = vset.pattern.permute.xlu0 1
    %1990 = vperm.xlu0 %1989, %v1981
    %v1991 = vpop.permute.xlu0 %1990
    %v1993 = vmul.f32 %v1991, %v1758
    %v1994 = vadd.f32 %v1988, %v1993
    %1995 = vset.pattern.permute.xlu0 2
    %1996 = vperm.xlu0 %1995, %v1981
    %v1997 = vpop.permute.xlu0 %1996
    %v1999 = vmul.f32 %v1997, %v1759
    %v2000 = vadd.f32 %v1994, %v1999
    %2001 = vset.pattern.permute.xlu0 3
    %2002 = vperm.xlu0 %2001, %v1981
    %v2003 = vpop.permute.xlu0 %2002
    %v2005 = vmul.f32 %v2003, %v1760
    %v2006 = vadd.f32 %v2000, %v2005
    %2007 = vset.pattern.permute.xlu0 4
    %2008 = vperm.xlu0 %2007, %v1981
    %v2009 = vpop.permute.xlu0 %2008
    %v2011 = vmul.f32 %v2009, %v1761
    %v2012 = vadd.f32 %v2006, %v2011
    %2013 = vset.pattern.permute.xlu0 5
    %2014 = vperm.xlu0 %2013, %v1981
    %v2015 = vpop.permute.xlu0 %2014
    %v2017 = vmul.f32 %v2015, %v1762
    %v2018 = vadd.f32 %v2012, %v2017
    %2019 = vset.pattern.permute.xlu0 6
    %2020 = vperm.xlu0 %2019, %v1981
    %v2021 = vpop.permute.xlu0 %2020
    %v2023 = vmul.f32 %v2021, %v1763
    %v2024 = vadd.f32 %v2018, %v2023
    %2025 = vset.pattern.permute.xlu0 7
    %2026 = vperm.xlu0 %2025, %v1981
    %v2027 = vpop.permute.xlu0 %2026
    %v2029 = vmul.f32 %v2027, %v1764
    %v2030 = vadd.f32 %v2024, %v2029
    %2032 = vrot.lane.b32.xlu0 %v2030, 48
    %v2033 = vpop.permute.xlu0 %2032
    %vm2035 = vcmask 392192
    %v2036 = vsel %vm2035, %v636, %v2033
    %v2037 = vpack.c.bf16 %v2036, %v2036
    %v2038 = vld [vmem:[%s10] sm:$0xf]
    %v2039 = vld [vmem:[%s10 + $0x4] sm:$0xf]
    %v2040 = vld [vmem:[%s10 + $0x8] sm:$0xf]
    %v2041 = vld [vmem:[%s10 + $0xc] sm:$0xf]
    %v2042 = vld [vmem:[%s10 + $0x10] sm:$0xf]
    %v2043 = vld [vmem:[%s10 + $0x14] sm:$0xf]
    %v2044 = vld [vmem:[%s10 + $0x18] sm:$0xf]
    %v2045 = vld [vmem:[%s10 + $0x1c] sm:$0xf]
    %v2046 = vld [vmem:[%s10 + $0x20] sm:$0xf]
    %v2047 = vld [vmem:[%s10 + $0x24] sm:$0xf]
    %v2048 = vld [vmem:[%s10 + $0x28] sm:$0xf]
    %v2049 = vld [vmem:[%s10 + $0x2c] sm:$0xf]
    %v2050 = vld [vmem:[%s10 + $0x30] sm:$0xf]
    %v2051 = vld [vmem:[%s10 + $0x34] sm:$0xf]
    %v2052 = vld [vmem:[%s11] sm:$0x1]
    %v2054 = vlaneseq
    %v2055 = vshrl.u32 %v2054, 7
    %v2056 = vsub.s32 0, %v2055
    %v2057 = vrot.slane %v2052, %v2056
    %v2073 = vunpack.c.l.b16 %v2038
    %v2074 = vunpack.c.l.b16 %v2039
    %v2075 = vunpack.c.l.b16 %v2040
    %v2076 = vunpack.c.l.b16 %v2041
    %v2077 = vunpack.c.l.b16 %v2042
    %v2078 = vunpack.c.l.b16 %v2043
    %v2079 = vunpack.c.l.b16 %v2044
    %v2080 = vunpack.c.l.b16 %v2045
    %v2081 = vunpack.c.l.b16 %v2046
    %v2082 = vunpack.c.l.b16 %v2047
    %v2083 = vunpack.c.l.b16 %v2048
    %v2084 = vunpack.c.l.b16 %v2049
    %v2085 = vunpack.c.l.b16 %v2050
    %v2086 = vunpack.c.l.b16 %v2051
    %v2087 = vpack.c.b16 %v2074, %v2073
    %v2088 = vpack.c.b16 %v2076, %v2075
    %v2089 = vpack.c.b16 %v2078, %v2077
    %v2090 = vpack.c.b16 %v2080, %v2079
    %v2091 = vpack.c.b16 %v2082, %v2081
    %v2092 = vpack.c.b16 %v2084, %v2083
    %v2093 = vpack.c.b16 %v2086, %v2085
    %vm2101 = vcmask 916480
    %v2103 = vsel %vm2101, %v2037, 0
    %2105 = vmatprep.subr.bf16.mxu0 0
    %2106 = vmatpush1.bf16.msra.mxu0 %v2087
    %2107 = vmatprep.subr.bf16.mxu0 0
    %2108 = vmatpush1.bf16.msra.mxu0 %v2088
    %2109 = vmatprep.subr.bf16.mxu0 0
    %2110 = vmatpush1.bf16.msra.mxu0 %v2089
    %2111 = vmatprep.subr.bf16.mxu0 0
    %2112 = vmatpush1.bf16.msra.mxu0 %v2090
    %2113 = vmatprep.subr.bf16.mxu0 0
    %2114 = vmatpush1.bf16.msra.mxu0 %v2091
    %2115 = vmatprep.subr.bf16.mxu0 0
    %2116 = vmatpush1.bf16.msra.mxu0 %v2092
    %2117 = vmatprep.subr.bf16.mxu0 0
    %2118 = vmatpush1.bf16.msra.mxu0 %v2093
    %2119 = vmatprep.subr.bf16.mxu0 0
    %2120 = vmatpush1.bf16.msra.mxu0 0
    %2121 = vmatprep.subr.bf16.mxu0 0
    %2122 = vmatpush1.bf16.msra.mxu0 0
    %2123 = vmatprep.subr.bf16.mxu0 0
    %2124 = vmatpush1.bf16.msra.mxu0 0
    %2125 = vmatprep.subr.bf16.mxu0 0
    %2126 = vmatpush1.bf16.msra.mxu0 0
    %2127 = vmatprep.subr.bf16.mxu0 0
    %2128 = vmatpush1.bf16.msra.mxu0 0
    %2129 = vmatprep.subr.bf16.mxu0 0
    %2130 = vmatpush1.bf16.msra.mxu0 0
    %2131 = vmatprep.subr.bf16.mxu0 0
    %2132 = vmatpush1.bf16.msra.mxu0 0
    %2133 = vmatprep.subr.bf16.mxu0 0
    %2134 = vmatpush1.bf16.msra.mxu0 0
    %2135 = vmatprep.subr.bf16.mxu0 0
    %2136 = vmatpush1.bf16.msra.mxu0 0
    %2137 = vmatprep.mubr.bf16.mxu0 0
    %2138 = vmatmul.mubr.bf16.gmra.mrb[0].mxu0 %v2103
    %v2139 = vpop.f32.mrb[0].mxu0
    %v2140 = vadd.f32 %v2057, %v2139
    %v2141 = vpop.f32.mrb[0].mxu0
    %v2142 = vpop.f32.mrb[0].mxu0
    %v2143 = vpop.f32.mrb[0].mxu0
    %2144 = vdwg.mxu0
    %v2145 = vmax.f32 %v2140, 0.0
    %v2146 = vpack.c.bf16 %v2145, %v2145
    %v2147 = vld [vmem:[%s12] sm:$0xf]
    %v2148 = vld [vmem:[%s12 + $0x4] sm:$0xf]
    %v2149 = vld [vmem:[%s12 + $0x8] sm:$0xf]
    %v2150 = vld [vmem:[%s12 + $0xc] sm:$0xf]
    %v2151 = vld [vmem:[%s13] sm:$0x1]
    %v2153 = vlaneseq
    %v2154 = vshrl.u32 %v2153, 7
    %v2155 = vsub.s32 0, %v2154
    %v2156 = vrot.slane %v2151, %v2155
    %v2162 = vunpack.c.l.b16 %v2147
    %v2163 = vunpack.c.l.b16 %v2148
    %v2164 = vunpack.c.l.b16 %v2149
    %v2165 = vunpack.c.l.b16 %v2150
    %v2166 = vpack.c.b16 %v2163, %v2162
    %v2167 = vpack.c.b16 %v2165, %v2164
    %v2171 = vsel %vm104, %v2146, 0
    %2173 = vmatprep.subr.bf16.mxu0 0
    %2174 = vmatpush1.bf16.msra.mxu0 %v2166
    %2175 = vmatprep.subr.bf16.mxu0 0
    %2176 = vmatpush1.bf16.msra.mxu0 %v2167
    %2177 = vmatprep.subr.bf16.mxu0 0
    %2178 = vmatpush1.bf16.msra.mxu0 0
    %2179 = vmatprep.subr.bf16.mxu0 0
    %2180 = vmatpush1.bf16.msra.mxu0 0
    %2181 = vmatprep.subr.bf16.mxu0 0
    %2182 = vmatpush1.bf16.msra.mxu0 0
    %2183 = vmatprep.subr.bf16.mxu0 0
    %2184 = vmatpush1.bf16.msra.mxu0 0
    %2185 = vmatprep.subr.bf16.mxu0 0
    %2186 = vmatpush1.bf16.msra.mxu0 0
    %2187 = vmatprep.subr.bf16.mxu0 0
    %2188 = vmatpush1.bf16.msra.mxu0 0
    %2189 = vmatprep.subr.bf16.mxu0 0
    %2190 = vmatpush1.bf16.msra.mxu0 0
    %2191 = vmatprep.subr.bf16.mxu0 0
    %2192 = vmatpush1.bf16.msra.mxu0 0
    %2193 = vmatprep.subr.bf16.mxu0 0
    %2194 = vmatpush1.bf16.msra.mxu0 0
    %2195 = vmatprep.subr.bf16.mxu0 0
    %2196 = vmatpush1.bf16.msra.mxu0 0
    %2197 = vmatprep.subr.bf16.mxu0 0
    %2198 = vmatpush1.bf16.msra.mxu0 0
    %2199 = vmatprep.subr.bf16.mxu0 0
    %2200 = vmatpush1.bf16.msra.mxu0 0
    %2201 = vmatprep.subr.bf16.mxu0 0
    %2202 = vmatpush1.bf16.msra.mxu0 0
    %2203 = vmatprep.subr.bf16.mxu0 0
    %2204 = vmatpush1.bf16.msra.mxu0 0
    %2205 = vmatprep.mubr.bf16.mxu0 0
    %2206 = vmatmul.mubr.bf16.gmra.mrb[0].mxu0 %v2171
    %v2207 = vpop.f32.mrb[0].mxu0
    %v2208 = vadd.f32 %v2156, %v2207
    %v2209 = vpop.f32.mrb[0].mxu0
    %v2210 = vpop.f32.mrb[0].mxu0
    %v2211 = vpop.f32.mrb[0].mxu0
    %2212 = vdwg.mxu0
    %2213 = vrot.lane.b32.xlu0 %v1981, 2
    %v2214 = vpop.permute.xlu0 %2213
    %v2216 = vsel %vm1958, %v2208, %v2214
    %vm2217 = vcmask 80896
    %v2218 = vsel %vm2217, %v2216, 0.0
    %2219 = vst [vmem:[#allocation3] sm:$0xff] %v2218
    // Predicated region
    $region58: #{tpu_custom_call.1} parent=1 // pred_check
      _
    $region59: #{tpu_custom_call.1} parent=1 // pred_check_branch
      %2221 = sbr.rel (0) target = $region61
    $region60: #{tpu_custom_call.1} parent=1 // pred_region
      %s2223 = ssub.s32 128, 128
      %2224 = vsyncadd [#allocation4], %s2223
      %s2226 = sshll.u32 [#allocation3], 4
      %s2227 = int_to_ptr.vmem [resolvable:$true] %s2226
      %2229 = dma.vmem_to_hbm [thread:$0]  %s2227, 128, %s14, [#allocation4]
    $region61: #{tpu_custom_call.1} parent=1 // pred_fallthru
      _
    // Predicated region
    $region62: #{tpu_custom_call.1} parent=1 // pred_check
      _
    $region63: #{tpu_custom_call.1} parent=1 // pred_check_branch
      %2231 = sbr.rel (0) target = $region65
    $region64: #{tpu_custom_call.1} parent=1 // pred_region
      %2232 = dma.done [#allocation4], 128
    $region65: #{tpu_custom_call.1} parent=1 // pred_fallthru
      _
    %2233 = vsyncpa [#allocation4], 1

</llo_original>
